<compile_context>
chip_gen: v5e
topology: v5e:2x2
jax: 0.10.0
libtpu: 0.0.40
codegen_flags: <defaults>
</compile_context>

<pallas_src>
import functools

import jax
import jax.numpy as jnp
from jax.experimental import pallas as pl
from jax.experimental.pallas import tpu as pltpu


def _fused_embed_kernel(x_ref, w_ref, scale_ref, b_ref,
                        feat_ref, norm_ref, acc_ref, *, normalize_feature):
    """K-reduction step + fused epilogue.

    Grid: (k_splits,), "arbitrary" (reduction).  acc_ref is a resident (B, D)
    f32 accumulator.  Last step applies per-channel dequant scale, bias, L2
    norm and (optionally) normalization, writing feature + norm directly.
    """
    k = pl.program_id(0)

    @pl.when(k == 0)
    def _():
        acc_ref[...] = jnp.zeros_like(acc_ref)

    # x arrives f32 (cast fused here); int8 weights upcast to bf16 in VMEM.
    # |w_int8| <= 127 so the int8 -> bf16 cast is exact.
    x_bf = x_ref[...].astype(jnp.bfloat16)
    w_bf = w_ref[...].astype(jnp.bfloat16)
    acc_ref[...] += jnp.dot(x_bf, w_bf, preferred_element_type=jnp.float32)

    @pl.when(k == pl.num_programs(0) - 1)
    def _():
        z = acc_ref[...] * scale_ref[...] + b_ref[...]        # dequant + bias
        nrm = jnp.sqrt(jnp.sum(z * z, axis=-1, keepdims=True))
        norm_ref[...] = nrm
        if normalize_feature:
            # feature = z / ||z||; eps guard (not in the PyTorch code) only
            # matters for an all-zero input row -- keeps it finite.
            feat_ref[...] = z / jnp.maximum(nrm, 1e-12)
        else:
            # feature * norm == z (backbone returns unit feature times norm)
            feat_ref[...] = z


def prepare_weights(w, num_channels):
    """One-time weight prep (constant-folded offline in deployment).

    * Folds the swap_channel flip (torch.flip(x, dims=[1])) into a row
      permutation of W, so the hot path never reverses x.
    * Symmetric per-output-channel int8 quantization: halves the HBM bytes
      streamed per call vs. bf16 (the kernel's only real cost).

    Returns (w_int8 [K, D], scale_f32 [1, D]).
    """
    K, D = w.shape
    hw = K // num_channels
    w_perm = jnp.asarray(w, jnp.float32).reshape(num_channels, hw, D)[::-1]
    w_perm = w_perm.reshape(K, D)
    scale = jnp.maximum(jnp.max(jnp.abs(w_perm), axis=0, keepdims=True) / 127.0,
                        1e-12)                                   # (1, D)
    w_q = jnp.clip(jnp.round(w_perm / scale), -127.0, 127.0).astype(jnp.int8)
    return w_q, scale.astype(jnp.float32)


@functools.partial(jax.jit, static_argnames=("normalize_feature", "k_splits"))
def recognition_forward(x_nchw, w_q, w_scale, b, *, normalize_feature=True,
                        k_splits=6):
    """Pallas implementation of RecognitionModel.forward (return_spatial=False).

    x_nchw:  [B, C, H, W] float32, already at the model's input size (112).
    w_q:     [C*H*W, D]   int8, from prepare_weights (flip folded in).
    w_scale: [1, D]       float32 per-output-channel dequant scale.
    b:       [D]          float32 bias.
    """
    B, C, H, W = x_nchw.shape
    K = C * H * W
    Kw, D = w_q.shape
    assert Kw == K, "weight rows must match C*H*W"
    if K % k_splits != 0 or (K // k_splits) % 128 != 0:
        raise ValueError(
            f"k_splits={k_splits} must divide K={K} with a lane-aligned chunk "
            f"(K//k_splits % 128 == 0); for 112x112x3 pick a divisor of 294 "
            f"(e.g. 2, 3, 6, 7, 14).")
    kh = K // k_splits

    # Channel flip is baked into w_q's row order -> plain (no-copy) flatten.
    x_flat = x_nchw.reshape(B, K)
    scale2d = w_scale.reshape(1, D).astype(jnp.float32)
    bias2d = b.reshape(1, D).astype(jnp.float32)

    kernel = functools.partial(_fused_embed_kernel,
                               normalize_feature=normalize_feature)

    feature, nrm = pl.pallas_call(
        kernel,
        out_shape=(jax.ShapeDtypeStruct((B, D), jnp.float32),
                   jax.ShapeDtypeStruct((B, 1), jnp.float32)),
        grid=(k_splits,),
        in_specs=[
            pl.BlockSpec((B, kh), lambda k: (0, k)),    # x K-slice (f32)
            pl.BlockSpec((kh, D), lambda k: (k, 0)),    # W K-slice (int8 stream)
            pl.BlockSpec((1, D), lambda k: (0, 0)),     # dequant scale
            pl.BlockSpec((1, D), lambda k: (0, 0)),     # bias
        ],
        out_specs=(pl.BlockSpec((B, D), lambda k: (0, 0)),   # feature (resident)
                   pl.BlockSpec((B, 1), lambda k: (0, 0))),  # norm
        scratch_shapes=[pltpu.VMEM((B, D), jnp.float32)],    # f32 accumulator
        compiler_params=pltpu.CompilerParams(
            dimension_semantics=("arbitrary",),               # K reduction
        ),
    )(x_flat, w_q, scale2d, bias2d)
    return feature, nrm


def reference_forward_f32(x_nchw, w, b, *, normalize_feature=True):
    """Pure-JAX f32 reference matching the PyTorch semantics."""
    B = x_nchw.shape[0]
    xf = x_nchw[:, ::-1, :, :].reshape(B, -1)
    z = jnp.dot(xf, w, preferred_element_type=jnp.float32) + b
    nrm = jnp.sqrt(jnp.sum(z * z, axis=-1, keepdims=True))
    feat = z / jnp.maximum(nrm, 1e-12) if normalize_feature else z
    return feat, nrm


def reference_forward_quant(x_nchw, w_q, w_scale, b, *, normalize_feature=True):
    """Pure-JAX reference using the exact kernel arithmetic (fake-quant)."""
    B = x_nchw.shape[0]
    xf = x_nchw.reshape(B, -1).astype(jnp.bfloat16)          # flip is in w_q
    z = jnp.dot(xf, w_q.astype(jnp.bfloat16),
                preferred_element_type=jnp.float32) * w_scale + b
    nrm = jnp.sqrt(jnp.sum(z * z, axis=-1, keepdims=True))
    feat = z / jnp.maximum(nrm, 1e-12) if normalize_feature else z
    return feat, nrm


if __name__ == "__main__":
    # Shapes consistent with the module: batch=2, channels=3, spatial=112
    # (== self.size, so the resize branch is skipped as in the PyTorch code).
    # Embedding dim D=128.
    B, C, H, W = 2, 3, 112, 112
    D = 128
    K = C * H * W  # 37632 = 294 * 128

    key = jax.random.PRNGKey(0)
    kx, kw, kb = jax.random.split(key, 3)
    x = jax.random.normal(kx, (B, C, H, W), dtype=jnp.float32)
    w = jax.random.normal(kw, (K, D), dtype=jnp.float32) * 0.02
    bias = jax.random.normal(kb, (D,), dtype=jnp.float32) * 0.01

    # One-time: fold channel flip into W rows + per-channel int8 quantization.
    w_q, w_scale = prepare_weights(w, C)

    feature, norm = recognition_forward(x, w_q, w_scale, bias,
                                        normalize_feature=True, k_splits=6)
    feature = jax.block_until_ready(feature)
    norm = jax.block_until_ready(norm)
    assert feature.shape == (B, D) and norm.shape == (B, 1)

    # Tight check: against a reference using the exact same quantized math.
    rf_q, rn_q = reference_forward_quant(x, w_q, w_scale, bias,
                                         normalize_feature=True)
    assert jnp.allclose(feature, rf_q, atol=5e-3, rtol=5e-3)
    assert jnp.allclose(norm, rn_q, atol=5e-2, rtol=5e-3)

    # Semantic check vs. the full-f32 model: cosine similarity + norm error
    # (per review: recognition acceptance should be similarity-based, not
    # raw allclose against f32).
    rf_32, rn_32 = reference_forward_f32(x, w, bias, normalize_feature=True)
    cos = jnp.sum(feature * rf_32, axis=-1)          # both unit-normalized
    assert bool(jnp.all(cos > 0.99)), f"cosine similarity too low: {cos}"
    norm_rel_err = jnp.max(jnp.abs(norm - rn_32) / rn_32)
    assert float(norm_rel_err) < 5e-2, f"norm rel err {norm_rel_err}"

    # normalize_feature=False path: feature == z (up to quantized arithmetic).
    fz, nz = recognition_forward(x, w_q, w_scale, bias,
                                 normalize_feature=False, k_splits=6)
    fz = jax.block_until_ready(fz)
    rz_q, _ = reference_forward_quant(x, w_q, w_scale, bias,
                                      normalize_feature=False)
    assert jnp.allclose(fz, rz_q, atol=2e-2, rtol=5e-3)

    print("KERNEL_OK")
</pallas_src>

<mosaic_0001>
module attributes {stable_mosaic.version = 11 : i64} {
  func.func @_fused_embed_kernel(%arg0: i32, %arg1: memref<2x6272xf32, #tpu.memory_space<vmem>>, %arg2: memref<6272x128xi8, #tpu.memory_space<vmem>>, %arg3: memref<1x128xf32, #tpu.memory_space<vmem>>, %arg4: memref<1x128xf32, #tpu.memory_space<vmem>>, %arg5: memref<2x128xf32, #tpu.memory_space<vmem>>, %arg6: memref<2x1xf32, #tpu.memory_space<vmem>>, %arg7: memref<2x128xf32, #tpu.memory_space<vmem>>) attributes {dimension_semantics = [#tpu.dimension_semantics<arbitrary>], iteration_bounds = array<i64: 6>, scalar_prefetch = 0 : i64, scratch_operands = 1 : i64, tpu.core_type = #tpu.core_type<tc>, window_params = [{transform_indices = @transform_0, window_bounds = array<i64: 2, 6272>}, {transform_indices = @transform_1, window_bounds = array<i64: 6272, 128>}, {pipeline_mode = #tpu.pipeline_mode<synchronous>, transform_indices = @transform_2, window_bounds = array<i64: 1, 128>}, {pipeline_mode = #tpu.pipeline_mode<synchronous>, transform_indices = @transform_3, window_bounds = array<i64: 1, 128>}, {pipeline_mode = #tpu.pipeline_mode<synchronous>, transform_indices = @transform_4, window_bounds = array<i64: 2, 128>}, {pipeline_mode = #tpu.pipeline_mode<synchronous>, transform_indices = @transform_5, window_bounds = array<i64: 2, 1>}]} {
    %c0_i32 = arith.constant 0 : i32
    %0 = arith.cmpi eq, %arg0, %c0_i32 : i32
    %1 = arith.extui %0 : i1 to i32
    %c0_i32_0 = arith.constant 0 : i32
    %2 = arith.cmpi ne, %1, %c0_i32_0 : i32
    scf.if %2 {
      %cst_9 = arith.constant 0.000000e+00 : f32
      %14 = vector.broadcast %cst_9 : f32 to vector<2x128xf32>
      %c0_10 = arith.constant 0 : index
      %c0_11 = arith.constant 0 : index
      %15 = vector.load %arg7[%c0_10, %c0_11] : memref<2x128xf32, #tpu.memory_space<vmem>>, vector<2x128xf32>
      tpu.vector_store %arg7[%c0_10, %c0_11], %14 {strides = array<i32>} : memref<2x128xf32, #tpu.memory_space<vmem>>, vector<2x128xf32>,
    } else {
    }
    %c0 = arith.constant 0 : index
    %c0_1 = arith.constant 0 : index
    %3 = vector.load %arg1[%c0, %c0_1] : memref<2x6272xf32, #tpu.memory_space<vmem>>, vector<2x6272xf32>
    %4 = arith.truncf %3 : vector<2x6272xf32> to vector<2x6272xbf16>
    %c0_2 = arith.constant 0 : index
    %c0_3 = arith.constant 0 : index
    %5 = vector.load %arg2[%c0_2, %c0_3] : memref<6272x128xi8, #tpu.memory_space<vmem>>, vector<6272x128xi8>
    %6 = arith.sitofp %5 : vector<6272x128xi8> to vector<6272x128xbf16>
    %c0_4 = arith.constant 0 : index
    %c0_5 = arith.constant 0 : index
    %7 = vector.load %arg7[%c0_4, %c0_5] : memref<2x128xf32, #tpu.memory_space<vmem>>, vector<2x128xf32>
    %cst = arith.constant dense<0.000000e+00> : vector<2x128xf32>
    %8 = tpu.matmul %4, %6, %cst {dimension_numbers = #tpu.dot_dimension_numbers<[1], [0], [0], [1], [0, 0, 1, 1], [], []>} : vector<2x6272xbf16>, vector<6272x128xbf16>, vector<2x128xf32> -> vector<2x128xf32>
    %9 = arith.addf %7, %8 : vector<2x128xf32>
    %c0_6 = arith.constant 0 : index
    %c0_7 = arith.constant 0 : index
    %10 = vector.load %arg7[%c0_6, %c0_7] : memref<2x128xf32, #tpu.memory_space<vmem>>, vector<2x128xf32>
    tpu.vector_store %arg7[%c0_6, %c0_7], %9 {strides = array<i32>} : memref<2x128xf32, #tpu.memory_space<vmem>>, vector<2x128xf32>,
    %c5_i32 = arith.constant 5 : i32
    %11 = arith.cmpi eq, %arg0, %c5_i32 : i32
    %12 = arith.extui %11 : i1 to i32
    %c0_i32_8 = arith.constant 0 : i32
    %13 = arith.cmpi ne, %12, %c0_i32_8 : i32
    scf.if %13 {
      %c0_9 = arith.constant 0 : index
      %c0_10 = arith.constant 0 : index
      %14 = vector.load %arg7[%c0_9, %c0_10] : memref<2x128xf32, #tpu.memory_space<vmem>>, vector<2x128xf32>
      %c0_11 = arith.constant 0 : index
      %c0_12 = arith.constant 0 : index
      %15 = vector.load %arg3[%c0_11, %c0_12] : memref<1x128xf32, #tpu.memory_space<vmem>>, vector<1x128xf32>
      %16 = vector.broadcast %15 : vector<1x128xf32> to vector<2x128xf32>
      %17 = arith.mulf %14, %16 : vector<2x128xf32>
      %c0_13 = arith.constant 0 : index
      %c0_14 = arith.constant 0 : index
      %18 = vector.load %arg4[%c0_13, %c0_14] : memref<1x128xf32, #tpu.memory_space<vmem>>, vector<1x128xf32>
      %19 = vector.broadcast %18 : vector<1x128xf32> to vector<2x128xf32>
      %20 = arith.addf %17, %19 : vector<2x128xf32>
      %21 = arith.mulf %20, %20 : vector<2x128xf32>
      %cst_15 = arith.constant dense<0.000000e+00> : vector<2xf32>
      %22 = vector.multi_reduction <add>, %21, %cst_15 [1] : vector<2x128xf32> to vector<2xf32>
      %23 = vector.shape_cast %22 : vector<2xf32> to vector<2x1xf32>
      %24 = math.sqrt %23 : vector<2x1xf32>
      %c0_16 = arith.constant 0 : index
      %c0_17 = arith.constant 0 : index
      %25 = vector.load %arg6[%c0_16, %c0_17] : memref<2x1xf32, #tpu.memory_space<vmem>>, vector<2x1xf32>
      tpu.vector_store %arg6[%c0_16, %c0_17], %24 {strides = array<i32>} : memref<2x1xf32, #tpu.memory_space<vmem>>, vector<2x1xf32>,
      %cst_18 = arith.constant 9.99999996E-13 : f32
      %26 = vector.broadcast %cst_18 : f32 to vector<2x1xf32>
      %27 = arith.maximumf %24, %26 : vector<2x1xf32>
      %28 = vector.broadcast %27 : vector<2x1xf32> to vector<2x128xf32>
      %29 = arith.divf %20, %28 : vector<2x128xf32>
      %c0_19 = arith.constant 0 : index
      %c0_20 = arith.constant 0 : index
      %30 = vector.load %arg5[%c0_19, %c0_20] : memref<2x128xf32, #tpu.memory_space<vmem>>, vector<2x128xf32>
      tpu.vector_store %arg5[%c0_19, %c0_20], %29 {strides = array<i32>} : memref<2x128xf32, #tpu.memory_space<vmem>>, vector<2x128xf32>,
    } else {
    }
    return
  }
  func.func @transform_0(%arg0: i32) -> (i32, i32) {
    %c0_i32 = arith.constant 0 : i32
    %c0_i32_0 = arith.constant 0 : i32
    return %c0_i32, %arg0 : i32, i32
  }
  func.func @transform_1(%arg0: i32) -> (i32, i32) {
    %c0_i32 = arith.constant 0 : i32
    %c0_i32_0 = arith.constant 0 : i32
    return %arg0, %c0_i32 : i32, i32
  }
  func.func @transform_2(%arg0: i32) -> (i32, i32) {
    %c0_i32 = arith.constant 0 : i32
    %c0_i32_0 = arith.constant 0 : i32
    %c0_i32_1 = arith.constant 0 : i32
    return %c0_i32, %c0_i32_0 : i32, i32
  }
  func.func @transform_3(%arg0: i32) -> (i32, i32) {
    %c0_i32 = arith.constant 0 : i32
    %c0_i32_0 = arith.constant 0 : i32
    %c0_i32_1 = arith.constant 0 : i32
    return %c0_i32, %c0_i32_0 : i32, i32
  }
  func.func @transform_4(%arg0: i32) -> (i32, i32) {
    %c0_i32 = arith.constant 0 : i32
    %c0_i32_0 = arith.constant 0 : i32
    %c0_i32_1 = arith.constant 0 : i32
    return %c0_i32, %c0_i32_0 : i32, i32
  }
  func.func @transform_5(%arg0: i32) -> (i32, i32) {
    %c0_i32 = arith.constant 0 : i32
    %c0_i32_0 = arith.constant 0 : i32
    %c0_i32_1 = arith.constant 0 : i32
    return %c0_i32, %c0_i32_0 : i32, i32
  }
}

</mosaic_0001>

<llo_original>
// kernel: recognition_forward.1
$region0: #{recognition_forward.1}
  #allocation0 [shape = 'u32[]', space=smem, size = 0x4, offset = 0x4, fixed_abs, tag = 'smem constant byte address 0x4 - core index']
  #allocation1 [shape = 'u32[72,128]{1,0:T(1,128)}', space=vmem, size = 0x9000, scoped, tag = 'internal scratch']
  #allocation2 [shape = 'f32[2,128]{1,0:T(2,128)}', space=vmem, size = 0x400, scoped, tag = 'scratch operand']
  %s0 = inlined_call_operand.vmem [shape: f32[2,37632], index: 0, kind: input, shape index: {}]
  %s1 = inlined_call_operand.hbm [shape: s8[37632,128], index: 1, kind: input, shape index: {}]
  %s2 = inlined_call_operand.hbm [shape: f32[1,128], index: 2, kind: input, shape index: {}]
  %s3 = inlined_call_operand.hbm [shape: f32[1,128], index: 3, kind: input, shape index: {}]
  %s4 = inlined_call_operand.hbm [shape: f32[2,128], index: 4, kind: output, shape index: {0}]
  %s5 = inlined_call_operand.vmem [shape: f32[2,1], index: 5, kind: output, shape index: {1}]
  %6 = xla_tuple %s4, %s5
  %s7 = sld [smem:[#allocation0]]
  $region77: #{recognition_forward.1} parent=0
    _
  %s9 = ssub.s32 1, %s7
  %s10 = scalar_select 0, %s9, %s7
  $region1: #{recognition_forward.1} parent=0
    #allocation3 [shape = 'u8[1605632]{0}', space=vmem, size = 0x188000, scoped, tag = 'input window, operand 1']
    #allocation4 [shape = 's32[2]{0}', space=sflag, size = 0x8, scoped, tag = 'scoped memory for recognition_forward.1']
    #allocation5 [shape = 's32[2]{0}', space=sflag, size = 0x8, scoped, tag = 'scoped memory for recognition_forward.1']
    #allocation6 [shape = 'u8[512]{0}', space=vmem, size = 0x400, scoped, tag = 'input window, operand 2, single buffered']
    #allocation7 [shape = 's32[1]{0}', space=sflag, size = 0x4, scoped, tag = 'scoped memory for recognition_forward.1']
    #allocation8 [shape = 'u8[512]{0}', space=vmem, size = 0x400, scoped, tag = 'input window, operand 3, single buffered']
    #allocation9 [shape = 'u8[1024]{0}', space=vmem, size = 0x400, scoped, tag = 'output window, operand 0, single buffered']
    %11 = vsyncpa [#allocation4], 0
    %s12 = scalar_lea.sflag [#allocation4], 1
    %13 = vsyncpa %s12, 0
    %14 = vsyncpa [#allocation7], 0
    %15 = vsyncpa [#allocation5], 0
    loop: start=0, step=1, limit=8
    $region2: #{recognition_forward.1} parent=1 // loop_pre_header
      _
    $region3: #{recognition_forward.1} parent=1 // loop_header
      %s17 = sphi 0, %s21
      %p18 = scmp.ge.s32.totalorder %s17, 8
      %s27 = sphi 0, %s29
      %s30 = sphi 0, %s27
      %s31 = sphi 0, %s30
      %s47 = sphi 0, %s31
      %s53 = sphi 0, %s55
      %s56 = sphi 0, %s53
      %s57 = sphi 0, %s56
      %s73 = sphi 0, %s57
      %s77 = sphi 0, %s77
      %s79 = sphi 0, %s77
      %s80 = sphi 0, %s79
      %s94 = sphi 0, %s80
      %s98 = sphi 0, %s98
      %s100 = sphi 0, %s98
      %s101 = sphi 0, %s100
      %s115 = sphi 0, %s101
      %s119 = sphi 0, %s119
      %s121 = sphi 0, %s119
      %s122 = sphi 0, %s121
      %s136 = sphi 0, %s122
      %s140 = sphi 0, %s140
      %s142 = sphi 0, %s140
      %s143 = sphi 0, %s142
      %s157 = sphi 0, %s143
    $region4: #{recognition_forward.1} parent=1 // loop_header_branch
      %20 = sbr.rel (%p18) target = $region8
    $region5: #{recognition_forward.1} parent=1 // loop_body
      %s22 = ssub.s32 %s17, 1
      %s23 = ssub.s32 %s17, 2
      %s24 = sadd.s32 %s17, 1
      %s25 = ssub.s32 %s17, %s24
      %p26 = scmp.eq.s32.totalorder %s25, 0
      %s28 = sadd.s32 %s27, 1
      %s29 = scalar_select %p26, %s27, %s28
      %p32 = pneg %p26
      %p33 = scmp.eq.s32.totalorder %s17, 5
      %p34 = por %p32, %p33
      %p35 = scmp.ne.s32.totalorder %s27, %s30
      %p36 = scmp.eq.s32.totalorder %s17, 0
      %p37 = por %p35, %p36
      %p38 = scmp.ne.s32.totalorder %s27, %s30
      %p39 = scmp.eq.s32.totalorder %s22, 5
      %p40 = por %p38, %p39
      %p41 = scmp.ne.s32.totalorder %s30, %s31
      %p42 = scmp.eq.s32.totalorder %s22, 0
      %p43 = por %p41, %p42
      %p44 = scmp.ne.s32.totalorder %s30, %s31
      %p45 = scmp.eq.s32.totalorder %s23, 5
      %p46 = por %p44, %p45
      %p48 = scmp.ne.s32.totalorder %s31, %s47
      %p49 = scmp.eq.s32.totalorder %s23, 0
      %p50 = por %p48, %p49
      %s51 = ssub.s32 %s17, %s24
      %p52 = scmp.eq.s32.totalorder %s51, 0
      %s54 = sadd.s32 %s53, 1
      %s55 = scalar_select %p52, %s53, %s54
      %p58 = pneg %p52
      %p59 = scmp.eq.s32.totalorder %s17, 5
      %p60 = por %p58, %p59
      %p61 = scmp.ne.s32.totalorder %s53, %s56
      %p62 = scmp.eq.s32.totalorder %s17, 0
      %p63 = por %p61, %p62
      %p64 = scmp.ne.s32.totalorder %s53, %s56
      %p65 = scmp.eq.s32.totalorder %s22, 5
      %p66 = por %p64, %p65
      %p67 = scmp.ne.s32.totalorder %s56, %s57
      %p68 = scmp.eq.s32.totalorder %s22, 0
      %p69 = por %p67, %p68
      %p70 = scmp.ne.s32.totalorder %s56, %s57
      %p71 = scmp.eq.s32.totalorder %s23, 5
      %p72 = por %p70, %p71
      %p74 = scmp.ne.s32.totalorder %s57, %s73
      %p75 = scmp.eq.s32.totalorder %s23, 0
      %p76 = por %p74, %p75
      %s78 = sadd.s32 %s77, 1
      %p81 = scmp.eq.s32.totalorder %s17, 5
      %p82 = scmp.ne.s32.totalorder %s77, %s79
      %p83 = scmp.eq.s32.totalorder %s17, 0
      %p84 = por %p82, %p83
      %p85 = scmp.ne.s32.totalorder %s77, %s79
      %p86 = scmp.eq.s32.totalorder %s22, 5
      %p87 = por %p85, %p86
      %p88 = scmp.ne.s32.totalorder %s79, %s80
      %p89 = scmp.eq.s32.totalorder %s22, 0
      %p90 = por %p88, %p89
      %p91 = scmp.ne.s32.totalorder %s79, %s80
      %p92 = scmp.eq.s32.totalorder %s23, 5
      %p93 = por %p91, %p92
      %p95 = scmp.ne.s32.totalorder %s80, %s94
      %p96 = scmp.eq.s32.totalorder %s23, 0
      %p97 = por %p95, %p96
      %s99 = sadd.s32 %s98, 1
      %p102 = scmp.eq.s32.totalorder %s17, 5
      %p103 = scmp.ne.s32.totalorder %s98, %s100
      %p104 = scmp.eq.s32.totalorder %s17, 0
      %p105 = por %p103, %p104
      %p106 = scmp.ne.s32.totalorder %s98, %s100
      %p107 = scmp.eq.s32.totalorder %s22, 5
      %p108 = por %p106, %p107
      %p109 = scmp.ne.s32.totalorder %s100, %s101
      %p110 = scmp.eq.s32.totalorder %s22, 0
      %p111 = por %p109, %p110
      %p112 = scmp.ne.s32.totalorder %s100, %s101
      %p113 = scmp.eq.s32.totalorder %s23, 5
      %p114 = por %p112, %p113
      %p116 = scmp.ne.s32.totalorder %s101, %s115
      %p117 = scmp.eq.s32.totalorder %s23, 0
      %p118 = por %p116, %p117
      %s120 = sadd.s32 %s119, 1
      %p123 = scmp.eq.s32.totalorder %s17, 5
      %p124 = scmp.ne.s32.totalorder %s119, %s121
      %p125 = scmp.eq.s32.totalorder %s17, 0
      %p126 = por %p124, %p125
      %p127 = scmp.ne.s32.totalorder %s119, %s121
      %p128 = scmp.eq.s32.totalorder %s22, 5
      %p129 = por %p127, %p128
      %p130 = scmp.ne.s32.totalorder %s121, %s122
      %p131 = scmp.eq.s32.totalorder %s22, 0
      %p132 = por %p130, %p131
      %p133 = scmp.ne.s32.totalorder %s121, %s122
      %p134 = scmp.eq.s32.totalorder %s23, 5
      %p135 = por %p133, %p134
      %p137 = scmp.ne.s32.totalorder %s122, %s136
      %p138 = scmp.eq.s32.totalorder %s23, 0
      %p139 = por %p137, %p138
      %s141 = sadd.s32 %s140, 1
      %p144 = scmp.eq.s32.totalorder %s17, 5
      %p145 = scmp.ne.s32.totalorder %s140, %s142
      %p146 = scmp.eq.s32.totalorder %s17, 0
      %p147 = por %p145, %p146
      %p148 = scmp.ne.s32.totalorder %s140, %s142
      %p149 = scmp.eq.s32.totalorder %s22, 5
      %p150 = por %p148, %p149
      %p151 = scmp.ne.s32.totalorder %s142, %s143
      %p152 = scmp.eq.s32.totalorder %s22, 0
      %p153 = por %p151, %p152
      %p154 = scmp.ne.s32.totalorder %s142, %s143
      %p155 = scmp.eq.s32.totalorder %s23, 5
      %p156 = por %p154, %p155
      %p158 = scmp.ne.s32.totalorder %s143, %s157
      %p159 = scmp.eq.s32.totalorder %s23, 0
      %p160 = por %p158, %p159
      %p161 = scmp.le.s32.totalorder 1, %s17
      %p162 = scmp.lt.s32.totalorder %s17, 7
      %p163 = pnand %p161, %p162
      %p164 = pneg %p163
      // Predicated region
      $region9: #{recognition_forward.1} parent=5 // pred_check
        _
      $region10: #{recognition_forward.1} parent=5 // pred_check_branch
        %166 = sbr.rel (%p163) target = $region12
      $region11: #{recognition_forward.1} parent=5 // pred_region
        %s167 = ssub.s32 %s17, 1
        // Predicated region
        $region13: #{recognition_forward.1} parent=11 // pred_check
          %p168 = pneg %p90
        $region14: #{recognition_forward.1} parent=11 // pred_check_branch
          %170 = sbr.rel (%p168) target = $region16
        $region15: #{recognition_forward.1} parent=11 // pred_region
          %172 = vsyncadd [#allocation7], 0
          %s174 = sshll.u32 %s2, 4
          %s175 = int_to_ptr.hbm [resolvable:$true] %s174
          %s176 = sshll.u32 [#allocation6], 4
          %s177 = int_to_ptr.vmem [resolvable:$true] %s176
          %179 = dma.hbm_to_vmem [thread:$0]  %s175, 16, %s177, [#allocation7]
        $region16: #{recognition_forward.1} parent=11 // pred_fallthru
          _
        // Predicated region
        $region17: #{recognition_forward.1} parent=11 // pred_check
          %p180 = pneg %p111
        $region18: #{recognition_forward.1} parent=11 // pred_check_branch
          %182 = sbr.rel (%p180) target = $region20
        $region19: #{recognition_forward.1} parent=11 // pred_region
          %184 = vsyncadd [#allocation7], 0
          %s186 = sshll.u32 %s3, 4
          %s187 = int_to_ptr.hbm [resolvable:$true] %s186
          %s188 = sshll.u32 [#allocation8], 4
          %s189 = int_to_ptr.vmem [resolvable:$true] %s188
          %191 = dma.hbm_to_vmem [thread:$0]  %s187, 16, %s189, [#allocation7]
        $region20: #{recognition_forward.1} parent=11 // pred_fallthru
          _
      $region12: #{recognition_forward.1} parent=5 // pred_fallthru
        _
      %p192 = scmp.lt.s32.totalorder %s17, 6
      // Predicated region
      $region21: #{recognition_forward.1} parent=5 // pred_check
        %p193 = pneg %p192
      $region22: #{recognition_forward.1} parent=5 // pred_check_branch
        %195 = sbr.rel (%p193) target = $region24
      $region23: #{recognition_forward.1} parent=5 // pred_region
        // Predicated region
        $region25: #{recognition_forward.1} parent=23 // pred_check
          %p196 = pneg %p37
        $region26: #{recognition_forward.1} parent=23 // pred_check_branch
          %198 = sbr.rel (%p196) target = $region28
        $region27: #{recognition_forward.1} parent=23 // pred_region
          %s199 = smul.u32 49, %s17
          %p200 = scmp.lt.s32.totalorder %s199, 293
          %s201 = scalar_select %p200, %s199, 293
          %s202 = smul.addr %s201, 2
          %s203 = scalar_lea.vmem %s0, %s202
          %s204 = smul.u32 49, %s17
        $region28: #{recognition_forward.1} parent=23 // pred_fallthru
          _
        // Predicated region
        $region29: #{recognition_forward.1} parent=23 // pred_check
          %p205 = pneg %p63
        $region30: #{recognition_forward.1} parent=23 // pred_check_branch
          %207 = sbr.rel (%p205) target = $region32
        $region31: #{recognition_forward.1} parent=23 // pred_region
          %s208 = sand.u32 %s53, 1
          %s209 = scalar_lea.sflag [#allocation4], %s208
          %s210 = sand.u32 %s53, 1
          %s211 = smul.addr %s210, 1568
          %s212 = scalar_lea.vmem [#allocation3], %s211
          %s213 = smul.u32 196, %s17
          %215 = vsyncadd %s209, 0
          %s216 = smul.addr %s213, 8
          %s217 = scalar_lea.hbm %s1, %s216
          %s218 = sshll.u32 %s217, 4
          %s219 = int_to_ptr.hbm [resolvable:$true] %s218
          %s220 = sshll.u32 %s212, 4
          %s221 = int_to_ptr.vmem [resolvable:$true] %s220
          %226 = dma.hbm_to_vmem [thread:$0]  %s219, 25088, %s221, %s209, 128, 128, 8
        $region32: #{recognition_forward.1} parent=23 // pred_fallthru
          _
      $region24: #{recognition_forward.1} parent=5 // pred_fallthru
        _
      %p227 = scmp.le.s32.totalorder 1, %s17
      %p228 = scmp.lt.s32.totalorder %s17, 7
      %p229 = pnand %p227, %p228
      %p230 = pneg %p229
      // Predicated region
      $region33: #{recognition_forward.1} parent=5 // pred_check
        _
      $region34: #{recognition_forward.1} parent=5 // pred_check_branch
        %232 = sbr.rel (%p229) target = $region36
      $region35: #{recognition_forward.1} parent=5 // pred_region
        %s233 = ssub.s32 %s17, 1
        %s234 = sand.u32 %s56, 1
        %s235 = scalar_lea.sflag [#allocation4], %s234
        %s236 = sand.u32 %s56, 1
        %s237 = smul.addr %s236, 1568
        %s238 = scalar_lea.vmem [#allocation3], %s237
        // Predicated region
        $region37: #{recognition_forward.1} parent=35 // pred_check
          %p239 = pneg %p69
        $region38: #{recognition_forward.1} parent=35 // pred_check_branch
          %241 = sbr.rel (%p239) target = $region40
        $region39: #{recognition_forward.1} parent=35 // pred_region
          %243 = dma.done %s235, 25088
        $region40: #{recognition_forward.1} parent=35 // pred_fallthru
          _
        // Predicated region
        $region41: #{recognition_forward.1} parent=35 // pred_check
          %p244 = pneg %p90
        $region42: #{recognition_forward.1} parent=35 // pred_check_branch
          %246 = sbr.rel (%p244) target = $region44
        $region43: #{recognition_forward.1} parent=35 // pred_region
          %248 = dma.done [#allocation7], 16
        $region44: #{recognition_forward.1} parent=35 // pred_fallthru
          _
        // Predicated region
        $region45: #{recognition_forward.1} parent=35 // pred_check
          %p249 = pneg %p111
        $region46: #{recognition_forward.1} parent=35 // pred_check_branch
          %251 = sbr.rel (%p249) target = $region48
        $region47: #{recognition_forward.1} parent=35 // pred_region
          %253 = dma.done [#allocation7], 16
        $region48: #{recognition_forward.1} parent=35 // pred_fallthru
          _
        %s254 = smul.u32 49, %s22
        %p255 = scmp.lt.s32.totalorder %s254, 293
        %s256 = scalar_select %p255, %s254, 293
        %s257 = smul.addr %s256, 2
        %s258 = scalar_lea.vmem %s0, %s257
        %p259 = pneg %p43
        %p260 = pneg %p40
        %s261 = sand.u32 %s56, 1
        %s262 = scalar_lea.sflag [#allocation4], %s261
        %s263 = sand.u32 %s56, 1
        %s264 = smul.addr %s263, 1568
        %s265 = scalar_lea.vmem [#allocation3], %s264
        %p266 = pneg %p69
        %p267 = pneg %p66
        %p268 = pneg %p90
        %p269 = pneg %p87
        %p270 = pneg %p111
        %p271 = pneg %p108
        %p272 = pneg %p132
        %p273 = pneg %p129
        %p274 = pneg %p153
        %p275 = pneg %p150
        %s276 = smul.u32 49, %s22
        %p277 = scmp.lt.s32.totalorder %s276, 293
        %s278 = scalar_select %p277, %s276, 293
        %s279 = smul.addr %s278, 2
        %s280 = scalar_lea.vmem %s0, %s279
        %s281 = smul.u32 49, %s22
        %s282 = smul.u32 196, %s22
        %p283 = scmp.eq.s32.totalorder %s22, 0
        // Predicated region
        $region49: #{recognition_forward.1} parent=35 // pred_check
          %p284 = pneg %p283
        $region50: #{recognition_forward.1} parent=35 // pred_check_branch
          %286 = sbr.rel (%p284) target = $region52
        $region51: #{recognition_forward.1} parent=35 // pred_region
          %287 = vst [vmem:[#allocation2] sm:$0x3] 0.0
        $region52: #{recognition_forward.1} parent=35 // pred_fallthru
          _
        %v288 = vld [vmem:[%s280] sm:$0xff]
        %v289 = vld [vmem:[%s280 + $0x8] sm:$0xff]
        %v290 = vld [vmem:[%s280 + $0x10] sm:$0xff]
        %v291 = vld [vmem:[%s280 + $0x18] sm:$0xff]
        %v292 = vld [vmem:[%s280 + $0x20] sm:$0xff]
        %v293 = vld [vmem:[%s280 + $0x28] sm:$0xff]
        %v294 = vld [vmem:[%s280 + $0x30] sm:$0xff]
        %v295 = vld [vmem:[%s280 + $0x38] sm:$0xff]
        %v296 = vld [vmem:[%s280 + $0x40] sm:$0xff]
        %v297 = vld [vmem:[%s280 + $0x48] sm:$0xff]
        %v298 = vld [vmem:[%s280 + $0x50] sm:$0xff]
        %v299 = vld [vmem:[%s280 + $0x58] sm:$0xff]
        %v300 = vld [vmem:[%s280 + $0x60] sm:$0x3]
        %314 = vst [vmem:[#allocation1] ss:$4 sm:$0xff] %v288
        %s315 = scalar_lea.vmem [#allocation1], 32
        %316 = vst [vmem:[%s315] ss:$4 sm:$0xff] %v289
        %v317 = vld.sshfl [vmem:[#allocation1] sm:$0xff pattern:$0x73625140]
        %v318 = vld.sshfl [vmem:[#allocation1 + $0x8] sm:$0xff pattern:$0x73625140]
        %v319 = vld.sshfl [vmem:[#allocation1 + $0x10] sm:$0xff pattern:$0x73625140]
        %v320 = vld.sshfl [vmem:[#allocation1 + $0x18] sm:$0xff pattern:$0x73625140]
        %v321 = vld.sshfl [vmem:[#allocation1 + $0x20] sm:$0xff pattern:$0x73625140]
        %v322 = vld.sshfl [vmem:[#allocation1 + $0x28] sm:$0xff pattern:$0x73625140]
        %v323 = vld.sshfl [vmem:[#allocation1 + $0x30] sm:$0xff pattern:$0x73625140]
        %v324 = vld.sshfl [vmem:[#allocation1 + $0x38] sm:$0xff pattern:$0x73625140]
        %325 = vst [vmem:[#allocation1] ss:$4 sm:$0xff] %v290
        %326 = vst [vmem:[%s315] ss:$4 sm:$0xff] %v291
        %v327 = vld.sshfl [vmem:[#allocation1] sm:$0xff pattern:$0x73625140]
        %v328 = vld.sshfl [vmem:[#allocation1 + $0x8] sm:$0xff pattern:$0x73625140]
        %v329 = vld.sshfl [vmem:[#allocation1 + $0x10] sm:$0xff pattern:$0x73625140]
        %v330 = vld.sshfl [vmem:[#allocation1 + $0x18] sm:$0xff pattern:$0x73625140]
        %v331 = vld.sshfl [vmem:[#allocation1 + $0x20] sm:$0xff pattern:$0x73625140]
        %v332 = vld.sshfl [vmem:[#allocation1 + $0x28] sm:$0xff pattern:$0x73625140]
        %v333 = vld.sshfl [vmem:[#allocation1 + $0x30] sm:$0xff pattern:$0x73625140]
        %v334 = vld.sshfl [vmem:[#allocation1 + $0x38] sm:$0xff pattern:$0x73625140]
        %335 = vst [vmem:[#allocation1] ss:$4 sm:$0xff] %v292
        %336 = vst [vmem:[%s315] ss:$4 sm:$0xff] %v293
        %v337 = vld.sshfl [vmem:[#allocation1] sm:$0xff pattern:$0x73625140]
        %v338 = vld.sshfl [vmem:[#allocation1 + $0x8] sm:$0xff pattern:$0x73625140]
        %v339 = vld.sshfl [vmem:[#allocation1 + $0x10] sm:$0xff pattern:$0x73625140]
        %v340 = vld.sshfl [vmem:[#allocation1 + $0x18] sm:$0xff pattern:$0x73625140]
        %v341 = vld.sshfl [vmem:[#allocation1 + $0x20] sm:$0xff pattern:$0x73625140]
        %v342 = vld.sshfl [vmem:[#allocation1 + $0x28] sm:$0xff pattern:$0x73625140]
        %v343 = vld.sshfl [vmem:[#allocation1 + $0x30] sm:$0xff pattern:$0x73625140]
        %v344 = vld.sshfl [vmem:[#allocation1 + $0x38] sm:$0xff pattern:$0x73625140]
        %345 = vst [vmem:[#allocation1] ss:$4 sm:$0xff] %v294
        %346 = vst [vmem:[%s315] ss:$4 sm:$0xff] %v295
        %v347 = vld.sshfl [vmem:[#allocation1] sm:$0xff pattern:$0x73625140]
        %v348 = vld.sshfl [vmem:[#allocation1 + $0x8] sm:$0xff pattern:$0x73625140]
        %v349 = vld.sshfl [vmem:[#allocation1 + $0x10] sm:$0xff pattern:$0x73625140]
        %v350 = vld.sshfl [vmem:[#allocation1 + $0x18] sm:$0xff pattern:$0x73625140]
        %v351 = vld.sshfl [vmem:[#allocation1 + $0x20] sm:$0xff pattern:$0x73625140]
        %v352 = vld.sshfl [vmem:[#allocation1 + $0x28] sm:$0xff pattern:$0x73625140]
        %v353 = vld.sshfl [vmem:[#allocation1 + $0x30] sm:$0xff pattern:$0x73625140]
        %v354 = vld.sshfl [vmem:[#allocation1 + $0x38] sm:$0xff pattern:$0x73625140]
        %355 = vst [vmem:[#allocation1] ss:$4 sm:$0xff] %v296
        %356 = vst [vmem:[%s315] ss:$4 sm:$0xff] %v297
        %v357 = vld.sshfl [vmem:[#allocation1] sm:$0xff pattern:$0x73625140]
        %v358 = vld.sshfl [vmem:[#allocation1 + $0x8] sm:$0xff pattern:$0x73625140]
        %v359 = vld.sshfl [vmem:[#allocation1 + $0x10] sm:$0xff pattern:$0x73625140]
        %v360 = vld.sshfl [vmem:[#allocation1 + $0x18] sm:$0xff pattern:$0x73625140]
        %v361 = vld.sshfl [vmem:[#allocation1 + $0x20] sm:$0xff pattern:$0x73625140]
        %v362 = vld.sshfl [vmem:[#allocation1 + $0x28] sm:$0xff pattern:$0x73625140]
        %v363 = vld.sshfl [vmem:[#allocation1 + $0x30] sm:$0xff pattern:$0x73625140]
        %v364 = vld.sshfl [vmem:[#allocation1 + $0x38] sm:$0xff pattern:$0x73625140]
        %365 = vst [vmem:[#allocation1] ss:$4 sm:$0xff] %v298
        %366 = vst [vmem:[%s315] ss:$4 sm:$0xff] %v299
        %v367 = vld.sshfl [vmem:[#allocation1] sm:$0xff pattern:$0x73625140]
        %v368 = vld.sshfl [vmem:[#allocation1 + $0x8] sm:$0xff pattern:$0x73625140]
        %v369 = vld.sshfl [vmem:[#allocation1 + $0x10] sm:$0xff pattern:$0x73625140]
        %v370 = vld.sshfl [vmem:[#allocation1 + $0x18] sm:$0xff pattern:$0x73625140]
        %v371 = vld.sshfl [vmem:[#allocation1 + $0x20] sm:$0xff pattern:$0x73625140]
        %v372 = vld.sshfl [vmem:[#allocation1 + $0x28] sm:$0xff pattern:$0x73625140]
        %v373 = vld.sshfl [vmem:[#allocation1 + $0x30] sm:$0xff pattern:$0x73625140]
        %v374 = vld.sshfl [vmem:[#allocation1 + $0x38] sm:$0xff pattern:$0x73625140]
        %375 = vst [vmem:[#allocation1] ss:$4 sm:$0xff] %v300
        %v376 = vld.sshfl [vmem:[#allocation1] sm:$0xff pattern:$0x73625140]
        %v426 = vpack.c.bf16 %v317, %v317
        %v427 = vpack.c.bf16 %v318, %v318
        %v428 = vpack.c.bf16 %v319, %v319
        %v429 = vpack.c.bf16 %v320, %v320
        %v430 = vpack.c.bf16 %v321, %v321
        %v431 = vpack.c.bf16 %v322, %v322
        %v432 = vpack.c.bf16 %v323, %v323
        %v433 = vpack.c.bf16 %v324, %v324
        %v434 = vpack.c.bf16 %v327, %v327
        %v435 = vpack.c.bf16 %v328, %v328
        %v436 = vpack.c.bf16 %v329, %v329
        %v437 = vpack.c.bf16 %v330, %v330
        %v438 = vpack.c.bf16 %v331, %v331
        %v439 = vpack.c.bf16 %v332, %v332
        %v440 = vpack.c.bf16 %v333, %v333
        %v441 = vpack.c.bf16 %v334, %v334
        %v442 = vpack.c.bf16 %v337, %v337
        %v443 = vpack.c.bf16 %v338, %v338
        %v444 = vpack.c.bf16 %v339, %v339
        %v445 = vpack.c.bf16 %v340, %v340
        %v446 = vpack.c.bf16 %v341, %v341
        %v447 = vpack.c.bf16 %v342, %v342
        %v448 = vpack.c.bf16 %v343, %v343
        %v449 = vpack.c.bf16 %v344, %v344
        %v450 = vpack.c.bf16 %v347, %v347
        %v451 = vpack.c.bf16 %v348, %v348
        %v452 = vpack.c.bf16 %v349, %v349
        %v453 = vpack.c.bf16 %v350, %v350
        %v454 = vpack.c.bf16 %v351, %v351
        %v455 = vpack.c.bf16 %v352, %v352
        %v456 = vpack.c.bf16 %v353, %v353
        %v457 = vpack.c.bf16 %v354, %v354
        %v458 = vpack.c.bf16 %v357, %v357
        %v459 = vpack.c.bf16 %v358, %v358
        %v460 = vpack.c.bf16 %v359, %v359
        %v461 = vpack.c.bf16 %v360, %v360
        %v462 = vpack.c.bf16 %v361, %v361
        %v463 = vpack.c.bf16 %v362, %v362
        %v464 = vpack.c.bf16 %v363, %v363
        %v465 = vpack.c.bf16 %v364, %v364
        %v466 = vpack.c.bf16 %v367, %v367
        %v467 = vpack.c.bf16 %v368, %v368
        %v468 = vpack.c.bf16 %v369, %v369
        %v469 = vpack.c.bf16 %v370, %v370
        %v470 = vpack.c.bf16 %v371, %v371
        %v471 = vpack.c.bf16 %v372, %v372
        %v472 = vpack.c.bf16 %v373, %v373
        %v473 = vpack.c.bf16 %v374, %v374
        %v474 = vpack.c.bf16 %v376, %v376
        %v475 = vld [vmem:[%s238] sm:$0xff]
        %v476 = vld [vmem:[%s238 + $0x8] sm:$0xff]
        %v477 = vld [vmem:[%s238 + $0x10] sm:$0xff]
        %v478 = vld [vmem:[%s238 + $0x18] sm:$0xff]
        %v479 = vld [vmem:[%s238 + $0x20] sm:$0xff]
        %v480 = vld [vmem:[%s238 + $0x28] sm:$0xff]
        %v481 = vld [vmem:[%s238 + $0x30] sm:$0xff]
        %v482 = vld [vmem:[%s238 + $0x38] sm:$0xff]
        %v483 = vld [vmem:[%s238 + $0x40] sm:$0xff]
        %v484 = vld [vmem:[%s238 + $0x48] sm:$0xff]
        %v485 = vld [vmem:[%s238 + $0x50] sm:$0xff]
        %v486 = vld [vmem:[%s238 + $0x58] sm:$0xff]
        %v487 = vld [vmem:[%s238 + $0x60] sm:$0xff]
        %v488 = vld [vmem:[%s238 + $0x68] sm:$0xff]
        %v489 = vld [vmem:[%s238 + $0x70] sm:$0xff]
        %v490 = vld [vmem:[%s238 + $0x78] sm:$0xff]
        %v491 = vld [vmem:[%s238 + $0x80] sm:$0xff]
        %v492 = vld [vmem:[%s238 + $0x88] sm:$0xff]
        %v493 = vld [vmem:[%s238 + $0x90] sm:$0xff]
        %v494 = vld [vmem:[%s238 + $0x98] sm:$0xff]
        %v495 = vld [vmem:[%s238 + $0xa0] sm:$0xff]
        %v496 = vld [vmem:[%s238 + $0xa8] sm:$0xff]
        %v497 = vld [vmem:[%s238 + $0xb0] sm:$0xff]
        %v498 = vld [vmem:[%s238 + $0xb8] sm:$0xff]
        %v499 = vld [vmem:[%s238 + $0xc0] sm:$0xff]
        %v500 = vld [vmem:[%s238 + $0xc8] sm:$0xff]
        %v501 = vld [vmem:[%s238 + $0xd0] sm:$0xff]
        %v502 = vld [vmem:[%s238 + $0xd8] sm:$0xff]
        %v503 = vld [vmem:[%s238 + $0xe0] sm:$0xff]
        %v504 = vld [vmem:[%s238 + $0xe8] sm:$0xff]
        %v505 = vld [vmem:[%s238 + $0xf0] sm:$0xff]
        %v506 = vld [vmem:[%s238 + $0xf8] sm:$0xff]
        %v507 = vld [vmem:[%s238 + $0x100] sm:$0xff]
        %v508 = vld [vmem:[%s238 + $0x108] sm:$0xff]
        %v509 = vld [vmem:[%s238 + $0x110] sm:$0xff]
        %v510 = vld [vmem:[%s238 + $0x118] sm:$0xff]
        %v511 = vld [vmem:[%s238 + $0x120] sm:$0xff]
        %v512 = vld [vmem:[%s238 + $0x128] sm:$0xff]
        %v513 = vld [vmem:[%s238 + $0x130] sm:$0xff]
        %v514 = vld [vmem:[%s238 + $0x138] sm:$0xff]
        %v515 = vld [vmem:[%s238 + $0x140] sm:$0xff]
        %v516 = vld [vmem:[%s238 + $0x148] sm:$0xff]
        %v517 = vld [vmem:[%s238 + $0x150] sm:$0xff]
        %v518 = vld [vmem:[%s238 + $0x158] sm:$0xff]
        %v519 = vld [vmem:[%s238 + $0x160] sm:$0xff]
        %v520 = vld [vmem:[%s238 + $0x168] sm:$0xff]
        %v521 = vld [vmem:[%s238 + $0x170] sm:$0xff]
        %v522 = vld [vmem:[%s238 + $0x178] sm:$0xff]
        %v523 = vld [vmem:[%s238 + $0x180] sm:$0xff]
        %v524 = vld [vmem:[%s238 + $0x188] sm:$0xff]
        %v525 = vld [vmem:[%s238 + $0x190] sm:$0xff]
        %v526 = vld [vmem:[%s238 + $0x198] sm:$0xff]
        %v527 = vld [vmem:[%s238 + $0x1a0] sm:$0xff]
        %v528 = vld [vmem:[%s238 + $0x1a8] sm:$0xff]
        %v529 = vld [vmem:[%s238 + $0x1b0] sm:$0xff]
        %v530 = vld [vmem:[%s238 + $0x1b8] sm:$0xff]
        %v531 = vld [vmem:[%s238 + $0x1c0] sm:$0xff]
        %v532 = vld [vmem:[%s238 + $0x1c8] sm:$0xff]
        %v533 = vld [vmem:[%s238 + $0x1d0] sm:$0xff]
        %v534 = vld [vmem:[%s238 + $0x1d8] sm:$0xff]
        %v535 = vld [vmem:[%s238 + $0x1e0] sm:$0xff]
        %v536 = vld [vmem:[%s238 + $0x1e8] sm:$0xff]
        %v537 = vld [vmem:[%s238 + $0x1f0] sm:$0xff]
        %v538 = vld [vmem:[%s238 + $0x1f8] sm:$0xff]
        %v539 = vld [vmem:[%s238 + $0x200] sm:$0xff]
        %v540 = vld [vmem:[%s238 + $0x208] sm:$0xff]
        %v541 = vld [vmem:[%s238 + $0x210] sm:$0xff]
        %v542 = vld [vmem:[%s238 + $0x218] sm:$0xff]
        %v543 = vld [vmem:[%s238 + $0x220] sm:$0xff]
        %v544 = vld [vmem:[%s238 + $0x228] sm:$0xff]
        %v545 = vld [vmem:[%s238 + $0x230] sm:$0xff]
        %v546 = vld [vmem:[%s238 + $0x238] sm:$0xff]
        %v547 = vld [vmem:[%s238 + $0x240] sm:$0xff]
        %v548 = vld [vmem:[%s238 + $0x248] sm:$0xff]
        %v549 = vld [vmem:[%s238 + $0x250] sm:$0xff]
        %v550 = vld [vmem:[%s238 + $0x258] sm:$0xff]
        %v551 = vld [vmem:[%s238 + $0x260] sm:$0xff]
        %v552 = vld [vmem:[%s238 + $0x268] sm:$0xff]
        %v553 = vld [vmem:[%s238 + $0x270] sm:$0xff]
        %v554 = vld [vmem:[%s238 + $0x278] sm:$0xff]
        %v555 = vld [vmem:[%s238 + $0x280] sm:$0xff]
        %v556 = vld [vmem:[%s238 + $0x288] sm:$0xff]
        %v557 = vld [vmem:[%s238 + $0x290] sm:$0xff]
        %v558 = vld [vmem:[%s238 + $0x298] sm:$0xff]
        %v559 = vld [vmem:[%s238 + $0x2a0] sm:$0xff]
        %v560 = vld [vmem:[%s238 + $0x2a8] sm:$0xff]
        %v561 = vld [vmem:[%s238 + $0x2b0] sm:$0xff]
        %v562 = vld [vmem:[%s238 + $0x2b8] sm:$0xff]
        %v563 = vld [vmem:[%s238 + $0x2c0] sm:$0xff]
        %v564 = vld [vmem:[%s238 + $0x2c8] sm:$0xff]
        %v565 = vld [vmem:[%s238 + $0x2d0] sm:$0xff]
        %v566 = vld [vmem:[%s238 + $0x2d8] sm:$0xff]
        %v567 = vld [vmem:[%s238 + $0x2e0] sm:$0xff]
        %v568 = vld [vmem:[%s238 + $0x2e8] sm:$0xff]
        %v569 = vld [vmem:[%s238 + $0x2f0] sm:$0xff]
        %v570 = vld [vmem:[%s238 + $0x2f8] sm:$0xff]
        %v571 = vld [vmem:[%s238 + $0x300] sm:$0xff]
        %v572 = vld [vmem:[%s238 + $0x308] sm:$0xff]
        %v573 = vld [vmem:[%s238 + $0x310] sm:$0xff]
        %v574 = vld [vmem:[%s238 + $0x318] sm:$0xff]
        %v575 = vld [vmem:[%s238 + $0x320] sm:$0xff]
        %v576 = vld [vmem:[%s238 + $0x328] sm:$0xff]
        %v577 = vld [vmem:[%s238 + $0x330] sm:$0xff]
        %v578 = vld [vmem:[%s238 + $0x338] sm:$0xff]
        %v579 = vld [vmem:[%s238 + $0x340] sm:$0xff]
        %v580 = vld [vmem:[%s238 + $0x348] sm:$0xff]
        %v581 = vld [vmem:[%s238 + $0x350] sm:$0xff]
        %v582 = vld [vmem:[%s238 + $0x358] sm:$0xff]
        %v583 = vld [vmem:[%s238 + $0x360] sm:$0xff]
        %v584 = vld [vmem:[%s238 + $0x368] sm:$0xff]
        %v585 = vld [vmem:[%s238 + $0x370] sm:$0xff]
        %v586 = vld [vmem:[%s238 + $0x378] sm:$0xff]
        %v587 = vld [vmem:[%s238 + $0x380] sm:$0xff]
        %v588 = vld [vmem:[%s238 + $0x388] sm:$0xff]
        %v589 = vld [vmem:[%s238 + $0x390] sm:$0xff]
        %v590 = vld [vmem:[%s238 + $0x398] sm:$0xff]
        %v591 = vld [vmem:[%s238 + $0x3a0] sm:$0xff]
        %v592 = vld [vmem:[%s238 + $0x3a8] sm:$0xff]
        %v593 = vld [vmem:[%s238 + $0x3b0] sm:$0xff]
        %v594 = vld [vmem:[%s238 + $0x3b8] sm:$0xff]
        %v595 = vld [vmem:[%s238 + $0x3c0] sm:$0xff]
        %v596 = vld [vmem:[%s238 + $0x3c8] sm:$0xff]
        %v597 = vld [vmem:[%s238 + $0x3d0] sm:$0xff]
        %v598 = vld [vmem:[%s238 + $0x3d8] sm:$0xff]
        %v599 = vld [vmem:[%s238 + $0x3e0] sm:$0xff]
        %v600 = vld [vmem:[%s238 + $0x3e8] sm:$0xff]
        %v601 = vld [vmem:[%s238 + $0x3f0] sm:$0xff]
        %v602 = vld [vmem:[%s238 + $0x3f8] sm:$0xff]
        %v603 = vld [vmem:[%s238 + $0x400] sm:$0xff]
        %v604 = vld [vmem:[%s238 + $0x408] sm:$0xff]
        %v605 = vld [vmem:[%s238 + $0x410] sm:$0xff]
        %v606 = vld [vmem:[%s238 + $0x418] sm:$0xff]
        %v607 = vld [vmem:[%s238 + $0x420] sm:$0xff]
        %v608 = vld [vmem:[%s238 + $0x428] sm:$0xff]
        %v609 = vld [vmem:[%s238 + $0x430] sm:$0xff]
        %v610 = vld [vmem:[%s238 + $0x438] sm:$0xff]
        %v611 = vld [vmem:[%s238 + $0x440] sm:$0xff]
        %v612 = vld [vmem:[%s238 + $0x448] sm:$0xff]
        %v613 = vld [vmem:[%s238 + $0x450] sm:$0xff]
        %v614 = vld [vmem:[%s238 + $0x458] sm:$0xff]
        %v615 = vld [vmem:[%s238 + $0x460] sm:$0xff]
        %v616 = vld [vmem:[%s238 + $0x468] sm:$0xff]
        %v617 = vld [vmem:[%s238 + $0x470] sm:$0xff]
        %v618 = vld [vmem:[%s238 + $0x478] sm:$0xff]
        %v619 = vld [vmem:[%s238 + $0x480] sm:$0xff]
        %v620 = vld [vmem:[%s238 + $0x488] sm:$0xff]
        %v621 = vld [vmem:[%s238 + $0x490] sm:$0xff]
        %v622 = vld [vmem:[%s238 + $0x498] sm:$0xff]
        %v623 = vld [vmem:[%s238 + $0x4a0] sm:$0xff]
        %v624 = vld [vmem:[%s238 + $0x4a8] sm:$0xff]
        %v625 = vld [vmem:[%s238 + $0x4b0] sm:$0xff]
        %v626 = vld [vmem:[%s238 + $0x4b8] sm:$0xff]
        %v627 = vld [vmem:[%s238 + $0x4c0] sm:$0xff]
        %v628 = vld [vmem:[%s238 + $0x4c8] sm:$0xff]
        %v629 = vld [vmem:[%s238 + $0x4d0] sm:$0xff]
        %v630 = vld [vmem:[%s238 + $0x4d8] sm:$0xff]
        %v631 = vld [vmem:[%s238 + $0x4e0] sm:$0xff]
        %v632 = vld [vmem:[%s238 + $0x4e8] sm:$0xff]
        %v633 = vld [vmem:[%s238 + $0x4f0] sm:$0xff]
        %v634 = vld [vmem:[%s238 + $0x4f8] sm:$0xff]
        %v635 = vld [vmem:[%s238 + $0x500] sm:$0xff]
        %v636 = vld [vmem:[%s238 + $0x508] sm:$0xff]
        %v637 = vld [vmem:[%s238 + $0x510] sm:$0xff]
        %v638 = vld [vmem:[%s238 + $0x518] sm:$0xff]
        %v639 = vld [vmem:[%s238 + $0x520] sm:$0xff]
        %v640 = vld [vmem:[%s238 + $0x528] sm:$0xff]
        %v641 = vld [vmem:[%s238 + $0x530] sm:$0xff]
        %v642 = vld [vmem:[%s238 + $0x538] sm:$0xff]
        %v643 = vld [vmem:[%s238 + $0x540] sm:$0xff]
        %v644 = vld [vmem:[%s238 + $0x548] sm:$0xff]
        %v645 = vld [vmem:[%s238 + $0x550] sm:$0xff]
        %v646 = vld [vmem:[%s238 + $0x558] sm:$0xff]
        %v647 = vld [vmem:[%s238 + $0x560] sm:$0xff]
        %v648 = vld [vmem:[%s238 + $0x568] sm:$0xff]
        %v649 = vld [vmem:[%s238 + $0x570] sm:$0xff]
        %v650 = vld [vmem:[%s238 + $0x578] sm:$0xff]
        %v651 = vld [vmem:[%s238 + $0x580] sm:$0xff]
        %v652 = vld [vmem:[%s238 + $0x588] sm:$0xff]
        %v653 = vld [vmem:[%s238 + $0x590] sm:$0xff]
        %v654 = vld [vmem:[%s238 + $0x598] sm:$0xff]
        %v655 = vld [vmem:[%s238 + $0x5a0] sm:$0xff]
        %v656 = vld [vmem:[%s238 + $0x5a8] sm:$0xff]
        %v657 = vld [vmem:[%s238 + $0x5b0] sm:$0xff]
        %v658 = vld [vmem:[%s238 + $0x5b8] sm:$0xff]
        %v659 = vld [vmem:[%s238 + $0x5c0] sm:$0xff]
        %v660 = vld [vmem:[%s238 + $0x5c8] sm:$0xff]
        %v661 = vld [vmem:[%s238 + $0x5d0] sm:$0xff]
        %v662 = vld [vmem:[%s238 + $0x5d8] sm:$0xff]
        %v663 = vld [vmem:[%s238 + $0x5e0] sm:$0xff]
        %v664 = vld [vmem:[%s238 + $0x5e8] sm:$0xff]
        %v665 = vld [vmem:[%s238 + $0x5f0] sm:$0xff]
        %v666 = vld [vmem:[%s238 + $0x5f8] sm:$0xff]
        %v667 = vld [vmem:[%s238 + $0x600] sm:$0xff]
        %v668 = vld [vmem:[%s238 + $0x608] sm:$0xff]
        %v669 = vld [vmem:[%s238 + $0x610] sm:$0xff]
        %v670 = vld [vmem:[%s238 + $0x618] sm:$0xff]
        %v671 = vunpack.c.0.s8 %v475
        %v672 = vunpack.c.1.s8 %v475
        %v673 = vunpack.c.2.s8 %v475
        %v674 = vunpack.c.3.s8 %v475
        %v675 = vunpack.c.0.s8 %v476
        %v676 = vunpack.c.1.s8 %v476
        %v677 = vunpack.c.2.s8 %v476
        %v678 = vunpack.c.3.s8 %v476
        %v679 = vunpack.c.0.s8 %v477
        %v680 = vunpack.c.1.s8 %v477
        %v681 = vunpack.c.2.s8 %v477
        %v682 = vunpack.c.3.s8 %v477
        %v683 = vunpack.c.0.s8 %v478
        %v684 = vunpack.c.1.s8 %v478
        %v685 = vunpack.c.2.s8 %v478
        %v686 = vunpack.c.3.s8 %v478
        %v687 = vunpack.c.0.s8 %v479
        %v688 = vunpack.c.1.s8 %v479
        %v689 = vunpack.c.2.s8 %v479
        %v690 = vunpack.c.3.s8 %v479
        %v691 = vunpack.c.0.s8 %v480
        %v692 = vunpack.c.1.s8 %v480
        %v693 = vunpack.c.2.s8 %v480
        %v694 = vunpack.c.3.s8 %v480
        %v695 = vunpack.c.0.s8 %v481
        %v696 = vunpack.c.1.s8 %v481
        %v697 = vunpack.c.2.s8 %v481
        %v698 = vunpack.c.3.s8 %v481
        %v699 = vunpack.c.0.s8 %v482
        %v700 = vunpack.c.1.s8 %v482
        %v701 = vunpack.c.2.s8 %v482
        %v702 = vunpack.c.3.s8 %v482
        %v703 = vunpack.c.0.s8 %v483
        %v704 = vunpack.c.1.s8 %v483
        %v705 = vunpack.c.2.s8 %v483
        %v706 = vunpack.c.3.s8 %v483
        %v707 = vunpack.c.0.s8 %v484
        %v708 = vunpack.c.1.s8 %v484
        %v709 = vunpack.c.2.s8 %v484
        %v710 = vunpack.c.3.s8 %v484
        %v711 = vunpack.c.0.s8 %v485
        %v712 = vunpack.c.1.s8 %v485
        %v713 = vunpack.c.2.s8 %v485
        %v714 = vunpack.c.3.s8 %v485
        %v715 = vunpack.c.0.s8 %v486
        %v716 = vunpack.c.1.s8 %v486
        %v717 = vunpack.c.2.s8 %v486
        %v718 = vunpack.c.3.s8 %v486
        %v719 = vunpack.c.0.s8 %v487
        %v720 = vunpack.c.1.s8 %v487
        %v721 = vunpack.c.2.s8 %v487
        %v722 = vunpack.c.3.s8 %v487
        %v723 = vunpack.c.0.s8 %v488
        %v724 = vunpack.c.1.s8 %v488
        %v725 = vunpack.c.2.s8 %v488
        %v726 = vunpack.c.3.s8 %v488
        %v727 = vunpack.c.0.s8 %v489
        %v728 = vunpack.c.1.s8 %v489
        %v729 = vunpack.c.2.s8 %v489
        %v730 = vunpack.c.3.s8 %v489
        %v731 = vunpack.c.0.s8 %v490
        %v732 = vunpack.c.1.s8 %v490
        %v733 = vunpack.c.2.s8 %v490
        %v734 = vunpack.c.3.s8 %v490
        %v735 = vunpack.c.0.s8 %v491
        %v736 = vunpack.c.1.s8 %v491
        %v737 = vunpack.c.2.s8 %v491
        %v738 = vunpack.c.3.s8 %v491
        %v739 = vunpack.c.0.s8 %v492
        %v740 = vunpack.c.1.s8 %v492
        %v741 = vunpack.c.2.s8 %v492
        %v742 = vunpack.c.3.s8 %v492
        %v743 = vunpack.c.0.s8 %v493
        %v744 = vunpack.c.1.s8 %v493
        %v745 = vunpack.c.2.s8 %v493
        %v746 = vunpack.c.3.s8 %v493
        %v747 = vunpack.c.0.s8 %v494
        %v748 = vunpack.c.1.s8 %v494
        %v749 = vunpack.c.2.s8 %v494
        %v750 = vunpack.c.3.s8 %v494
        %v751 = vunpack.c.0.s8 %v495
        %v752 = vunpack.c.1.s8 %v495
        %v753 = vunpack.c.2.s8 %v495
        %v754 = vunpack.c.3.s8 %v495
        %v755 = vunpack.c.0.s8 %v496
        %v756 = vunpack.c.1.s8 %v496
        %v757 = vunpack.c.2.s8 %v496
        %v758 = vunpack.c.3.s8 %v496
        %v759 = vunpack.c.0.s8 %v497
        %v760 = vunpack.c.1.s8 %v497
        %v761 = vunpack.c.2.s8 %v497
        %v762 = vunpack.c.3.s8 %v497
        %v763 = vunpack.c.0.s8 %v498
        %v764 = vunpack.c.1.s8 %v498
        %v765 = vunpack.c.2.s8 %v498
        %v766 = vunpack.c.3.s8 %v498
        %v767 = vunpack.c.0.s8 %v499
        %v768 = vunpack.c.1.s8 %v499
        %v769 = vunpack.c.2.s8 %v499
        %v770 = vunpack.c.3.s8 %v499
        %v771 = vunpack.c.0.s8 %v500
        %v772 = vunpack.c.1.s8 %v500
        %v773 = vunpack.c.2.s8 %v500
        %v774 = vunpack.c.3.s8 %v500
        %v775 = vunpack.c.0.s8 %v501
        %v776 = vunpack.c.1.s8 %v501
        %v777 = vunpack.c.2.s8 %v501
        %v778 = vunpack.c.3.s8 %v501
        %v779 = vunpack.c.0.s8 %v502
        %v780 = vunpack.c.1.s8 %v502
        %v781 = vunpack.c.2.s8 %v502
        %v782 = vunpack.c.3.s8 %v502
        %v783 = vunpack.c.0.s8 %v503
        %v784 = vunpack.c.1.s8 %v503
        %v785 = vunpack.c.2.s8 %v503
        %v786 = vunpack.c.3.s8 %v503
        %v787 = vunpack.c.0.s8 %v504
        %v788 = vunpack.c.1.s8 %v504
        %v789 = vunpack.c.2.s8 %v504
        %v790 = vunpack.c.3.s8 %v504
        %v791 = vunpack.c.0.s8 %v505
        %v792 = vunpack.c.1.s8 %v505
        %v793 = vunpack.c.2.s8 %v505
        %v794 = vunpack.c.3.s8 %v505
        %v795 = vunpack.c.0.s8 %v506
        %v796 = vunpack.c.1.s8 %v506
        %v797 = vunpack.c.2.s8 %v506
        %v798 = vunpack.c.3.s8 %v506
        %v799 = vunpack.c.0.s8 %v507
        %v800 = vunpack.c.1.s8 %v507
        %v801 = vunpack.c.2.s8 %v507
        %v802 = vunpack.c.3.s8 %v507
        %v803 = vunpack.c.0.s8 %v508
        %v804 = vunpack.c.1.s8 %v508
        %v805 = vunpack.c.2.s8 %v508
        %v806 = vunpack.c.3.s8 %v508
        %v807 = vunpack.c.0.s8 %v509
        %v808 = vunpack.c.1.s8 %v509
        %v809 = vunpack.c.2.s8 %v509
        %v810 = vunpack.c.3.s8 %v509
        %v811 = vunpack.c.0.s8 %v510
        %v812 = vunpack.c.1.s8 %v510
        %v813 = vunpack.c.2.s8 %v510
        %v814 = vunpack.c.3.s8 %v510
        %v815 = vunpack.c.0.s8 %v511
        %v816 = vunpack.c.1.s8 %v511
        %v817 = vunpack.c.2.s8 %v511
        %v818 = vunpack.c.3.s8 %v511
        %v819 = vunpack.c.0.s8 %v512
        %v820 = vunpack.c.1.s8 %v512
        %v821 = vunpack.c.2.s8 %v512
        %v822 = vunpack.c.3.s8 %v512
        %v823 = vunpack.c.0.s8 %v513
        %v824 = vunpack.c.1.s8 %v513
        %v825 = vunpack.c.2.s8 %v513
        %v826 = vunpack.c.3.s8 %v513
        %v827 = vunpack.c.0.s8 %v514
        %v828 = vunpack.c.1.s8 %v514
        %v829 = vunpack.c.2.s8 %v514
        %v830 = vunpack.c.3.s8 %v514
        %v831 = vunpack.c.0.s8 %v515
        %v832 = vunpack.c.1.s8 %v515
        %v833 = vunpack.c.2.s8 %v515
        %v834 = vunpack.c.3.s8 %v515
        %v835 = vunpack.c.0.s8 %v516
        %v836 = vunpack.c.1.s8 %v516
        %v837 = vunpack.c.2.s8 %v516
        %v838 = vunpack.c.3.s8 %v516
        %v839 = vunpack.c.0.s8 %v517
        %v840 = vunpack.c.1.s8 %v517
        %v841 = vunpack.c.2.s8 %v517
        %v842 = vunpack.c.3.s8 %v517
        %v843 = vunpack.c.0.s8 %v518
        %v844 = vunpack.c.1.s8 %v518
        %v845 = vunpack.c.2.s8 %v518
        %v846 = vunpack.c.3.s8 %v518
        %v847 = vunpack.c.0.s8 %v519
        %v848 = vunpack.c.1.s8 %v519
        %v849 = vunpack.c.2.s8 %v519
        %v850 = vunpack.c.3.s8 %v519
        %v851 = vunpack.c.0.s8 %v520
        %v852 = vunpack.c.1.s8 %v520
        %v853 = vunpack.c.2.s8 %v520
        %v854 = vunpack.c.3.s8 %v520
        %v855 = vunpack.c.0.s8 %v521
        %v856 = vunpack.c.1.s8 %v521
        %v857 = vunpack.c.2.s8 %v521
        %v858 = vunpack.c.3.s8 %v521
        %v859 = vunpack.c.0.s8 %v522
        %v860 = vunpack.c.1.s8 %v522
        %v861 = vunpack.c.2.s8 %v522
        %v862 = vunpack.c.3.s8 %v522
        %v863 = vunpack.c.0.s8 %v523
        %v864 = vunpack.c.1.s8 %v523
        %v865 = vunpack.c.2.s8 %v523
        %v866 = vunpack.c.3.s8 %v523
        %v867 = vunpack.c.0.s8 %v524
        %v868 = vunpack.c.1.s8 %v524
        %v869 = vunpack.c.2.s8 %v524
        %v870 = vunpack.c.3.s8 %v524
        %v871 = vunpack.c.0.s8 %v525
        %v872 = vunpack.c.1.s8 %v525
        %v873 = vunpack.c.2.s8 %v525
        %v874 = vunpack.c.3.s8 %v525
        %v875 = vunpack.c.0.s8 %v526
        %v876 = vunpack.c.1.s8 %v526
        %v877 = vunpack.c.2.s8 %v526
        %v878 = vunpack.c.3.s8 %v526
        %v879 = vunpack.c.0.s8 %v527
        %v880 = vunpack.c.1.s8 %v527
        %v881 = vunpack.c.2.s8 %v527
        %v882 = vunpack.c.3.s8 %v527
        %v883 = vunpack.c.0.s8 %v528
        %v884 = vunpack.c.1.s8 %v528
        %v885 = vunpack.c.2.s8 %v528
        %v886 = vunpack.c.3.s8 %v528
        %v887 = vunpack.c.0.s8 %v529
        %v888 = vunpack.c.1.s8 %v529
        %v889 = vunpack.c.2.s8 %v529
        %v890 = vunpack.c.3.s8 %v529
        %v891 = vunpack.c.0.s8 %v530
        %v892 = vunpack.c.1.s8 %v530
        %v893 = vunpack.c.2.s8 %v530
        %v894 = vunpack.c.3.s8 %v530
        %v895 = vunpack.c.0.s8 %v531
        %v896 = vunpack.c.1.s8 %v531
        %v897 = vunpack.c.2.s8 %v531
        %v898 = vunpack.c.3.s8 %v531
        %v899 = vunpack.c.0.s8 %v532
        %v900 = vunpack.c.1.s8 %v532
        %v901 = vunpack.c.2.s8 %v532
        %v902 = vunpack.c.3.s8 %v532
        %v903 = vunpack.c.0.s8 %v533
        %v904 = vunpack.c.1.s8 %v533
        %v905 = vunpack.c.2.s8 %v533
        %v906 = vunpack.c.3.s8 %v533
        %v907 = vunpack.c.0.s8 %v534
        %v908 = vunpack.c.1.s8 %v534
        %v909 = vunpack.c.2.s8 %v534
        %v910 = vunpack.c.3.s8 %v534
        %v911 = vunpack.c.0.s8 %v535
        %v912 = vunpack.c.1.s8 %v535
        %v913 = vunpack.c.2.s8 %v535
        %v914 = vunpack.c.3.s8 %v535
        %v915 = vunpack.c.0.s8 %v536
        %v916 = vunpack.c.1.s8 %v536
        %v917 = vunpack.c.2.s8 %v536
        %v918 = vunpack.c.3.s8 %v536
        %v919 = vunpack.c.0.s8 %v537
        %v920 = vunpack.c.1.s8 %v537
        %v921 = vunpack.c.2.s8 %v537
        %v922 = vunpack.c.3.s8 %v537
        %v923 = vunpack.c.0.s8 %v538
        %v924 = vunpack.c.1.s8 %v538
        %v925 = vunpack.c.2.s8 %v538
        %v926 = vunpack.c.3.s8 %v538
        %v927 = vunpack.c.0.s8 %v539
        %v928 = vunpack.c.1.s8 %v539
        %v929 = vunpack.c.2.s8 %v539
        %v930 = vunpack.c.3.s8 %v539
        %v931 = vunpack.c.0.s8 %v540
        %v932 = vunpack.c.1.s8 %v540
        %v933 = vunpack.c.2.s8 %v540
        %v934 = vunpack.c.3.s8 %v540
        %v935 = vunpack.c.0.s8 %v541
        %v936 = vunpack.c.1.s8 %v541
        %v937 = vunpack.c.2.s8 %v541
        %v938 = vunpack.c.3.s8 %v541
        %v939 = vunpack.c.0.s8 %v542
        %v940 = vunpack.c.1.s8 %v542
        %v941 = vunpack.c.2.s8 %v542
        %v942 = vunpack.c.3.s8 %v542
        %v943 = vunpack.c.0.s8 %v543
        %v944 = vunpack.c.1.s8 %v543
        %v945 = vunpack.c.2.s8 %v543
        %v946 = vunpack.c.3.s8 %v543
        %v947 = vunpack.c.0.s8 %v544
        %v948 = vunpack.c.1.s8 %v544
        %v949 = vunpack.c.2.s8 %v544
        %v950 = vunpack.c.3.s8 %v544
        %v951 = vunpack.c.0.s8 %v545
        %v952 = vunpack.c.1.s8 %v545
        %v953 = vunpack.c.2.s8 %v545
        %v954 = vunpack.c.3.s8 %v545
        %v955 = vunpack.c.0.s8 %v546
        %v956 = vunpack.c.1.s8 %v546
        %v957 = vunpack.c.2.s8 %v546
        %v958 = vunpack.c.3.s8 %v546
        %v959 = vunpack.c.0.s8 %v547
        %v960 = vunpack.c.1.s8 %v547
        %v961 = vunpack.c.2.s8 %v547
        %v962 = vunpack.c.3.s8 %v547
        %v963 = vunpack.c.0.s8 %v548
        %v964 = vunpack.c.1.s8 %v548
        %v965 = vunpack.c.2.s8 %v548
        %v966 = vunpack.c.3.s8 %v548
        %v967 = vunpack.c.0.s8 %v549
        %v968 = vunpack.c.1.s8 %v549
        %v969 = vunpack.c.2.s8 %v549
        %v970 = vunpack.c.3.s8 %v549
        %v971 = vunpack.c.0.s8 %v550
        %v972 = vunpack.c.1.s8 %v550
        %v973 = vunpack.c.2.s8 %v550
        %v974 = vunpack.c.3.s8 %v550
        %v975 = vunpack.c.0.s8 %v551
        %v976 = vunpack.c.1.s8 %v551
        %v977 = vunpack.c.2.s8 %v551
        %v978 = vunpack.c.3.s8 %v551
        %v979 = vunpack.c.0.s8 %v552
        %v980 = vunpack.c.1.s8 %v552
        %v981 = vunpack.c.2.s8 %v552
        %v982 = vunpack.c.3.s8 %v552
        %v983 = vunpack.c.0.s8 %v553
        %v984 = vunpack.c.1.s8 %v553
        %v985 = vunpack.c.2.s8 %v553
        %v986 = vunpack.c.3.s8 %v553
        %v987 = vunpack.c.0.s8 %v554
        %v988 = vunpack.c.1.s8 %v554
        %v989 = vunpack.c.2.s8 %v554
        %v990 = vunpack.c.3.s8 %v554
        %v991 = vunpack.c.0.s8 %v555
        %v992 = vunpack.c.1.s8 %v555
        %v993 = vunpack.c.2.s8 %v555
        %v994 = vunpack.c.3.s8 %v555
        %v995 = vunpack.c.0.s8 %v556
        %v996 = vunpack.c.1.s8 %v556
        %v997 = vunpack.c.2.s8 %v556
        %v998 = vunpack.c.3.s8 %v556
        %v999 = vunpack.c.0.s8 %v557
        %v1000 = vunpack.c.1.s8 %v557
        %v1001 = vunpack.c.2.s8 %v557
        %v1002 = vunpack.c.3.s8 %v557
        %v1003 = vunpack.c.0.s8 %v558
        %v1004 = vunpack.c.1.s8 %v558
        %v1005 = vunpack.c.2.s8 %v558
        %v1006 = vunpack.c.3.s8 %v558
        %v1007 = vunpack.c.0.s8 %v559
        %v1008 = vunpack.c.1.s8 %v559
        %v1009 = vunpack.c.2.s8 %v559
        %v1010 = vunpack.c.3.s8 %v559
        %v1011 = vunpack.c.0.s8 %v560
        %v1012 = vunpack.c.1.s8 %v560
        %v1013 = vunpack.c.2.s8 %v560
        %v1014 = vunpack.c.3.s8 %v560
        %v1015 = vunpack.c.0.s8 %v561
        %v1016 = vunpack.c.1.s8 %v561
        %v1017 = vunpack.c.2.s8 %v561
        %v1018 = vunpack.c.3.s8 %v561
        %v1019 = vunpack.c.0.s8 %v562
        %v1020 = vunpack.c.1.s8 %v562
        %v1021 = vunpack.c.2.s8 %v562
        %v1022 = vunpack.c.3.s8 %v562
        %v1023 = vunpack.c.0.s8 %v563
        %v1024 = vunpack.c.1.s8 %v563
        %v1025 = vunpack.c.2.s8 %v563
        %v1026 = vunpack.c.3.s8 %v563
        %v1027 = vunpack.c.0.s8 %v564
        %v1028 = vunpack.c.1.s8 %v564
        %v1029 = vunpack.c.2.s8 %v564
        %v1030 = vunpack.c.3.s8 %v564
        %v1031 = vunpack.c.0.s8 %v565
        %v1032 = vunpack.c.1.s8 %v565
        %v1033 = vunpack.c.2.s8 %v565
        %v1034 = vunpack.c.3.s8 %v565
        %v1035 = vunpack.c.0.s8 %v566
        %v1036 = vunpack.c.1.s8 %v566
        %v1037 = vunpack.c.2.s8 %v566
        %v1038 = vunpack.c.3.s8 %v566
        %v1039 = vunpack.c.0.s8 %v567
        %v1040 = vunpack.c.1.s8 %v567
        %v1041 = vunpack.c.2.s8 %v567
        %v1042 = vunpack.c.3.s8 %v567
        %v1043 = vunpack.c.0.s8 %v568
        %v1044 = vunpack.c.1.s8 %v568
        %v1045 = vunpack.c.2.s8 %v568
        %v1046 = vunpack.c.3.s8 %v568
        %v1047 = vunpack.c.0.s8 %v569
        %v1048 = vunpack.c.1.s8 %v569
        %v1049 = vunpack.c.2.s8 %v569
        %v1050 = vunpack.c.3.s8 %v569
        %v1051 = vunpack.c.0.s8 %v570
        %v1052 = vunpack.c.1.s8 %v570
        %v1053 = vunpack.c.2.s8 %v570
        %v1054 = vunpack.c.3.s8 %v570
        %v1055 = vunpack.c.0.s8 %v571
        %v1056 = vunpack.c.1.s8 %v571
        %v1057 = vunpack.c.2.s8 %v571
        %v1058 = vunpack.c.3.s8 %v571
        %v1059 = vunpack.c.0.s8 %v572
        %v1060 = vunpack.c.1.s8 %v572
        %v1061 = vunpack.c.2.s8 %v572
        %v1062 = vunpack.c.3.s8 %v572
        %v1063 = vunpack.c.0.s8 %v573
        %v1064 = vunpack.c.1.s8 %v573
        %v1065 = vunpack.c.2.s8 %v573
        %v1066 = vunpack.c.3.s8 %v573
        %v1067 = vunpack.c.0.s8 %v574
        %v1068 = vunpack.c.1.s8 %v574
        %v1069 = vunpack.c.2.s8 %v574
        %v1070 = vunpack.c.3.s8 %v574
        %v1071 = vunpack.c.0.s8 %v575
        %v1072 = vunpack.c.1.s8 %v575
        %v1073 = vunpack.c.2.s8 %v575
        %v1074 = vunpack.c.3.s8 %v575
        %v1075 = vunpack.c.0.s8 %v576
        %v1076 = vunpack.c.1.s8 %v576
        %v1077 = vunpack.c.2.s8 %v576
        %v1078 = vunpack.c.3.s8 %v576
        %v1079 = vunpack.c.0.s8 %v577
        %v1080 = vunpack.c.1.s8 %v577
        %v1081 = vunpack.c.2.s8 %v577
        %v1082 = vunpack.c.3.s8 %v577
        %v1083 = vunpack.c.0.s8 %v578
        %v1084 = vunpack.c.1.s8 %v578
        %v1085 = vunpack.c.2.s8 %v578
        %v1086 = vunpack.c.3.s8 %v578
        %v1087 = vunpack.c.0.s8 %v579
        %v1088 = vunpack.c.1.s8 %v579
        %v1089 = vunpack.c.2.s8 %v579
        %v1090 = vunpack.c.3.s8 %v579
        %v1091 = vunpack.c.0.s8 %v580
        %v1092 = vunpack.c.1.s8 %v580
        %v1093 = vunpack.c.2.s8 %v580
        %v1094 = vunpack.c.3.s8 %v580
        %v1095 = vunpack.c.0.s8 %v581
        %v1096 = vunpack.c.1.s8 %v581
        %v1097 = vunpack.c.2.s8 %v581
        %v1098 = vunpack.c.3.s8 %v581
        %v1099 = vunpack.c.0.s8 %v582
        %v1100 = vunpack.c.1.s8 %v582
        %v1101 = vunpack.c.2.s8 %v582
        %v1102 = vunpack.c.3.s8 %v582
        %v1103 = vunpack.c.0.s8 %v583
        %v1104 = vunpack.c.1.s8 %v583
        %v1105 = vunpack.c.2.s8 %v583
        %v1106 = vunpack.c.3.s8 %v583
        %v1107 = vunpack.c.0.s8 %v584
        %v1108 = vunpack.c.1.s8 %v584
        %v1109 = vunpack.c.2.s8 %v584
        %v1110 = vunpack.c.3.s8 %v584
        %v1111 = vunpack.c.0.s8 %v585
        %v1112 = vunpack.c.1.s8 %v585
        %v1113 = vunpack.c.2.s8 %v585
        %v1114 = vunpack.c.3.s8 %v585
        %v1115 = vunpack.c.0.s8 %v586
        %v1116 = vunpack.c.1.s8 %v586
        %v1117 = vunpack.c.2.s8 %v586
        %v1118 = vunpack.c.3.s8 %v586
        %v1119 = vunpack.c.0.s8 %v587
        %v1120 = vunpack.c.1.s8 %v587
        %v1121 = vunpack.c.2.s8 %v587
        %v1122 = vunpack.c.3.s8 %v587
        %v1123 = vunpack.c.0.s8 %v588
        %v1124 = vunpack.c.1.s8 %v588
        %v1125 = vunpack.c.2.s8 %v588
        %v1126 = vunpack.c.3.s8 %v588
        %v1127 = vunpack.c.0.s8 %v589
        %v1128 = vunpack.c.1.s8 %v589
        %v1129 = vunpack.c.2.s8 %v589
        %v1130 = vunpack.c.3.s8 %v589
        %v1131 = vunpack.c.0.s8 %v590
        %v1132 = vunpack.c.1.s8 %v590
        %v1133 = vunpack.c.2.s8 %v590
        %v1134 = vunpack.c.3.s8 %v590
        %v1135 = vunpack.c.0.s8 %v591
        %v1136 = vunpack.c.1.s8 %v591
        %v1137 = vunpack.c.2.s8 %v591
        %v1138 = vunpack.c.3.s8 %v591
        %v1139 = vunpack.c.0.s8 %v592
        %v1140 = vunpack.c.1.s8 %v592
        %v1141 = vunpack.c.2.s8 %v592
        %v1142 = vunpack.c.3.s8 %v592
        %v1143 = vunpack.c.0.s8 %v593
        %v1144 = vunpack.c.1.s8 %v593
        %v1145 = vunpack.c.2.s8 %v593
        %v1146 = vunpack.c.3.s8 %v593
        %v1147 = vunpack.c.0.s8 %v594
        %v1148 = vunpack.c.1.s8 %v594
        %v1149 = vunpack.c.2.s8 %v594
        %v1150 = vunpack.c.3.s8 %v594
        %v1151 = vunpack.c.0.s8 %v595
        %v1152 = vunpack.c.1.s8 %v595
        %v1153 = vunpack.c.2.s8 %v595
        %v1154 = vunpack.c.3.s8 %v595
        %v1155 = vunpack.c.0.s8 %v596
        %v1156 = vunpack.c.1.s8 %v596
        %v1157 = vunpack.c.2.s8 %v596
        %v1158 = vunpack.c.3.s8 %v596
        %v1159 = vunpack.c.0.s8 %v597
        %v1160 = vunpack.c.1.s8 %v597
        %v1161 = vunpack.c.2.s8 %v597
        %v1162 = vunpack.c.3.s8 %v597
        %v1163 = vunpack.c.0.s8 %v598
        %v1164 = vunpack.c.1.s8 %v598
        %v1165 = vunpack.c.2.s8 %v598
        %v1166 = vunpack.c.3.s8 %v598
        %v1167 = vunpack.c.0.s8 %v599
        %v1168 = vunpack.c.1.s8 %v599
        %v1169 = vunpack.c.2.s8 %v599
        %v1170 = vunpack.c.3.s8 %v599
        %v1171 = vunpack.c.0.s8 %v600
        %v1172 = vunpack.c.1.s8 %v600
        %v1173 = vunpack.c.2.s8 %v600
        %v1174 = vunpack.c.3.s8 %v600
        %v1175 = vunpack.c.0.s8 %v601
        %v1176 = vunpack.c.1.s8 %v601
        %v1177 = vunpack.c.2.s8 %v601
        %v1178 = vunpack.c.3.s8 %v601
        %v1179 = vunpack.c.0.s8 %v602
        %v1180 = vunpack.c.1.s8 %v602
        %v1181 = vunpack.c.2.s8 %v602
        %v1182 = vunpack.c.3.s8 %v602
        %v1183 = vunpack.c.0.s8 %v603
        %v1184 = vunpack.c.1.s8 %v603
        %v1185 = vunpack.c.2.s8 %v603
        %v1186 = vunpack.c.3.s8 %v603
        %v1187 = vunpack.c.0.s8 %v604
        %v1188 = vunpack.c.1.s8 %v604
        %v1189 = vunpack.c.2.s8 %v604
        %v1190 = vunpack.c.3.s8 %v604
        %v1191 = vunpack.c.0.s8 %v605
        %v1192 = vunpack.c.1.s8 %v605
        %v1193 = vunpack.c.2.s8 %v605
        %v1194 = vunpack.c.3.s8 %v605
        %v1195 = vunpack.c.0.s8 %v606
        %v1196 = vunpack.c.1.s8 %v606
        %v1197 = vunpack.c.2.s8 %v606
        %v1198 = vunpack.c.3.s8 %v606
        %v1199 = vunpack.c.0.s8 %v607
        %v1200 = vunpack.c.1.s8 %v607
        %v1201 = vunpack.c.2.s8 %v607
        %v1202 = vunpack.c.3.s8 %v607
        %v1203 = vunpack.c.0.s8 %v608
        %v1204 = vunpack.c.1.s8 %v608
        %v1205 = vunpack.c.2.s8 %v608
        %v1206 = vunpack.c.3.s8 %v608
        %v1207 = vunpack.c.0.s8 %v609
        %v1208 = vunpack.c.1.s8 %v609
        %v1209 = vunpack.c.2.s8 %v609
        %v1210 = vunpack.c.3.s8 %v609
        %v1211 = vunpack.c.0.s8 %v610
        %v1212 = vunpack.c.1.s8 %v610
        %v1213 = vunpack.c.2.s8 %v610
        %v1214 = vunpack.c.3.s8 %v610
        %v1215 = vunpack.c.0.s8 %v611
        %v1216 = vunpack.c.1.s8 %v611
        %v1217 = vunpack.c.2.s8 %v611
        %v1218 = vunpack.c.3.s8 %v611
        %v1219 = vunpack.c.0.s8 %v612
        %v1220 = vunpack.c.1.s8 %v612
        %v1221 = vunpack.c.2.s8 %v612
        %v1222 = vunpack.c.3.s8 %v612
        %v1223 = vunpack.c.0.s8 %v613
        %v1224 = vunpack.c.1.s8 %v613
        %v1225 = vunpack.c.2.s8 %v613
        %v1226 = vunpack.c.3.s8 %v613
        %v1227 = vunpack.c.0.s8 %v614
        %v1228 = vunpack.c.1.s8 %v614
        %v1229 = vunpack.c.2.s8 %v614
        %v1230 = vunpack.c.3.s8 %v614
        %v1231 = vunpack.c.0.s8 %v615
        %v1232 = vunpack.c.1.s8 %v615
        %v1233 = vunpack.c.2.s8 %v615
        %v1234 = vunpack.c.3.s8 %v615
        %v1235 = vunpack.c.0.s8 %v616
        %v1236 = vunpack.c.1.s8 %v616
        %v1237 = vunpack.c.2.s8 %v616
        %v1238 = vunpack.c.3.s8 %v616
        %v1239 = vunpack.c.0.s8 %v617
        %v1240 = vunpack.c.1.s8 %v617
        %v1241 = vunpack.c.2.s8 %v617
        %v1242 = vunpack.c.3.s8 %v617
        %v1243 = vunpack.c.0.s8 %v618
        %v1244 = vunpack.c.1.s8 %v618
        %v1245 = vunpack.c.2.s8 %v618
        %v1246 = vunpack.c.3.s8 %v618
        %v1247 = vunpack.c.0.s8 %v619
        %v1248 = vunpack.c.1.s8 %v619
        %v1249 = vunpack.c.2.s8 %v619
        %v1250 = vunpack.c.3.s8 %v619
        %v1251 = vunpack.c.0.s8 %v620
        %v1252 = vunpack.c.1.s8 %v620
        %v1253 = vunpack.c.2.s8 %v620
        %v1254 = vunpack.c.3.s8 %v620
        %v1255 = vunpack.c.0.s8 %v621
        %v1256 = vunpack.c.1.s8 %v621
        %v1257 = vunpack.c.2.s8 %v621
        %v1258 = vunpack.c.3.s8 %v621
        %v1259 = vunpack.c.0.s8 %v622
        %v1260 = vunpack.c.1.s8 %v622
        %v1261 = vunpack.c.2.s8 %v622
        %v1262 = vunpack.c.3.s8 %v622
        %v1263 = vunpack.c.0.s8 %v623
        %v1264 = vunpack.c.1.s8 %v623
        %v1265 = vunpack.c.2.s8 %v623
        %v1266 = vunpack.c.3.s8 %v623
        %v1267 = vunpack.c.0.s8 %v624
        %v1268 = vunpack.c.1.s8 %v624
        %v1269 = vunpack.c.2.s8 %v624
        %v1270 = vunpack.c.3.s8 %v624
        %v1271 = vunpack.c.0.s8 %v625
        %v1272 = vunpack.c.1.s8 %v625
        %v1273 = vunpack.c.2.s8 %v625
        %v1274 = vunpack.c.3.s8 %v625
        %v1275 = vunpack.c.0.s8 %v626
        %v1276 = vunpack.c.1.s8 %v626
        %v1277 = vunpack.c.2.s8 %v626
        %v1278 = vunpack.c.3.s8 %v626
        %v1279 = vunpack.c.0.s8 %v627
        %v1280 = vunpack.c.1.s8 %v627
        %v1281 = vunpack.c.2.s8 %v627
        %v1282 = vunpack.c.3.s8 %v627
        %v1283 = vunpack.c.0.s8 %v628
        %v1284 = vunpack.c.1.s8 %v628
        %v1285 = vunpack.c.2.s8 %v628
        %v1286 = vunpack.c.3.s8 %v628
        %v1287 = vunpack.c.0.s8 %v629
        %v1288 = vunpack.c.1.s8 %v629
        %v1289 = vunpack.c.2.s8 %v629
        %v1290 = vunpack.c.3.s8 %v629
        %v1291 = vunpack.c.0.s8 %v630
        %v1292 = vunpack.c.1.s8 %v630
        %v1293 = vunpack.c.2.s8 %v630
        %v1294 = vunpack.c.3.s8 %v630
        %v1295 = vunpack.c.0.s8 %v631
        %v1296 = vunpack.c.1.s8 %v631
        %v1297 = vunpack.c.2.s8 %v631
        %v1298 = vunpack.c.3.s8 %v631
        %v1299 = vunpack.c.0.s8 %v632
        %v1300 = vunpack.c.1.s8 %v632
        %v1301 = vunpack.c.2.s8 %v632
        %v1302 = vunpack.c.3.s8 %v632
        %v1303 = vunpack.c.0.s8 %v633
        %v1304 = vunpack.c.1.s8 %v633
        %v1305 = vunpack.c.2.s8 %v633
        %v1306 = vunpack.c.3.s8 %v633
        %v1307 = vunpack.c.0.s8 %v634
        %v1308 = vunpack.c.1.s8 %v634
        %v1309 = vunpack.c.2.s8 %v634
        %v1310 = vunpack.c.3.s8 %v634
        %v1311 = vunpack.c.0.s8 %v635
        %v1312 = vunpack.c.1.s8 %v635
        %v1313 = vunpack.c.2.s8 %v635
        %v1314 = vunpack.c.3.s8 %v635
        %v1315 = vunpack.c.0.s8 %v636
        %v1316 = vunpack.c.1.s8 %v636
        %v1317 = vunpack.c.2.s8 %v636
        %v1318 = vunpack.c.3.s8 %v636
        %v1319 = vunpack.c.0.s8 %v637
        %v1320 = vunpack.c.1.s8 %v637
        %v1321 = vunpack.c.2.s8 %v637
        %v1322 = vunpack.c.3.s8 %v637
        %v1323 = vunpack.c.0.s8 %v638
        %v1324 = vunpack.c.1.s8 %v638
        %v1325 = vunpack.c.2.s8 %v638
        %v1326 = vunpack.c.3.s8 %v638
        %v1327 = vunpack.c.0.s8 %v639
        %v1328 = vunpack.c.1.s8 %v639
        %v1329 = vunpack.c.2.s8 %v639
        %v1330 = vunpack.c.3.s8 %v639
        %v1331 = vunpack.c.0.s8 %v640
        %v1332 = vunpack.c.1.s8 %v640
        %v1333 = vunpack.c.2.s8 %v640
        %v1334 = vunpack.c.3.s8 %v640
        %v1335 = vunpack.c.0.s8 %v641
        %v1336 = vunpack.c.1.s8 %v641
        %v1337 = vunpack.c.2.s8 %v641
        %v1338 = vunpack.c.3.s8 %v641
        %v1339 = vunpack.c.0.s8 %v642
        %v1340 = vunpack.c.1.s8 %v642
        %v1341 = vunpack.c.2.s8 %v642
        %v1342 = vunpack.c.3.s8 %v642
        %v1343 = vunpack.c.0.s8 %v643
        %v1344 = vunpack.c.1.s8 %v643
        %v1345 = vunpack.c.2.s8 %v643
        %v1346 = vunpack.c.3.s8 %v643
        %v1347 = vunpack.c.0.s8 %v644
        %v1348 = vunpack.c.1.s8 %v644
        %v1349 = vunpack.c.2.s8 %v644
        %v1350 = vunpack.c.3.s8 %v644
        %v1351 = vunpack.c.0.s8 %v645
        %v1352 = vunpack.c.1.s8 %v645
        %v1353 = vunpack.c.2.s8 %v645
        %v1354 = vunpack.c.3.s8 %v645
        %v1355 = vunpack.c.0.s8 %v646
        %v1356 = vunpack.c.1.s8 %v646
        %v1357 = vunpack.c.2.s8 %v646
        %v1358 = vunpack.c.3.s8 %v646
        %v1359 = vunpack.c.0.s8 %v647
        %v1360 = vunpack.c.1.s8 %v647
        %v1361 = vunpack.c.2.s8 %v647
        %v1362 = vunpack.c.3.s8 %v647
        %v1363 = vunpack.c.0.s8 %v648
        %v1364 = vunpack.c.1.s8 %v648
        %v1365 = vunpack.c.2.s8 %v648
        %v1366 = vunpack.c.3.s8 %v648
        %v1367 = vunpack.c.0.s8 %v649
        %v1368 = vunpack.c.1.s8 %v649
        %v1369 = vunpack.c.2.s8 %v649
        %v1370 = vunpack.c.3.s8 %v649
        %v1371 = vunpack.c.0.s8 %v650
        %v1372 = vunpack.c.1.s8 %v650
        %v1373 = vunpack.c.2.s8 %v650
        %v1374 = vunpack.c.3.s8 %v650
        %v1375 = vunpack.c.0.s8 %v651
        %v1376 = vunpack.c.1.s8 %v651
        %v1377 = vunpack.c.2.s8 %v651
        %v1378 = vunpack.c.3.s8 %v651
        %v1379 = vunpack.c.0.s8 %v652
        %v1380 = vunpack.c.1.s8 %v652
        %v1381 = vunpack.c.2.s8 %v652
        %v1382 = vunpack.c.3.s8 %v652
        %v1383 = vunpack.c.0.s8 %v653
        %v1384 = vunpack.c.1.s8 %v653
        %v1385 = vunpack.c.2.s8 %v653
        %v1386 = vunpack.c.3.s8 %v653
        %v1387 = vunpack.c.0.s8 %v654
        %v1388 = vunpack.c.1.s8 %v654
        %v1389 = vunpack.c.2.s8 %v654
        %v1390 = vunpack.c.3.s8 %v654
        %v1391 = vunpack.c.0.s8 %v655
        %v1392 = vunpack.c.1.s8 %v655
        %v1393 = vunpack.c.2.s8 %v655
        %v1394 = vunpack.c.3.s8 %v655
        %v1395 = vunpack.c.0.s8 %v656
        %v1396 = vunpack.c.1.s8 %v656
        %v1397 = vunpack.c.2.s8 %v656
        %v1398 = vunpack.c.3.s8 %v656
        %v1399 = vunpack.c.0.s8 %v657
        %v1400 = vunpack.c.1.s8 %v657
        %v1401 = vunpack.c.2.s8 %v657
        %v1402 = vunpack.c.3.s8 %v657
        %v1403 = vunpack.c.0.s8 %v658
        %v1404 = vunpack.c.1.s8 %v658
        %v1405 = vunpack.c.2.s8 %v658
        %v1406 = vunpack.c.3.s8 %v658
        %v1407 = vunpack.c.0.s8 %v659
        %v1408 = vunpack.c.1.s8 %v659
        %v1409 = vunpack.c.2.s8 %v659
        %v1410 = vunpack.c.3.s8 %v659
        %v1411 = vunpack.c.0.s8 %v660
        %v1412 = vunpack.c.1.s8 %v660
        %v1413 = vunpack.c.2.s8 %v660
        %v1414 = vunpack.c.3.s8 %v660
        %v1415 = vunpack.c.0.s8 %v661
        %v1416 = vunpack.c.1.s8 %v661
        %v1417 = vunpack.c.2.s8 %v661
        %v1418 = vunpack.c.3.s8 %v661
        %v1419 = vunpack.c.0.s8 %v662
        %v1420 = vunpack.c.1.s8 %v662
        %v1421 = vunpack.c.2.s8 %v662
        %v1422 = vunpack.c.3.s8 %v662
        %v1423 = vunpack.c.0.s8 %v663
        %v1424 = vunpack.c.1.s8 %v663
        %v1425 = vunpack.c.2.s8 %v663
        %v1426 = vunpack.c.3.s8 %v663
        %v1427 = vunpack.c.0.s8 %v664
        %v1428 = vunpack.c.1.s8 %v664
        %v1429 = vunpack.c.2.s8 %v664
        %v1430 = vunpack.c.3.s8 %v664
        %v1431 = vunpack.c.0.s8 %v665
        %v1432 = vunpack.c.1.s8 %v665
        %v1433 = vunpack.c.2.s8 %v665
        %v1434 = vunpack.c.3.s8 %v665
        %v1435 = vunpack.c.0.s8 %v666
        %v1436 = vunpack.c.1.s8 %v666
        %v1437 = vunpack.c.2.s8 %v666
        %v1438 = vunpack.c.3.s8 %v666
        %v1439 = vunpack.c.0.s8 %v667
        %v1440 = vunpack.c.1.s8 %v667
        %v1441 = vunpack.c.2.s8 %v667
        %v1442 = vunpack.c.3.s8 %v667
        %v1443 = vunpack.c.0.s8 %v668
        %v1444 = vunpack.c.1.s8 %v668
        %v1445 = vunpack.c.2.s8 %v668
        %v1446 = vunpack.c.3.s8 %v668
        %v1447 = vunpack.c.0.s8 %v669
        %v1448 = vunpack.c.1.s8 %v669
        %v1449 = vunpack.c.2.s8 %v669
        %v1450 = vunpack.c.3.s8 %v669
        %v1451 = vunpack.c.0.s8 %v670
        %v1452 = vunpack.c.1.s8 %v670
        %v1453 = vunpack.c.2.s8 %v670
        %v1454 = vunpack.c.3.s8 %v670
        %v1455 = vcvt.s32.f32 %v671
        %v1456 = vcvt.s32.f32 %v672
        %v1457 = vcvt.s32.f32 %v673
        %v1458 = vcvt.s32.f32 %v674
        %v1459 = vcvt.s32.f32 %v675
        %v1460 = vcvt.s32.f32 %v676
        %v1461 = vcvt.s32.f32 %v677
        %v1462 = vcvt.s32.f32 %v678
        %v1463 = vcvt.s32.f32 %v679
        %v1464 = vcvt.s32.f32 %v680
        %v1465 = vcvt.s32.f32 %v681
        %v1466 = vcvt.s32.f32 %v682
        %v1467 = vcvt.s32.f32 %v683
        %v1468 = vcvt.s32.f32 %v684
        %v1469 = vcvt.s32.f32 %v685
        %v1470 = vcvt.s32.f32 %v686
        %v1471 = vcvt.s32.f32 %v687
        %v1472 = vcvt.s32.f32 %v688
        %v1473 = vcvt.s32.f32 %v689
        %v1474 = vcvt.s32.f32 %v690
        %v1475 = vcvt.s32.f32 %v691
        %v1476 = vcvt.s32.f32 %v692
        %v1477 = vcvt.s32.f32 %v693
        %v1478 = vcvt.s32.f32 %v694
        %v1479 = vcvt.s32.f32 %v695
        %v1480 = vcvt.s32.f32 %v696
        %v1481 = vcvt.s32.f32 %v697
        %v1482 = vcvt.s32.f32 %v698
        %v1483 = vcvt.s32.f32 %v699
        %v1484 = vcvt.s32.f32 %v700
        %v1485 = vcvt.s32.f32 %v701
        %v1486 = vcvt.s32.f32 %v702
        %v1487 = vcvt.s32.f32 %v703
        %v1488 = vcvt.s32.f32 %v704
        %v1489 = vcvt.s32.f32 %v705
        %v1490 = vcvt.s32.f32 %v706
        %v1491 = vcvt.s32.f32 %v707
        %v1492 = vcvt.s32.f32 %v708
        %v1493 = vcvt.s32.f32 %v709
        %v1494 = vcvt.s32.f32 %v710
        %v1495 = vcvt.s32.f32 %v711
        %v1496 = vcvt.s32.f32 %v712
        %v1497 = vcvt.s32.f32 %v713
        %v1498 = vcvt.s32.f32 %v714
        %v1499 = vcvt.s32.f32 %v715
        %v1500 = vcvt.s32.f32 %v716
        %v1501 = vcvt.s32.f32 %v717
        %v1502 = vcvt.s32.f32 %v718
        %v1503 = vcvt.s32.f32 %v719
        %v1504 = vcvt.s32.f32 %v720
        %v1505 = vcvt.s32.f32 %v721
        %v1506 = vcvt.s32.f32 %v722
        %v1507 = vcvt.s32.f32 %v723
        %v1508 = vcvt.s32.f32 %v724
        %v1509 = vcvt.s32.f32 %v725
        %v1510 = vcvt.s32.f32 %v726
        %v1511 = vcvt.s32.f32 %v727
        %v1512 = vcvt.s32.f32 %v728
        %v1513 = vcvt.s32.f32 %v729
        %v1514 = vcvt.s32.f32 %v730
        %v1515 = vcvt.s32.f32 %v731
        %v1516 = vcvt.s32.f32 %v732
        %v1517 = vcvt.s32.f32 %v733
        %v1518 = vcvt.s32.f32 %v734
        %v1519 = vcvt.s32.f32 %v735
        %v1520 = vcvt.s32.f32 %v736
        %v1521 = vcvt.s32.f32 %v737
        %v1522 = vcvt.s32.f32 %v738
        %v1523 = vcvt.s32.f32 %v739
        %v1524 = vcvt.s32.f32 %v740
        %v1525 = vcvt.s32.f32 %v741
        %v1526 = vcvt.s32.f32 %v742
        %v1527 = vcvt.s32.f32 %v743
        %v1528 = vcvt.s32.f32 %v744
        %v1529 = vcvt.s32.f32 %v745
        %v1530 = vcvt.s32.f32 %v746
        %v1531 = vcvt.s32.f32 %v747
        %v1532 = vcvt.s32.f32 %v748
        %v1533 = vcvt.s32.f32 %v749
        %v1534 = vcvt.s32.f32 %v750
        %v1535 = vcvt.s32.f32 %v751
        %v1536 = vcvt.s32.f32 %v752
        %v1537 = vcvt.s32.f32 %v753
        %v1538 = vcvt.s32.f32 %v754
        %v1539 = vcvt.s32.f32 %v755
        %v1540 = vcvt.s32.f32 %v756
        %v1541 = vcvt.s32.f32 %v757
        %v1542 = vcvt.s32.f32 %v758
        %v1543 = vcvt.s32.f32 %v759
        %v1544 = vcvt.s32.f32 %v760
        %v1545 = vcvt.s32.f32 %v761
        %v1546 = vcvt.s32.f32 %v762
        %v1547 = vcvt.s32.f32 %v763
        %v1548 = vcvt.s32.f32 %v764
        %v1549 = vcvt.s32.f32 %v765
        %v1550 = vcvt.s32.f32 %v766
        %v1551 = vcvt.s32.f32 %v767
        %v1552 = vcvt.s32.f32 %v768
        %v1553 = vcvt.s32.f32 %v769
        %v1554 = vcvt.s32.f32 %v770
        %v1555 = vcvt.s32.f32 %v771
        %v1556 = vcvt.s32.f32 %v772
        %v1557 = vcvt.s32.f32 %v773
        %v1558 = vcvt.s32.f32 %v774
        %v1559 = vcvt.s32.f32 %v775
        %v1560 = vcvt.s32.f32 %v776
        %v1561 = vcvt.s32.f32 %v777
        %v1562 = vcvt.s32.f32 %v778
        %v1563 = vcvt.s32.f32 %v779
        %v1564 = vcvt.s32.f32 %v780
        %v1565 = vcvt.s32.f32 %v781
        %v1566 = vcvt.s32.f32 %v782
        %v1567 = vcvt.s32.f32 %v783
        %v1568 = vcvt.s32.f32 %v784
        %v1569 = vcvt.s32.f32 %v785
        %v1570 = vcvt.s32.f32 %v786
        %v1571 = vcvt.s32.f32 %v787
        %v1572 = vcvt.s32.f32 %v788
        %v1573 = vcvt.s32.f32 %v789
        %v1574 = vcvt.s32.f32 %v790
        %v1575 = vcvt.s32.f32 %v791
        %v1576 = vcvt.s32.f32 %v792
        %v1577 = vcvt.s32.f32 %v793
        %v1578 = vcvt.s32.f32 %v794
        %v1579 = vcvt.s32.f32 %v795
        %v1580 = vcvt.s32.f32 %v796
        %v1581 = vcvt.s32.f32 %v797
        %v1582 = vcvt.s32.f32 %v798
        %v1583 = vcvt.s32.f32 %v799
        %v1584 = vcvt.s32.f32 %v800
        %v1585 = vcvt.s32.f32 %v801
        %v1586 = vcvt.s32.f32 %v802
        %v1587 = vcvt.s32.f32 %v803
        %v1588 = vcvt.s32.f32 %v804
        %v1589 = vcvt.s32.f32 %v805
        %v1590 = vcvt.s32.f32 %v806
        %v1591 = vcvt.s32.f32 %v807
        %v1592 = vcvt.s32.f32 %v808
        %v1593 = vcvt.s32.f32 %v809
        %v1594 = vcvt.s32.f32 %v810
        %v1595 = vcvt.s32.f32 %v811
        %v1596 = vcvt.s32.f32 %v812
        %v1597 = vcvt.s32.f32 %v813
        %v1598 = vcvt.s32.f32 %v814
        %v1599 = vcvt.s32.f32 %v815
        %v1600 = vcvt.s32.f32 %v816
        %v1601 = vcvt.s32.f32 %v817
        %v1602 = vcvt.s32.f32 %v818
        %v1603 = vcvt.s32.f32 %v819
        %v1604 = vcvt.s32.f32 %v820
        %v1605 = vcvt.s32.f32 %v821
        %v1606 = vcvt.s32.f32 %v822
        %v1607 = vcvt.s32.f32 %v823
        %v1608 = vcvt.s32.f32 %v824
        %v1609 = vcvt.s32.f32 %v825
        %v1610 = vcvt.s32.f32 %v826
        %v1611 = vcvt.s32.f32 %v827
        %v1612 = vcvt.s32.f32 %v828
        %v1613 = vcvt.s32.f32 %v829
        %v1614 = vcvt.s32.f32 %v830
        %v1615 = vcvt.s32.f32 %v831
        %v1616 = vcvt.s32.f32 %v832
        %v1617 = vcvt.s32.f32 %v833
        %v1618 = vcvt.s32.f32 %v834
        %v1619 = vcvt.s32.f32 %v835
        %v1620 = vcvt.s32.f32 %v836
        %v1621 = vcvt.s32.f32 %v837
        %v1622 = vcvt.s32.f32 %v838
        %v1623 = vcvt.s32.f32 %v839
        %v1624 = vcvt.s32.f32 %v840
        %v1625 = vcvt.s32.f32 %v841
        %v1626 = vcvt.s32.f32 %v842
        %v1627 = vcvt.s32.f32 %v843
        %v1628 = vcvt.s32.f32 %v844
        %v1629 = vcvt.s32.f32 %v845
        %v1630 = vcvt.s32.f32 %v846
        %v1631 = vcvt.s32.f32 %v847
        %v1632 = vcvt.s32.f32 %v848
        %v1633 = vcvt.s32.f32 %v849
        %v1634 = vcvt.s32.f32 %v850
        %v1635 = vcvt.s32.f32 %v851
        %v1636 = vcvt.s32.f32 %v852
        %v1637 = vcvt.s32.f32 %v853
        %v1638 = vcvt.s32.f32 %v854
        %v1639 = vcvt.s32.f32 %v855
        %v1640 = vcvt.s32.f32 %v856
        %v1641 = vcvt.s32.f32 %v857
        %v1642 = vcvt.s32.f32 %v858
        %v1643 = vcvt.s32.f32 %v859
        %v1644 = vcvt.s32.f32 %v860
        %v1645 = vcvt.s32.f32 %v861
        %v1646 = vcvt.s32.f32 %v862
        %v1647 = vcvt.s32.f32 %v863
        %v1648 = vcvt.s32.f32 %v864
        %v1649 = vcvt.s32.f32 %v865
        %v1650 = vcvt.s32.f32 %v866
        %v1651 = vcvt.s32.f32 %v867
        %v1652 = vcvt.s32.f32 %v868
        %v1653 = vcvt.s32.f32 %v869
        %v1654 = vcvt.s32.f32 %v870
        %v1655 = vcvt.s32.f32 %v871
        %v1656 = vcvt.s32.f32 %v872
        %v1657 = vcvt.s32.f32 %v873
        %v1658 = vcvt.s32.f32 %v874
        %v1659 = vcvt.s32.f32 %v875
        %v1660 = vcvt.s32.f32 %v876
        %v1661 = vcvt.s32.f32 %v877
        %v1662 = vcvt.s32.f32 %v878
        %v1663 = vcvt.s32.f32 %v879
        %v1664 = vcvt.s32.f32 %v880
        %v1665 = vcvt.s32.f32 %v881
        %v1666 = vcvt.s32.f32 %v882
        %v1667 = vcvt.s32.f32 %v883
        %v1668 = vcvt.s32.f32 %v884
        %v1669 = vcvt.s32.f32 %v885
        %v1670 = vcvt.s32.f32 %v886
        %v1671 = vcvt.s32.f32 %v887
        %v1672 = vcvt.s32.f32 %v888
        %v1673 = vcvt.s32.f32 %v889
        %v1674 = vcvt.s32.f32 %v890
        %v1675 = vcvt.s32.f32 %v891
        %v1676 = vcvt.s32.f32 %v892
        %v1677 = vcvt.s32.f32 %v893
        %v1678 = vcvt.s32.f32 %v894
        %v1679 = vcvt.s32.f32 %v895
        %v1680 = vcvt.s32.f32 %v896
        %v1681 = vcvt.s32.f32 %v897
        %v1682 = vcvt.s32.f32 %v898
        %v1683 = vcvt.s32.f32 %v899
        %v1684 = vcvt.s32.f32 %v900
        %v1685 = vcvt.s32.f32 %v901
        %v1686 = vcvt.s32.f32 %v902
        %v1687 = vcvt.s32.f32 %v903
        %v1688 = vcvt.s32.f32 %v904
        %v1689 = vcvt.s32.f32 %v905
        %v1690 = vcvt.s32.f32 %v906
        %v1691 = vcvt.s32.f32 %v907
        %v1692 = vcvt.s32.f32 %v908
        %v1693 = vcvt.s32.f32 %v909
        %v1694 = vcvt.s32.f32 %v910
        %v1695 = vcvt.s32.f32 %v911
        %v1696 = vcvt.s32.f32 %v912
        %v1697 = vcvt.s32.f32 %v913
        %v1698 = vcvt.s32.f32 %v914
        %v1699 = vcvt.s32.f32 %v915
        %v1700 = vcvt.s32.f32 %v916
        %v1701 = vcvt.s32.f32 %v917
        %v1702 = vcvt.s32.f32 %v918
        %v1703 = vcvt.s32.f32 %v919
        %v1704 = vcvt.s32.f32 %v920
        %v1705 = vcvt.s32.f32 %v921
        %v1706 = vcvt.s32.f32 %v922
        %v1707 = vcvt.s32.f32 %v923
        %v1708 = vcvt.s32.f32 %v924
        %v1709 = vcvt.s32.f32 %v925
        %v1710 = vcvt.s32.f32 %v926
        %v1711 = vcvt.s32.f32 %v927
        %v1712 = vcvt.s32.f32 %v928
        %v1713 = vcvt.s32.f32 %v929
        %v1714 = vcvt.s32.f32 %v930
        %v1715 = vcvt.s32.f32 %v931
        %v1716 = vcvt.s32.f32 %v932
        %v1717 = vcvt.s32.f32 %v933
        %v1718 = vcvt.s32.f32 %v934
        %v1719 = vcvt.s32.f32 %v935
        %v1720 = vcvt.s32.f32 %v936
        %v1721 = vcvt.s32.f32 %v937
        %v1722 = vcvt.s32.f32 %v938
        %v1723 = vcvt.s32.f32 %v939
        %v1724 = vcvt.s32.f32 %v940
        %v1725 = vcvt.s32.f32 %v941
        %v1726 = vcvt.s32.f32 %v942
        %v1727 = vcvt.s32.f32 %v943
        %v1728 = vcvt.s32.f32 %v944
        %v1729 = vcvt.s32.f32 %v945
        %v1730 = vcvt.s32.f32 %v946
        %v1731 = vcvt.s32.f32 %v947
        %v1732 = vcvt.s32.f32 %v948
        %v1733 = vcvt.s32.f32 %v949
        %v1734 = vcvt.s32.f32 %v950
        %v1735 = vcvt.s32.f32 %v951
        %v1736 = vcvt.s32.f32 %v952
        %v1737 = vcvt.s32.f32 %v953
        %v1738 = vcvt.s32.f32 %v954
        %v1739 = vcvt.s32.f32 %v955
        %v1740 = vcvt.s32.f32 %v956
        %v1741 = vcvt.s32.f32 %v957
        %v1742 = vcvt.s32.f32 %v958
        %v1743 = vcvt.s32.f32 %v959
        %v1744 = vcvt.s32.f32 %v960
        %v1745 = vcvt.s32.f32 %v961
        %v1746 = vcvt.s32.f32 %v962
        %v1747 = vcvt.s32.f32 %v963
        %v1748 = vcvt.s32.f32 %v964
        %v1749 = vcvt.s32.f32 %v965
        %v1750 = vcvt.s32.f32 %v966
        %v1751 = vcvt.s32.f32 %v967
        %v1752 = vcvt.s32.f32 %v968
        %v1753 = vcvt.s32.f32 %v969
        %v1754 = vcvt.s32.f32 %v970
        %v1755 = vcvt.s32.f32 %v971
        %v1756 = vcvt.s32.f32 %v972
        %v1757 = vcvt.s32.f32 %v973
        %v1758 = vcvt.s32.f32 %v974
        %v1759 = vcvt.s32.f32 %v975
        %v1760 = vcvt.s32.f32 %v976
        %v1761 = vcvt.s32.f32 %v977
        %v1762 = vcvt.s32.f32 %v978
        %v1763 = vcvt.s32.f32 %v979
        %v1764 = vcvt.s32.f32 %v980
        %v1765 = vcvt.s32.f32 %v981
        %v1766 = vcvt.s32.f32 %v982
        %v1767 = vcvt.s32.f32 %v983
        %v1768 = vcvt.s32.f32 %v984
        %v1769 = vcvt.s32.f32 %v985
        %v1770 = vcvt.s32.f32 %v986
        %v1771 = vcvt.s32.f32 %v987
        %v1772 = vcvt.s32.f32 %v988
        %v1773 = vcvt.s32.f32 %v989
        %v1774 = vcvt.s32.f32 %v990
        %v1775 = vcvt.s32.f32 %v991
        %v1776 = vcvt.s32.f32 %v992
        %v1777 = vcvt.s32.f32 %v993
        %v1778 = vcvt.s32.f32 %v994
        %v1779 = vcvt.s32.f32 %v995
        %v1780 = vcvt.s32.f32 %v996
        %v1781 = vcvt.s32.f32 %v997
        %v1782 = vcvt.s32.f32 %v998
        %v1783 = vcvt.s32.f32 %v999
        %v1784 = vcvt.s32.f32 %v1000
        %v1785 = vcvt.s32.f32 %v1001
        %v1786 = vcvt.s32.f32 %v1002
        %v1787 = vcvt.s32.f32 %v1003
        %v1788 = vcvt.s32.f32 %v1004
        %v1789 = vcvt.s32.f32 %v1005
        %v1790 = vcvt.s32.f32 %v1006
        %v1791 = vcvt.s32.f32 %v1007
        %v1792 = vcvt.s32.f32 %v1008
        %v1793 = vcvt.s32.f32 %v1009
        %v1794 = vcvt.s32.f32 %v1010
        %v1795 = vcvt.s32.f32 %v1011
        %v1796 = vcvt.s32.f32 %v1012
        %v1797 = vcvt.s32.f32 %v1013
        %v1798 = vcvt.s32.f32 %v1014
        %v1799 = vcvt.s32.f32 %v1015
        %v1800 = vcvt.s32.f32 %v1016
        %v1801 = vcvt.s32.f32 %v1017
        %v1802 = vcvt.s32.f32 %v1018
        %v1803 = vcvt.s32.f32 %v1019
        %v1804 = vcvt.s32.f32 %v1020
        %v1805 = vcvt.s32.f32 %v1021
        %v1806 = vcvt.s32.f32 %v1022
        %v1807 = vcvt.s32.f32 %v1023
        %v1808 = vcvt.s32.f32 %v1024
        %v1809 = vcvt.s32.f32 %v1025
        %v1810 = vcvt.s32.f32 %v1026
        %v1811 = vcvt.s32.f32 %v1027
        %v1812 = vcvt.s32.f32 %v1028
        %v1813 = vcvt.s32.f32 %v1029
        %v1814 = vcvt.s32.f32 %v1030
        %v1815 = vcvt.s32.f32 %v1031
        %v1816 = vcvt.s32.f32 %v1032
        %v1817 = vcvt.s32.f32 %v1033
        %v1818 = vcvt.s32.f32 %v1034
        %v1819 = vcvt.s32.f32 %v1035
        %v1820 = vcvt.s32.f32 %v1036
        %v1821 = vcvt.s32.f32 %v1037
        %v1822 = vcvt.s32.f32 %v1038
        %v1823 = vcvt.s32.f32 %v1039
        %v1824 = vcvt.s32.f32 %v1040
        %v1825 = vcvt.s32.f32 %v1041
        %v1826 = vcvt.s32.f32 %v1042
        %v1827 = vcvt.s32.f32 %v1043
        %v1828 = vcvt.s32.f32 %v1044
        %v1829 = vcvt.s32.f32 %v1045
        %v1830 = vcvt.s32.f32 %v1046
        %v1831 = vcvt.s32.f32 %v1047
        %v1832 = vcvt.s32.f32 %v1048
        %v1833 = vcvt.s32.f32 %v1049
        %v1834 = vcvt.s32.f32 %v1050
        %v1835 = vcvt.s32.f32 %v1051
        %v1836 = vcvt.s32.f32 %v1052
        %v1837 = vcvt.s32.f32 %v1053
        %v1838 = vcvt.s32.f32 %v1054
        %v1839 = vcvt.s32.f32 %v1055
        %v1840 = vcvt.s32.f32 %v1056
        %v1841 = vcvt.s32.f32 %v1057
        %v1842 = vcvt.s32.f32 %v1058
        %v1843 = vcvt.s32.f32 %v1059
        %v1844 = vcvt.s32.f32 %v1060
        %v1845 = vcvt.s32.f32 %v1061
        %v1846 = vcvt.s32.f32 %v1062
        %v1847 = vcvt.s32.f32 %v1063
        %v1848 = vcvt.s32.f32 %v1064
        %v1849 = vcvt.s32.f32 %v1065
        %v1850 = vcvt.s32.f32 %v1066
        %v1851 = vcvt.s32.f32 %v1067
        %v1852 = vcvt.s32.f32 %v1068
        %v1853 = vcvt.s32.f32 %v1069
        %v1854 = vcvt.s32.f32 %v1070
        %v1855 = vcvt.s32.f32 %v1071
        %v1856 = vcvt.s32.f32 %v1072
        %v1857 = vcvt.s32.f32 %v1073
        %v1858 = vcvt.s32.f32 %v1074
        %v1859 = vcvt.s32.f32 %v1075
        %v1860 = vcvt.s32.f32 %v1076
        %v1861 = vcvt.s32.f32 %v1077
        %v1862 = vcvt.s32.f32 %v1078
        %v1863 = vcvt.s32.f32 %v1079
        %v1864 = vcvt.s32.f32 %v1080
        %v1865 = vcvt.s32.f32 %v1081
        %v1866 = vcvt.s32.f32 %v1082
        %v1867 = vcvt.s32.f32 %v1083
        %v1868 = vcvt.s32.f32 %v1084
        %v1869 = vcvt.s32.f32 %v1085
        %v1870 = vcvt.s32.f32 %v1086
        %v1871 = vcvt.s32.f32 %v1087
        %v1872 = vcvt.s32.f32 %v1088
        %v1873 = vcvt.s32.f32 %v1089
        %v1874 = vcvt.s32.f32 %v1090
        %v1875 = vcvt.s32.f32 %v1091
        %v1876 = vcvt.s32.f32 %v1092
        %v1877 = vcvt.s32.f32 %v1093
        %v1878 = vcvt.s32.f32 %v1094
        %v1879 = vcvt.s32.f32 %v1095
        %v1880 = vcvt.s32.f32 %v1096
        %v1881 = vcvt.s32.f32 %v1097
        %v1882 = vcvt.s32.f32 %v1098
        %v1883 = vcvt.s32.f32 %v1099
        %v1884 = vcvt.s32.f32 %v1100
        %v1885 = vcvt.s32.f32 %v1101
        %v1886 = vcvt.s32.f32 %v1102
        %v1887 = vcvt.s32.f32 %v1103
        %v1888 = vcvt.s32.f32 %v1104
        %v1889 = vcvt.s32.f32 %v1105
        %v1890 = vcvt.s32.f32 %v1106
        %v1891 = vcvt.s32.f32 %v1107
        %v1892 = vcvt.s32.f32 %v1108
        %v1893 = vcvt.s32.f32 %v1109
        %v1894 = vcvt.s32.f32 %v1110
        %v1895 = vcvt.s32.f32 %v1111
        %v1896 = vcvt.s32.f32 %v1112
        %v1897 = vcvt.s32.f32 %v1113
        %v1898 = vcvt.s32.f32 %v1114
        %v1899 = vcvt.s32.f32 %v1115
        %v1900 = vcvt.s32.f32 %v1116
        %v1901 = vcvt.s32.f32 %v1117
        %v1902 = vcvt.s32.f32 %v1118
        %v1903 = vcvt.s32.f32 %v1119
        %v1904 = vcvt.s32.f32 %v1120
        %v1905 = vcvt.s32.f32 %v1121
        %v1906 = vcvt.s32.f32 %v1122
        %v1907 = vcvt.s32.f32 %v1123
        %v1908 = vcvt.s32.f32 %v1124
        %v1909 = vcvt.s32.f32 %v1125
        %v1910 = vcvt.s32.f32 %v1126
        %v1911 = vcvt.s32.f32 %v1127
        %v1912 = vcvt.s32.f32 %v1128
        %v1913 = vcvt.s32.f32 %v1129
        %v1914 = vcvt.s32.f32 %v1130
        %v1915 = vcvt.s32.f32 %v1131
        %v1916 = vcvt.s32.f32 %v1132
        %v1917 = vcvt.s32.f32 %v1133
        %v1918 = vcvt.s32.f32 %v1134
        %v1919 = vcvt.s32.f32 %v1135
        %v1920 = vcvt.s32.f32 %v1136
        %v1921 = vcvt.s32.f32 %v1137
        %v1922 = vcvt.s32.f32 %v1138
        %v1923 = vcvt.s32.f32 %v1139
        %v1924 = vcvt.s32.f32 %v1140
        %v1925 = vcvt.s32.f32 %v1141
        %v1926 = vcvt.s32.f32 %v1142
        %v1927 = vcvt.s32.f32 %v1143
        %v1928 = vcvt.s32.f32 %v1144
        %v1929 = vcvt.s32.f32 %v1145
        %v1930 = vcvt.s32.f32 %v1146
        %v1931 = vcvt.s32.f32 %v1147
        %v1932 = vcvt.s32.f32 %v1148
        %v1933 = vcvt.s32.f32 %v1149
        %v1934 = vcvt.s32.f32 %v1150
        %v1935 = vcvt.s32.f32 %v1151
        %v1936 = vcvt.s32.f32 %v1152
        %v1937 = vcvt.s32.f32 %v1153
        %v1938 = vcvt.s32.f32 %v1154
        %v1939 = vcvt.s32.f32 %v1155
        %v1940 = vcvt.s32.f32 %v1156
        %v1941 = vcvt.s32.f32 %v1157
        %v1942 = vcvt.s32.f32 %v1158
        %v1943 = vcvt.s32.f32 %v1159
        %v1944 = vcvt.s32.f32 %v1160
        %v1945 = vcvt.s32.f32 %v1161
        %v1946 = vcvt.s32.f32 %v1162
        %v1947 = vcvt.s32.f32 %v1163
        %v1948 = vcvt.s32.f32 %v1164
        %v1949 = vcvt.s32.f32 %v1165
        %v1950 = vcvt.s32.f32 %v1166
        %v1951 = vcvt.s32.f32 %v1167
        %v1952 = vcvt.s32.f32 %v1168
        %v1953 = vcvt.s32.f32 %v1169
        %v1954 = vcvt.s32.f32 %v1170
        %v1955 = vcvt.s32.f32 %v1171
        %v1956 = vcvt.s32.f32 %v1172
        %v1957 = vcvt.s32.f32 %v1173
        %v1958 = vcvt.s32.f32 %v1174
        %v1959 = vcvt.s32.f32 %v1175
        %v1960 = vcvt.s32.f32 %v1176
        %v1961 = vcvt.s32.f32 %v1177
        %v1962 = vcvt.s32.f32 %v1178
        %v1963 = vcvt.s32.f32 %v1179
        %v1964 = vcvt.s32.f32 %v1180
        %v1965 = vcvt.s32.f32 %v1181
        %v1966 = vcvt.s32.f32 %v1182
        %v1967 = vcvt.s32.f32 %v1183
        %v1968 = vcvt.s32.f32 %v1184
        %v1969 = vcvt.s32.f32 %v1185
        %v1970 = vcvt.s32.f32 %v1186
        %v1971 = vcvt.s32.f32 %v1187
        %v1972 = vcvt.s32.f32 %v1188
        %v1973 = vcvt.s32.f32 %v1189
        %v1974 = vcvt.s32.f32 %v1190
        %v1975 = vcvt.s32.f32 %v1191
        %v1976 = vcvt.s32.f32 %v1192
        %v1977 = vcvt.s32.f32 %v1193
        %v1978 = vcvt.s32.f32 %v1194
        %v1979 = vcvt.s32.f32 %v1195
        %v1980 = vcvt.s32.f32 %v1196
        %v1981 = vcvt.s32.f32 %v1197
        %v1982 = vcvt.s32.f32 %v1198
        %v1983 = vcvt.s32.f32 %v1199
        %v1984 = vcvt.s32.f32 %v1200
        %v1985 = vcvt.s32.f32 %v1201
        %v1986 = vcvt.s32.f32 %v1202
        %v1987 = vcvt.s32.f32 %v1203
        %v1988 = vcvt.s32.f32 %v1204
        %v1989 = vcvt.s32.f32 %v1205
        %v1990 = vcvt.s32.f32 %v1206
        %v1991 = vcvt.s32.f32 %v1207
        %v1992 = vcvt.s32.f32 %v1208
        %v1993 = vcvt.s32.f32 %v1209
        %v1994 = vcvt.s32.f32 %v1210
        %v1995 = vcvt.s32.f32 %v1211
        %v1996 = vcvt.s32.f32 %v1212
        %v1997 = vcvt.s32.f32 %v1213
        %v1998 = vcvt.s32.f32 %v1214
        %v1999 = vcvt.s32.f32 %v1215
        %v2000 = vcvt.s32.f32 %v1216
        %v2001 = vcvt.s32.f32 %v1217
        %v2002 = vcvt.s32.f32 %v1218
        %v2003 = vcvt.s32.f32 %v1219
        %v2004 = vcvt.s32.f32 %v1220
        %v2005 = vcvt.s32.f32 %v1221
        %v2006 = vcvt.s32.f32 %v1222
        %v2007 = vcvt.s32.f32 %v1223
        %v2008 = vcvt.s32.f32 %v1224
        %v2009 = vcvt.s32.f32 %v1225
        %v2010 = vcvt.s32.f32 %v1226
        %v2011 = vcvt.s32.f32 %v1227
        %v2012 = vcvt.s32.f32 %v1228
        %v2013 = vcvt.s32.f32 %v1229
        %v2014 = vcvt.s32.f32 %v1230
        %v2015 = vcvt.s32.f32 %v1231
        %v2016 = vcvt.s32.f32 %v1232
        %v2017 = vcvt.s32.f32 %v1233
        %v2018 = vcvt.s32.f32 %v1234
        %v2019 = vcvt.s32.f32 %v1235
        %v2020 = vcvt.s32.f32 %v1236
        %v2021 = vcvt.s32.f32 %v1237
        %v2022 = vcvt.s32.f32 %v1238
        %v2023 = vcvt.s32.f32 %v1239
        %v2024 = vcvt.s32.f32 %v1240
        %v2025 = vcvt.s32.f32 %v1241
        %v2026 = vcvt.s32.f32 %v1242
        %v2027 = vcvt.s32.f32 %v1243
        %v2028 = vcvt.s32.f32 %v1244
        %v2029 = vcvt.s32.f32 %v1245
        %v2030 = vcvt.s32.f32 %v1246
        %v2031 = vcvt.s32.f32 %v1247
        %v2032 = vcvt.s32.f32 %v1248
        %v2033 = vcvt.s32.f32 %v1249
        %v2034 = vcvt.s32.f32 %v1250
        %v2035 = vcvt.s32.f32 %v1251
        %v2036 = vcvt.s32.f32 %v1252
        %v2037 = vcvt.s32.f32 %v1253
        %v2038 = vcvt.s32.f32 %v1254
        %v2039 = vcvt.s32.f32 %v1255
        %v2040 = vcvt.s32.f32 %v1256
        %v2041 = vcvt.s32.f32 %v1257
        %v2042 = vcvt.s32.f32 %v1258
        %v2043 = vcvt.s32.f32 %v1259
        %v2044 = vcvt.s32.f32 %v1260
        %v2045 = vcvt.s32.f32 %v1261
        %v2046 = vcvt.s32.f32 %v1262
        %v2047 = vcvt.s32.f32 %v1263
        %v2048 = vcvt.s32.f32 %v1264
        %v2049 = vcvt.s32.f32 %v1265
        %v2050 = vcvt.s32.f32 %v1266
        %v2051 = vcvt.s32.f32 %v1267
        %v2052 = vcvt.s32.f32 %v1268
        %v2053 = vcvt.s32.f32 %v1269
        %v2054 = vcvt.s32.f32 %v1270
        %v2055 = vcvt.s32.f32 %v1271
        %v2056 = vcvt.s32.f32 %v1272
        %v2057 = vcvt.s32.f32 %v1273
        %v2058 = vcvt.s32.f32 %v1274
        %v2059 = vcvt.s32.f32 %v1275
        %v2060 = vcvt.s32.f32 %v1276
        %v2061 = vcvt.s32.f32 %v1277
        %v2062 = vcvt.s32.f32 %v1278
        %v2063 = vcvt.s32.f32 %v1279
        %v2064 = vcvt.s32.f32 %v1280
        %v2065 = vcvt.s32.f32 %v1281
        %v2066 = vcvt.s32.f32 %v1282
        %v2067 = vcvt.s32.f32 %v1283
        %v2068 = vcvt.s32.f32 %v1284
        %v2069 = vcvt.s32.f32 %v1285
        %v2070 = vcvt.s32.f32 %v1286
        %v2071 = vcvt.s32.f32 %v1287
        %v2072 = vcvt.s32.f32 %v1288
        %v2073 = vcvt.s32.f32 %v1289
        %v2074 = vcvt.s32.f32 %v1290
        %v2075 = vcvt.s32.f32 %v1291
        %v2076 = vcvt.s32.f32 %v1292
        %v2077 = vcvt.s32.f32 %v1293
        %v2078 = vcvt.s32.f32 %v1294
        %v2079 = vcvt.s32.f32 %v1295
        %v2080 = vcvt.s32.f32 %v1296
        %v2081 = vcvt.s32.f32 %v1297
        %v2082 = vcvt.s32.f32 %v1298
        %v2083 = vcvt.s32.f32 %v1299
        %v2084 = vcvt.s32.f32 %v1300
        %v2085 = vcvt.s32.f32 %v1301
        %v2086 = vcvt.s32.f32 %v1302
        %v2087 = vcvt.s32.f32 %v1303
        %v2088 = vcvt.s32.f32 %v1304
        %v2089 = vcvt.s32.f32 %v1305
        %v2090 = vcvt.s32.f32 %v1306
        %v2091 = vcvt.s32.f32 %v1307
        %v2092 = vcvt.s32.f32 %v1308
        %v2093 = vcvt.s32.f32 %v1309
        %v2094 = vcvt.s32.f32 %v1310
        %v2095 = vcvt.s32.f32 %v1311
        %v2096 = vcvt.s32.f32 %v1312
        %v2097 = vcvt.s32.f32 %v1313
        %v2098 = vcvt.s32.f32 %v1314
        %v2099 = vcvt.s32.f32 %v1315
        %v2100 = vcvt.s32.f32 %v1316
        %v2101 = vcvt.s32.f32 %v1317
        %v2102 = vcvt.s32.f32 %v1318
        %v2103 = vcvt.s32.f32 %v1319
        %v2104 = vcvt.s32.f32 %v1320
        %v2105 = vcvt.s32.f32 %v1321
        %v2106 = vcvt.s32.f32 %v1322
        %v2107 = vcvt.s32.f32 %v1323
        %v2108 = vcvt.s32.f32 %v1324
        %v2109 = vcvt.s32.f32 %v1325
        %v2110 = vcvt.s32.f32 %v1326
        %v2111 = vcvt.s32.f32 %v1327
        %v2112 = vcvt.s32.f32 %v1328
        %v2113 = vcvt.s32.f32 %v1329
        %v2114 = vcvt.s32.f32 %v1330
        %v2115 = vcvt.s32.f32 %v1331
        %v2116 = vcvt.s32.f32 %v1332
        %v2117 = vcvt.s32.f32 %v1333
        %v2118 = vcvt.s32.f32 %v1334
        %v2119 = vcvt.s32.f32 %v1335
        %v2120 = vcvt.s32.f32 %v1336
        %v2121 = vcvt.s32.f32 %v1337
        %v2122 = vcvt.s32.f32 %v1338
        %v2123 = vcvt.s32.f32 %v1339
        %v2124 = vcvt.s32.f32 %v1340
        %v2125 = vcvt.s32.f32 %v1341
        %v2126 = vcvt.s32.f32 %v1342
        %v2127 = vcvt.s32.f32 %v1343
        %v2128 = vcvt.s32.f32 %v1344
        %v2129 = vcvt.s32.f32 %v1345
        %v2130 = vcvt.s32.f32 %v1346
        %v2131 = vcvt.s32.f32 %v1347
        %v2132 = vcvt.s32.f32 %v1348
        %v2133 = vcvt.s32.f32 %v1349
        %v2134 = vcvt.s32.f32 %v1350
        %v2135 = vcvt.s32.f32 %v1351
        %v2136 = vcvt.s32.f32 %v1352
        %v2137 = vcvt.s32.f32 %v1353
        %v2138 = vcvt.s32.f32 %v1354
        %v2139 = vcvt.s32.f32 %v1355
        %v2140 = vcvt.s32.f32 %v1356
        %v2141 = vcvt.s32.f32 %v1357
        %v2142 = vcvt.s32.f32 %v1358
        %v2143 = vcvt.s32.f32 %v1359
        %v2144 = vcvt.s32.f32 %v1360
        %v2145 = vcvt.s32.f32 %v1361
        %v2146 = vcvt.s32.f32 %v1362
        %v2147 = vcvt.s32.f32 %v1363
        %v2148 = vcvt.s32.f32 %v1364
        %v2149 = vcvt.s32.f32 %v1365
        %v2150 = vcvt.s32.f32 %v1366
        %v2151 = vcvt.s32.f32 %v1367
        %v2152 = vcvt.s32.f32 %v1368
        %v2153 = vcvt.s32.f32 %v1369
        %v2154 = vcvt.s32.f32 %v1370
        %v2155 = vcvt.s32.f32 %v1371
        %v2156 = vcvt.s32.f32 %v1372
        %v2157 = vcvt.s32.f32 %v1373
        %v2158 = vcvt.s32.f32 %v1374
        %v2159 = vcvt.s32.f32 %v1375
        %v2160 = vcvt.s32.f32 %v1376
        %v2161 = vcvt.s32.f32 %v1377
        %v2162 = vcvt.s32.f32 %v1378
        %v2163 = vcvt.s32.f32 %v1379
        %v2164 = vcvt.s32.f32 %v1380
        %v2165 = vcvt.s32.f32 %v1381
        %v2166 = vcvt.s32.f32 %v1382
        %v2167 = vcvt.s32.f32 %v1383
        %v2168 = vcvt.s32.f32 %v1384
        %v2169 = vcvt.s32.f32 %v1385
        %v2170 = vcvt.s32.f32 %v1386
        %v2171 = vcvt.s32.f32 %v1387
        %v2172 = vcvt.s32.f32 %v1388
        %v2173 = vcvt.s32.f32 %v1389
        %v2174 = vcvt.s32.f32 %v1390
        %v2175 = vcvt.s32.f32 %v1391
        %v2176 = vcvt.s32.f32 %v1392
        %v2177 = vcvt.s32.f32 %v1393
        %v2178 = vcvt.s32.f32 %v1394
        %v2179 = vcvt.s32.f32 %v1395
        %v2180 = vcvt.s32.f32 %v1396
        %v2181 = vcvt.s32.f32 %v1397
        %v2182 = vcvt.s32.f32 %v1398
        %v2183 = vcvt.s32.f32 %v1399
        %v2184 = vcvt.s32.f32 %v1400
        %v2185 = vcvt.s32.f32 %v1401
        %v2186 = vcvt.s32.f32 %v1402
        %v2187 = vcvt.s32.f32 %v1403
        %v2188 = vcvt.s32.f32 %v1404
        %v2189 = vcvt.s32.f32 %v1405
        %v2190 = vcvt.s32.f32 %v1406
        %v2191 = vcvt.s32.f32 %v1407
        %v2192 = vcvt.s32.f32 %v1408
        %v2193 = vcvt.s32.f32 %v1409
        %v2194 = vcvt.s32.f32 %v1410
        %v2195 = vcvt.s32.f32 %v1411
        %v2196 = vcvt.s32.f32 %v1412
        %v2197 = vcvt.s32.f32 %v1413
        %v2198 = vcvt.s32.f32 %v1414
        %v2199 = vcvt.s32.f32 %v1415
        %v2200 = vcvt.s32.f32 %v1416
        %v2201 = vcvt.s32.f32 %v1417
        %v2202 = vcvt.s32.f32 %v1418
        %v2203 = vcvt.s32.f32 %v1419
        %v2204 = vcvt.s32.f32 %v1420
        %v2205 = vcvt.s32.f32 %v1421
        %v2206 = vcvt.s32.f32 %v1422
        %v2207 = vcvt.s32.f32 %v1423
        %v2208 = vcvt.s32.f32 %v1424
        %v2209 = vcvt.s32.f32 %v1425
        %v2210 = vcvt.s32.f32 %v1426
        %v2211 = vcvt.s32.f32 %v1427
        %v2212 = vcvt.s32.f32 %v1428
        %v2213 = vcvt.s32.f32 %v1429
        %v2214 = vcvt.s32.f32 %v1430
        %v2215 = vcvt.s32.f32 %v1431
        %v2216 = vcvt.s32.f32 %v1432
        %v2217 = vcvt.s32.f32 %v1433
        %v2218 = vcvt.s32.f32 %v1434
        %v2219 = vcvt.s32.f32 %v1435
        %v2220 = vcvt.s32.f32 %v1436
        %v2221 = vcvt.s32.f32 %v1437
        %v2222 = vcvt.s32.f32 %v1438
        %v2223 = vcvt.s32.f32 %v1439
        %v2224 = vcvt.s32.f32 %v1440
        %v2225 = vcvt.s32.f32 %v1441
        %v2226 = vcvt.s32.f32 %v1442
        %v2227 = vcvt.s32.f32 %v1443
        %v2228 = vcvt.s32.f32 %v1444
        %v2229 = vcvt.s32.f32 %v1445
        %v2230 = vcvt.s32.f32 %v1446
        %v2231 = vcvt.s32.f32 %v1447
        %v2232 = vcvt.s32.f32 %v1448
        %v2233 = vcvt.s32.f32 %v1449
        %v2234 = vcvt.s32.f32 %v1450
        %v2235 = vcvt.s32.f32 %v1451
        %v2236 = vcvt.s32.f32 %v1452
        %v2237 = vcvt.s32.f32 %v1453
        %v2238 = vcvt.s32.f32 %v1454
        %v2239 = vpack.c.bf16 %v1456, %v1455
        %v2240 = vpack.c.bf16 %v1458, %v1457
        %v2241 = vpack.c.bf16 %v1460, %v1459
        %v2242 = vpack.c.bf16 %v1462, %v1461
        %v2243 = vpack.c.bf16 %v1464, %v1463
        %v2244 = vpack.c.bf16 %v1466, %v1465
        %v2245 = vpack.c.bf16 %v1468, %v1467
        %v2246 = vpack.c.bf16 %v1470, %v1469
        %v2247 = vpack.c.bf16 %v1472, %v1471
        %v2248 = vpack.c.bf16 %v1474, %v1473
        %v2249 = vpack.c.bf16 %v1476, %v1475
        %v2250 = vpack.c.bf16 %v1478, %v1477
        %v2251 = vpack.c.bf16 %v1480, %v1479
        %v2252 = vpack.c.bf16 %v1482, %v1481
        %v2253 = vpack.c.bf16 %v1484, %v1483
        %v2254 = vpack.c.bf16 %v1486, %v1485
        %v2255 = vpack.c.bf16 %v1488, %v1487
        %v2256 = vpack.c.bf16 %v1490, %v1489
        %v2257 = vpack.c.bf16 %v1492, %v1491
        %v2258 = vpack.c.bf16 %v1494, %v1493
        %v2259 = vpack.c.bf16 %v1496, %v1495
        %v2260 = vpack.c.bf16 %v1498, %v1497
        %v2261 = vpack.c.bf16 %v1500, %v1499
        %v2262 = vpack.c.bf16 %v1502, %v1501
        %v2263 = vpack.c.bf16 %v1504, %v1503
        %v2264 = vpack.c.bf16 %v1506, %v1505
        %v2265 = vpack.c.bf16 %v1508, %v1507
        %v2266 = vpack.c.bf16 %v1510, %v1509
        %v2267 = vpack.c.bf16 %v1512, %v1511
        %v2268 = vpack.c.bf16 %v1514, %v1513
        %v2269 = vpack.c.bf16 %v1516, %v1515
        %v2270 = vpack.c.bf16 %v1518, %v1517
        %v2271 = vpack.c.bf16 %v1520, %v1519
        %v2272 = vpack.c.bf16 %v1522, %v1521
        %v2273 = vpack.c.bf16 %v1524, %v1523
        %v2274 = vpack.c.bf16 %v1526, %v1525
        %v2275 = vpack.c.bf16 %v1528, %v1527
        %v2276 = vpack.c.bf16 %v1530, %v1529
        %v2277 = vpack.c.bf16 %v1532, %v1531
        %v2278 = vpack.c.bf16 %v1534, %v1533
        %v2279 = vpack.c.bf16 %v1536, %v1535
        %v2280 = vpack.c.bf16 %v1538, %v1537
        %v2281 = vpack.c.bf16 %v1540, %v1539
        %v2282 = vpack.c.bf16 %v1542, %v1541
        %v2283 = vpack.c.bf16 %v1544, %v1543
        %v2284 = vpack.c.bf16 %v1546, %v1545
        %v2285 = vpack.c.bf16 %v1548, %v1547
        %v2286 = vpack.c.bf16 %v1550, %v1549
        %v2287 = vpack.c.bf16 %v1552, %v1551
        %v2288 = vpack.c.bf16 %v1554, %v1553
        %v2289 = vpack.c.bf16 %v1556, %v1555
        %v2290 = vpack.c.bf16 %v1558, %v1557
        %v2291 = vpack.c.bf16 %v1560, %v1559
        %v2292 = vpack.c.bf16 %v1562, %v1561
        %v2293 = vpack.c.bf16 %v1564, %v1563
        %v2294 = vpack.c.bf16 %v1566, %v1565
        %v2295 = vpack.c.bf16 %v1568, %v1567
        %v2296 = vpack.c.bf16 %v1570, %v1569
        %v2297 = vpack.c.bf16 %v1572, %v1571
        %v2298 = vpack.c.bf16 %v1574, %v1573
        %v2299 = vpack.c.bf16 %v1576, %v1575
        %v2300 = vpack.c.bf16 %v1578, %v1577
        %v2301 = vpack.c.bf16 %v1580, %v1579
        %v2302 = vpack.c.bf16 %v1582, %v1581
        %v2303 = vpack.c.bf16 %v1584, %v1583
        %v2304 = vpack.c.bf16 %v1586, %v1585
        %v2305 = vpack.c.bf16 %v1588, %v1587
        %v2306 = vpack.c.bf16 %v1590, %v1589
        %v2307 = vpack.c.bf16 %v1592, %v1591
        %v2308 = vpack.c.bf16 %v1594, %v1593
        %v2309 = vpack.c.bf16 %v1596, %v1595
        %v2310 = vpack.c.bf16 %v1598, %v1597
        %v2311 = vpack.c.bf16 %v1600, %v1599
        %v2312 = vpack.c.bf16 %v1602, %v1601
        %v2313 = vpack.c.bf16 %v1604, %v1603
        %v2314 = vpack.c.bf16 %v1606, %v1605
        %v2315 = vpack.c.bf16 %v1608, %v1607
        %v2316 = vpack.c.bf16 %v1610, %v1609
        %v2317 = vpack.c.bf16 %v1612, %v1611
        %v2318 = vpack.c.bf16 %v1614, %v1613
        %v2319 = vpack.c.bf16 %v1616, %v1615
        %v2320 = vpack.c.bf16 %v1618, %v1617
        %v2321 = vpack.c.bf16 %v1620, %v1619
        %v2322 = vpack.c.bf16 %v1622, %v1621
        %v2323 = vpack.c.bf16 %v1624, %v1623
        %v2324 = vpack.c.bf16 %v1626, %v1625
        %v2325 = vpack.c.bf16 %v1628, %v1627
        %v2326 = vpack.c.bf16 %v1630, %v1629
        %v2327 = vpack.c.bf16 %v1632, %v1631
        %v2328 = vpack.c.bf16 %v1634, %v1633
        %v2329 = vpack.c.bf16 %v1636, %v1635
        %v2330 = vpack.c.bf16 %v1638, %v1637
        %v2331 = vpack.c.bf16 %v1640, %v1639
        %v2332 = vpack.c.bf16 %v1642, %v1641
        %v2333 = vpack.c.bf16 %v1644, %v1643
        %v2334 = vpack.c.bf16 %v1646, %v1645
        %v2335 = vpack.c.bf16 %v1648, %v1647
        %v2336 = vpack.c.bf16 %v1650, %v1649
        %v2337 = vpack.c.bf16 %v1652, %v1651
        %v2338 = vpack.c.bf16 %v1654, %v1653
        %v2339 = vpack.c.bf16 %v1656, %v1655
        %v2340 = vpack.c.bf16 %v1658, %v1657
        %v2341 = vpack.c.bf16 %v1660, %v1659
        %v2342 = vpack.c.bf16 %v1662, %v1661
        %v2343 = vpack.c.bf16 %v1664, %v1663
        %v2344 = vpack.c.bf16 %v1666, %v1665
        %v2345 = vpack.c.bf16 %v1668, %v1667
        %v2346 = vpack.c.bf16 %v1670, %v1669
        %v2347 = vpack.c.bf16 %v1672, %v1671
        %v2348 = vpack.c.bf16 %v1674, %v1673
        %v2349 = vpack.c.bf16 %v1676, %v1675
        %v2350 = vpack.c.bf16 %v1678, %v1677
        %v2351 = vpack.c.bf16 %v1680, %v1679
        %v2352 = vpack.c.bf16 %v1682, %v1681
        %v2353 = vpack.c.bf16 %v1684, %v1683
        %v2354 = vpack.c.bf16 %v1686, %v1685
        %v2355 = vpack.c.bf16 %v1688, %v1687
        %v2356 = vpack.c.bf16 %v1690, %v1689
        %v2357 = vpack.c.bf16 %v1692, %v1691
        %v2358 = vpack.c.bf16 %v1694, %v1693
        %v2359 = vpack.c.bf16 %v1696, %v1695
        %v2360 = vpack.c.bf16 %v1698, %v1697
        %v2361 = vpack.c.bf16 %v1700, %v1699
        %v2362 = vpack.c.bf16 %v1702, %v1701
        %v2363 = vpack.c.bf16 %v1704, %v1703
        %v2364 = vpack.c.bf16 %v1706, %v1705
        %v2365 = vpack.c.bf16 %v1708, %v1707
        %v2366 = vpack.c.bf16 %v1710, %v1709
        %v2367 = vpack.c.bf16 %v1712, %v1711
        %v2368 = vpack.c.bf16 %v1714, %v1713
        %v2369 = vpack.c.bf16 %v1716, %v1715
        %v2370 = vpack.c.bf16 %v1718, %v1717
        %v2371 = vpack.c.bf16 %v1720, %v1719
        %v2372 = vpack.c.bf16 %v1722, %v1721
        %v2373 = vpack.c.bf16 %v1724, %v1723
        %v2374 = vpack.c.bf16 %v1726, %v1725
        %v2375 = vpack.c.bf16 %v1728, %v1727
        %v2376 = vpack.c.bf16 %v1730, %v1729
        %v2377 = vpack.c.bf16 %v1732, %v1731
        %v2378 = vpack.c.bf16 %v1734, %v1733
        %v2379 = vpack.c.bf16 %v1736, %v1735
        %v2380 = vpack.c.bf16 %v1738, %v1737
        %v2381 = vpack.c.bf16 %v1740, %v1739
        %v2382 = vpack.c.bf16 %v1742, %v1741
        %v2383 = vpack.c.bf16 %v1744, %v1743
        %v2384 = vpack.c.bf16 %v1746, %v1745
        %v2385 = vpack.c.bf16 %v1748, %v1747
        %v2386 = vpack.c.bf16 %v1750, %v1749
        %v2387 = vpack.c.bf16 %v1752, %v1751
        %v2388 = vpack.c.bf16 %v1754, %v1753
        %v2389 = vpack.c.bf16 %v1756, %v1755
        %v2390 = vpack.c.bf16 %v1758, %v1757
        %v2391 = vpack.c.bf16 %v1760, %v1759
        %v2392 = vpack.c.bf16 %v1762, %v1761
        %v2393 = vpack.c.bf16 %v1764, %v1763
        %v2394 = vpack.c.bf16 %v1766, %v1765
        %v2395 = vpack.c.bf16 %v1768, %v1767
        %v2396 = vpack.c.bf16 %v1770, %v1769
        %v2397 = vpack.c.bf16 %v1772, %v1771
        %v2398 = vpack.c.bf16 %v1774, %v1773
        %v2399 = vpack.c.bf16 %v1776, %v1775
        %v2400 = vpack.c.bf16 %v1778, %v1777
        %v2401 = vpack.c.bf16 %v1780, %v1779
        %v2402 = vpack.c.bf16 %v1782, %v1781
        %v2403 = vpack.c.bf16 %v1784, %v1783
        %v2404 = vpack.c.bf16 %v1786, %v1785
        %v2405 = vpack.c.bf16 %v1788, %v1787
        %v2406 = vpack.c.bf16 %v1790, %v1789
        %v2407 = vpack.c.bf16 %v1792, %v1791
        %v2408 = vpack.c.bf16 %v1794, %v1793
        %v2409 = vpack.c.bf16 %v1796, %v1795
        %v2410 = vpack.c.bf16 %v1798, %v1797
        %v2411 = vpack.c.bf16 %v1800, %v1799
        %v2412 = vpack.c.bf16 %v1802, %v1801
        %v2413 = vpack.c.bf16 %v1804, %v1803
        %v2414 = vpack.c.bf16 %v1806, %v1805
        %v2415 = vpack.c.bf16 %v1808, %v1807
        %v2416 = vpack.c.bf16 %v1810, %v1809
        %v2417 = vpack.c.bf16 %v1812, %v1811
        %v2418 = vpack.c.bf16 %v1814, %v1813
        %v2419 = vpack.c.bf16 %v1816, %v1815
        %v2420 = vpack.c.bf16 %v1818, %v1817
        %v2421 = vpack.c.bf16 %v1820, %v1819
        %v2422 = vpack.c.bf16 %v1822, %v1821
        %v2423 = vpack.c.bf16 %v1824, %v1823
        %v2424 = vpack.c.bf16 %v1826, %v1825
        %v2425 = vpack.c.bf16 %v1828, %v1827
        %v2426 = vpack.c.bf16 %v1830, %v1829
        %v2427 = vpack.c.bf16 %v1832, %v1831
        %v2428 = vpack.c.bf16 %v1834, %v1833
        %v2429 = vpack.c.bf16 %v1836, %v1835
        %v2430 = vpack.c.bf16 %v1838, %v1837
        %v2431 = vpack.c.bf16 %v1840, %v1839
        %v2432 = vpack.c.bf16 %v1842, %v1841
        %v2433 = vpack.c.bf16 %v1844, %v1843
        %v2434 = vpack.c.bf16 %v1846, %v1845
        %v2435 = vpack.c.bf16 %v1848, %v1847
        %v2436 = vpack.c.bf16 %v1850, %v1849
        %v2437 = vpack.c.bf16 %v1852, %v1851
        %v2438 = vpack.c.bf16 %v1854, %v1853
        %v2439 = vpack.c.bf16 %v1856, %v1855
        %v2440 = vpack.c.bf16 %v1858, %v1857
        %v2441 = vpack.c.bf16 %v1860, %v1859
        %v2442 = vpack.c.bf16 %v1862, %v1861
        %v2443 = vpack.c.bf16 %v1864, %v1863
        %v2444 = vpack.c.bf16 %v1866, %v1865
        %v2445 = vpack.c.bf16 %v1868, %v1867
        %v2446 = vpack.c.bf16 %v1870, %v1869
        %v2447 = vpack.c.bf16 %v1872, %v1871
        %v2448 = vpack.c.bf16 %v1874, %v1873
        %v2449 = vpack.c.bf16 %v1876, %v1875
        %v2450 = vpack.c.bf16 %v1878, %v1877
        %v2451 = vpack.c.bf16 %v1880, %v1879
        %v2452 = vpack.c.bf16 %v1882, %v1881
        %v2453 = vpack.c.bf16 %v1884, %v1883
        %v2454 = vpack.c.bf16 %v1886, %v1885
        %v2455 = vpack.c.bf16 %v1888, %v1887
        %v2456 = vpack.c.bf16 %v1890, %v1889
        %v2457 = vpack.c.bf16 %v1892, %v1891
        %v2458 = vpack.c.bf16 %v1894, %v1893
        %v2459 = vpack.c.bf16 %v1896, %v1895
        %v2460 = vpack.c.bf16 %v1898, %v1897
        %v2461 = vpack.c.bf16 %v1900, %v1899
        %v2462 = vpack.c.bf16 %v1902, %v1901
        %v2463 = vpack.c.bf16 %v1904, %v1903
        %v2464 = vpack.c.bf16 %v1906, %v1905
        %v2465 = vpack.c.bf16 %v1908, %v1907
        %v2466 = vpack.c.bf16 %v1910, %v1909
        %v2467 = vpack.c.bf16 %v1912, %v1911
        %v2468 = vpack.c.bf16 %v1914, %v1913
        %v2469 = vpack.c.bf16 %v1916, %v1915
        %v2470 = vpack.c.bf16 %v1918, %v1917
        %v2471 = vpack.c.bf16 %v1920, %v1919
        %v2472 = vpack.c.bf16 %v1922, %v1921
        %v2473 = vpack.c.bf16 %v1924, %v1923
        %v2474 = vpack.c.bf16 %v1926, %v1925
        %v2475 = vpack.c.bf16 %v1928, %v1927
        %v2476 = vpack.c.bf16 %v1930, %v1929
        %v2477 = vpack.c.bf16 %v1932, %v1931
        %v2478 = vpack.c.bf16 %v1934, %v1933
        %v2479 = vpack.c.bf16 %v1936, %v1935
        %v2480 = vpack.c.bf16 %v1938, %v1937
        %v2481 = vpack.c.bf16 %v1940, %v1939
        %v2482 = vpack.c.bf16 %v1942, %v1941
        %v2483 = vpack.c.bf16 %v1944, %v1943
        %v2484 = vpack.c.bf16 %v1946, %v1945
        %v2485 = vpack.c.bf16 %v1948, %v1947
        %v2486 = vpack.c.bf16 %v1950, %v1949
        %v2487 = vpack.c.bf16 %v1952, %v1951
        %v2488 = vpack.c.bf16 %v1954, %v1953
        %v2489 = vpack.c.bf16 %v1956, %v1955
        %v2490 = vpack.c.bf16 %v1958, %v1957
        %v2491 = vpack.c.bf16 %v1960, %v1959
        %v2492 = vpack.c.bf16 %v1962, %v1961
        %v2493 = vpack.c.bf16 %v1964, %v1963
        %v2494 = vpack.c.bf16 %v1966, %v1965
        %v2495 = vpack.c.bf16 %v1968, %v1967
        %v2496 = vpack.c.bf16 %v1970, %v1969
        %v2497 = vpack.c.bf16 %v1972, %v1971
        %v2498 = vpack.c.bf16 %v1974, %v1973
        %v2499 = vpack.c.bf16 %v1976, %v1975
        %v2500 = vpack.c.bf16 %v1978, %v1977
        %v2501 = vpack.c.bf16 %v1980, %v1979
        %v2502 = vpack.c.bf16 %v1982, %v1981
        %v2503 = vpack.c.bf16 %v1984, %v1983
        %v2504 = vpack.c.bf16 %v1986, %v1985
        %v2505 = vpack.c.bf16 %v1988, %v1987
        %v2506 = vpack.c.bf16 %v1990, %v1989
        %v2507 = vpack.c.bf16 %v1992, %v1991
        %v2508 = vpack.c.bf16 %v1994, %v1993
        %v2509 = vpack.c.bf16 %v1996, %v1995
        %v2510 = vpack.c.bf16 %v1998, %v1997
        %v2511 = vpack.c.bf16 %v2000, %v1999
        %v2512 = vpack.c.bf16 %v2002, %v2001
        %v2513 = vpack.c.bf16 %v2004, %v2003
        %v2514 = vpack.c.bf16 %v2006, %v2005
        %v2515 = vpack.c.bf16 %v2008, %v2007
        %v2516 = vpack.c.bf16 %v2010, %v2009
        %v2517 = vpack.c.bf16 %v2012, %v2011
        %v2518 = vpack.c.bf16 %v2014, %v2013
        %v2519 = vpack.c.bf16 %v2016, %v2015
        %v2520 = vpack.c.bf16 %v2018, %v2017
        %v2521 = vpack.c.bf16 %v2020, %v2019
        %v2522 = vpack.c.bf16 %v2022, %v2021
        %v2523 = vpack.c.bf16 %v2024, %v2023
        %v2524 = vpack.c.bf16 %v2026, %v2025
        %v2525 = vpack.c.bf16 %v2028, %v2027
        %v2526 = vpack.c.bf16 %v2030, %v2029
        %v2527 = vpack.c.bf16 %v2032, %v2031
        %v2528 = vpack.c.bf16 %v2034, %v2033
        %v2529 = vpack.c.bf16 %v2036, %v2035
        %v2530 = vpack.c.bf16 %v2038, %v2037
        %v2531 = vpack.c.bf16 %v2040, %v2039
        %v2532 = vpack.c.bf16 %v2042, %v2041
        %v2533 = vpack.c.bf16 %v2044, %v2043
        %v2534 = vpack.c.bf16 %v2046, %v2045
        %v2535 = vpack.c.bf16 %v2048, %v2047
        %v2536 = vpack.c.bf16 %v2050, %v2049
        %v2537 = vpack.c.bf16 %v2052, %v2051
        %v2538 = vpack.c.bf16 %v2054, %v2053
        %v2539 = vpack.c.bf16 %v2056, %v2055
        %v2540 = vpack.c.bf16 %v2058, %v2057
        %v2541 = vpack.c.bf16 %v2060, %v2059
        %v2542 = vpack.c.bf16 %v2062, %v2061
        %v2543 = vpack.c.bf16 %v2064, %v2063
        %v2544 = vpack.c.bf16 %v2066, %v2065
        %v2545 = vpack.c.bf16 %v2068, %v2067
        %v2546 = vpack.c.bf16 %v2070, %v2069
        %v2547 = vpack.c.bf16 %v2072, %v2071
        %v2548 = vpack.c.bf16 %v2074, %v2073
        %v2549 = vpack.c.bf16 %v2076, %v2075
        %v2550 = vpack.c.bf16 %v2078, %v2077
        %v2551 = vpack.c.bf16 %v2080, %v2079
        %v2552 = vpack.c.bf16 %v2082, %v2081
        %v2553 = vpack.c.bf16 %v2084, %v2083
        %v2554 = vpack.c.bf16 %v2086, %v2085
        %v2555 = vpack.c.bf16 %v2088, %v2087
        %v2556 = vpack.c.bf16 %v2090, %v2089
        %v2557 = vpack.c.bf16 %v2092, %v2091
        %v2558 = vpack.c.bf16 %v2094, %v2093
        %v2559 = vpack.c.bf16 %v2096, %v2095
        %v2560 = vpack.c.bf16 %v2098, %v2097
        %v2561 = vpack.c.bf16 %v2100, %v2099
        %v2562 = vpack.c.bf16 %v2102, %v2101
        %v2563 = vpack.c.bf16 %v2104, %v2103
        %v2564 = vpack.c.bf16 %v2106, %v2105
        %v2565 = vpack.c.bf16 %v2108, %v2107
        %v2566 = vpack.c.bf16 %v2110, %v2109
        %v2567 = vpack.c.bf16 %v2112, %v2111
        %v2568 = vpack.c.bf16 %v2114, %v2113
        %v2569 = vpack.c.bf16 %v2116, %v2115
        %v2570 = vpack.c.bf16 %v2118, %v2117
        %v2571 = vpack.c.bf16 %v2120, %v2119
        %v2572 = vpack.c.bf16 %v2122, %v2121
        %v2573 = vpack.c.bf16 %v2124, %v2123
        %v2574 = vpack.c.bf16 %v2126, %v2125
        %v2575 = vpack.c.bf16 %v2128, %v2127
        %v2576 = vpack.c.bf16 %v2130, %v2129
        %v2577 = vpack.c.bf16 %v2132, %v2131
        %v2578 = vpack.c.bf16 %v2134, %v2133
        %v2579 = vpack.c.bf16 %v2136, %v2135
        %v2580 = vpack.c.bf16 %v2138, %v2137
        %v2581 = vpack.c.bf16 %v2140, %v2139
        %v2582 = vpack.c.bf16 %v2142, %v2141
        %v2583 = vpack.c.bf16 %v2144, %v2143
        %v2584 = vpack.c.bf16 %v2146, %v2145
        %v2585 = vpack.c.bf16 %v2148, %v2147
        %v2586 = vpack.c.bf16 %v2150, %v2149
        %v2587 = vpack.c.bf16 %v2152, %v2151
        %v2588 = vpack.c.bf16 %v2154, %v2153
        %v2589 = vpack.c.bf16 %v2156, %v2155
        %v2590 = vpack.c.bf16 %v2158, %v2157
        %v2591 = vpack.c.bf16 %v2160, %v2159
        %v2592 = vpack.c.bf16 %v2162, %v2161
        %v2593 = vpack.c.bf16 %v2164, %v2163
        %v2594 = vpack.c.bf16 %v2166, %v2165
        %v2595 = vpack.c.bf16 %v2168, %v2167
        %v2596 = vpack.c.bf16 %v2170, %v2169
        %v2597 = vpack.c.bf16 %v2172, %v2171
        %v2598 = vpack.c.bf16 %v2174, %v2173
        %v2599 = vpack.c.bf16 %v2176, %v2175
        %v2600 = vpack.c.bf16 %v2178, %v2177
        %v2601 = vpack.c.bf16 %v2180, %v2179
        %v2602 = vpack.c.bf16 %v2182, %v2181
        %v2603 = vpack.c.bf16 %v2184, %v2183
        %v2604 = vpack.c.bf16 %v2186, %v2185
        %v2605 = vpack.c.bf16 %v2188, %v2187
        %v2606 = vpack.c.bf16 %v2190, %v2189
        %v2607 = vpack.c.bf16 %v2192, %v2191
        %v2608 = vpack.c.bf16 %v2194, %v2193
        %v2609 = vpack.c.bf16 %v2196, %v2195
        %v2610 = vpack.c.bf16 %v2198, %v2197
        %v2611 = vpack.c.bf16 %v2200, %v2199
        %v2612 = vpack.c.bf16 %v2202, %v2201
        %v2613 = vpack.c.bf16 %v2204, %v2203
        %v2614 = vpack.c.bf16 %v2206, %v2205
        %v2615 = vpack.c.bf16 %v2208, %v2207
        %v2616 = vpack.c.bf16 %v2210, %v2209
        %v2617 = vpack.c.bf16 %v2212, %v2211
        %v2618 = vpack.c.bf16 %v2214, %v2213
        %v2619 = vpack.c.bf16 %v2216, %v2215
        %v2620 = vpack.c.bf16 %v2218, %v2217
        %v2621 = vpack.c.bf16 %v2220, %v2219
        %v2622 = vpack.c.bf16 %v2222, %v2221
        %v2623 = vpack.c.bf16 %v2224, %v2223
        %v2624 = vpack.c.bf16 %v2226, %v2225
        %v2625 = vpack.c.bf16 %v2228, %v2227
        %v2626 = vpack.c.bf16 %v2230, %v2229
        %v2627 = vpack.c.bf16 %v2232, %v2231
        %v2628 = vpack.c.bf16 %v2234, %v2233
        %v2629 = vpack.c.bf16 %v2236, %v2235
        %v2630 = vpack.c.bf16 %v2238, %v2237
        %v2631 = vld [vmem:[#allocation2] sm:$0x3]
        %2632 = vmatpush.bf16.msra.mxu0 %v2246
        %2633 = vmatpush.bf16.msra.mxu0 %v2245
        %2634 = vmatpush.bf16.msra.mxu0 %v2244
        %2635 = vmatpush.bf16.msra.mxu0 %v2243
        %2636 = vmatpush.bf16.msra.mxu0 %v2242
        %2637 = vmatpush.bf16.msra.mxu0 %v2241
        %2638 = vmatpush.bf16.msra.mxu0 %v2240
        %2639 = vmatpush.bf16.msra.mxu0 %v2239
        %2640 = vmatmul.bf16.gmra.mxu0 %v426
        %v2641 = vpop.f32.mrf.mxu0
        %v2642 = vadd.f32 0.0, %v2641
        %v2643 = vpop.f32.mrf.mxu0
        %2644 = vdwg.mxu0
        %2645 = vmatpush.bf16.msra.mxu0 %v2254
        %2646 = vmatpush.bf16.msra.mxu0 %v2253
        %2647 = vmatpush.bf16.msra.mxu0 %v2252
        %2648 = vmatpush.bf16.msra.mxu0 %v2251
        %2649 = vmatpush.bf16.msra.mxu0 %v2250
        %2650 = vmatpush.bf16.msra.mxu0 %v2249
        %2651 = vmatpush.bf16.msra.mxu0 %v2248
        %2652 = vmatpush.bf16.msra.mxu0 %v2247
        %2653 = vmatmul.bf16.gmra.mxu0 %v427
        %v2654 = vpop.f32.mrf.mxu0
        %v2655 = vadd.f32 %v2642, %v2654
        %v2656 = vpop.f32.mrf.mxu0
        %2657 = vdwg.mxu0
        %2658 = vmatpush.bf16.msra.mxu0 %v2262
        %2659 = vmatpush.bf16.msra.mxu0 %v2261
        %2660 = vmatpush.bf16.msra.mxu0 %v2260
        %2661 = vmatpush.bf16.msra.mxu0 %v2259
        %2662 = vmatpush.bf16.msra.mxu0 %v2258
        %2663 = vmatpush.bf16.msra.mxu0 %v2257
        %2664 = vmatpush.bf16.msra.mxu0 %v2256
        %2665 = vmatpush.bf16.msra.mxu0 %v2255
        %2666 = vmatmul.bf16.gmra.mxu0 %v428
        %v2667 = vpop.f32.mrf.mxu0
        %v2668 = vadd.f32 %v2655, %v2667
        %v2669 = vpop.f32.mrf.mxu0
        %2670 = vdwg.mxu0
        %2671 = vmatpush.bf16.msra.mxu0 %v2270
        %2672 = vmatpush.bf16.msra.mxu0 %v2269
        %2673 = vmatpush.bf16.msra.mxu0 %v2268
        %2674 = vmatpush.bf16.msra.mxu0 %v2267
        %2675 = vmatpush.bf16.msra.mxu0 %v2266
        %2676 = vmatpush.bf16.msra.mxu0 %v2265
        %2677 = vmatpush.bf16.msra.mxu0 %v2264
        %2678 = vmatpush.bf16.msra.mxu0 %v2263
        %2679 = vmatmul.bf16.gmra.mxu0 %v429
        %v2680 = vpop.f32.mrf.mxu0
        %v2681 = vadd.f32 %v2668, %v2680
        %v2682 = vpop.f32.mrf.mxu0
        %2683 = vdwg.mxu0
        %2684 = vmatpush.bf16.msra.mxu0 %v2278
        %2685 = vmatpush.bf16.msra.mxu0 %v2277
        %2686 = vmatpush.bf16.msra.mxu0 %v2276
        %2687 = vmatpush.bf16.msra.mxu0 %v2275
        %2688 = vmatpush.bf16.msra.mxu0 %v2274
        %2689 = vmatpush.bf16.msra.mxu0 %v2273
        %2690 = vmatpush.bf16.msra.mxu0 %v2272
        %2691 = vmatpush.bf16.msra.mxu0 %v2271
        %2692 = vmatmul.bf16.gmra.mxu0 %v430
        %v2693 = vpop.f32.mrf.mxu0
        %v2694 = vadd.f32 %v2681, %v2693
        %v2695 = vpop.f32.mrf.mxu0
        %2696 = vdwg.mxu0
        %2697 = vmatpush.bf16.msra.mxu0 %v2286
        %2698 = vmatpush.bf16.msra.mxu0 %v2285
        %2699 = vmatpush.bf16.msra.mxu0 %v2284
        %2700 = vmatpush.bf16.msra.mxu0 %v2283
        %2701 = vmatpush.bf16.msra.mxu0 %v2282
        %2702 = vmatpush.bf16.msra.mxu0 %v2281
        %2703 = vmatpush.bf16.msra.mxu0 %v2280
        %2704 = vmatpush.bf16.msra.mxu0 %v2279
        %2705 = vmatmul.bf16.gmra.mxu0 %v431
        %v2706 = vpop.f32.mrf.mxu0
        %v2707 = vadd.f32 %v2694, %v2706
        %v2708 = vpop.f32.mrf.mxu0
        %2709 = vdwg.mxu0
        %2710 = vmatpush.bf16.msra.mxu0 %v2294
        %2711 = vmatpush.bf16.msra.mxu0 %v2293
        %2712 = vmatpush.bf16.msra.mxu0 %v2292
        %2713 = vmatpush.bf16.msra.mxu0 %v2291
        %2714 = vmatpush.bf16.msra.mxu0 %v2290
        %2715 = vmatpush.bf16.msra.mxu0 %v2289
        %2716 = vmatpush.bf16.msra.mxu0 %v2288
        %2717 = vmatpush.bf16.msra.mxu0 %v2287
        %2718 = vmatmul.bf16.gmra.mxu0 %v432
        %v2719 = vpop.f32.mrf.mxu0
        %v2720 = vadd.f32 %v2707, %v2719
        %v2721 = vpop.f32.mrf.mxu0
        %2722 = vdwg.mxu0
        %2723 = vmatpush.bf16.msra.mxu0 %v2302
        %2724 = vmatpush.bf16.msra.mxu0 %v2301
        %2725 = vmatpush.bf16.msra.mxu0 %v2300
        %2726 = vmatpush.bf16.msra.mxu0 %v2299
        %2727 = vmatpush.bf16.msra.mxu0 %v2298
        %2728 = vmatpush.bf16.msra.mxu0 %v2297
        %2729 = vmatpush.bf16.msra.mxu0 %v2296
        %2730 = vmatpush.bf16.msra.mxu0 %v2295
        %2731 = vmatmul.bf16.gmra.mxu0 %v433
        %v2732 = vpop.f32.mrf.mxu0
        %v2733 = vadd.f32 %v2720, %v2732
        %v2734 = vpop.f32.mrf.mxu0
        %2735 = vdwg.mxu0
        %2736 = vmatpush.bf16.msra.mxu0 %v2310
        %2737 = vmatpush.bf16.msra.mxu0 %v2309
        %2738 = vmatpush.bf16.msra.mxu0 %v2308
        %2739 = vmatpush.bf16.msra.mxu0 %v2307
        %2740 = vmatpush.bf16.msra.mxu0 %v2306
        %2741 = vmatpush.bf16.msra.mxu0 %v2305
        %2742 = vmatpush.bf16.msra.mxu0 %v2304
        %2743 = vmatpush.bf16.msra.mxu0 %v2303
        %2744 = vmatmul.bf16.gmra.mxu0 %v434
        %v2745 = vpop.f32.mrf.mxu0
        %v2746 = vadd.f32 %v2733, %v2745
        %v2747 = vpop.f32.mrf.mxu0
        %2748 = vdwg.mxu0
        %2749 = vmatpush.bf16.msra.mxu0 %v2318
        %2750 = vmatpush.bf16.msra.mxu0 %v2317
        %2751 = vmatpush.bf16.msra.mxu0 %v2316
        %2752 = vmatpush.bf16.msra.mxu0 %v2315
        %2753 = vmatpush.bf16.msra.mxu0 %v2314
        %2754 = vmatpush.bf16.msra.mxu0 %v2313
        %2755 = vmatpush.bf16.msra.mxu0 %v2312
        %2756 = vmatpush.bf16.msra.mxu0 %v2311
        %2757 = vmatmul.bf16.gmra.mxu0 %v435
        %v2758 = vpop.f32.mrf.mxu0
        %v2759 = vadd.f32 %v2746, %v2758
        %v2760 = vpop.f32.mrf.mxu0
        %2761 = vdwg.mxu0
        %2762 = vmatpush.bf16.msra.mxu0 %v2326
        %2763 = vmatpush.bf16.msra.mxu0 %v2325
        %2764 = vmatpush.bf16.msra.mxu0 %v2324
        %2765 = vmatpush.bf16.msra.mxu0 %v2323
        %2766 = vmatpush.bf16.msra.mxu0 %v2322
        %2767 = vmatpush.bf16.msra.mxu0 %v2321
        %2768 = vmatpush.bf16.msra.mxu0 %v2320
        %2769 = vmatpush.bf16.msra.mxu0 %v2319
        %2770 = vmatmul.bf16.gmra.mxu0 %v436
        %v2771 = vpop.f32.mrf.mxu0
        %v2772 = vadd.f32 %v2759, %v2771
        %v2773 = vpop.f32.mrf.mxu0
        %2774 = vdwg.mxu0
        %2775 = vmatpush.bf16.msra.mxu0 %v2334
        %2776 = vmatpush.bf16.msra.mxu0 %v2333
        %2777 = vmatpush.bf16.msra.mxu0 %v2332
        %2778 = vmatpush.bf16.msra.mxu0 %v2331
        %2779 = vmatpush.bf16.msra.mxu0 %v2330
        %2780 = vmatpush.bf16.msra.mxu0 %v2329
        %2781 = vmatpush.bf16.msra.mxu0 %v2328
        %2782 = vmatpush.bf16.msra.mxu0 %v2327
        %2783 = vmatmul.bf16.gmra.mxu0 %v437
        %v2784 = vpop.f32.mrf.mxu0
        %v2785 = vadd.f32 %v2772, %v2784
        %v2786 = vpop.f32.mrf.mxu0
        %2787 = vdwg.mxu0
        %2788 = vmatpush.bf16.msra.mxu0 %v2342
        %2789 = vmatpush.bf16.msra.mxu0 %v2341
        %2790 = vmatpush.bf16.msra.mxu0 %v2340
        %2791 = vmatpush.bf16.msra.mxu0 %v2339
        %2792 = vmatpush.bf16.msra.mxu0 %v2338
        %2793 = vmatpush.bf16.msra.mxu0 %v2337
        %2794 = vmatpush.bf16.msra.mxu0 %v2336
        %2795 = vmatpush.bf16.msra.mxu0 %v2335
        %2796 = vmatmul.bf16.gmra.mxu0 %v438
        %v2797 = vpop.f32.mrf.mxu0
        %v2798 = vadd.f32 %v2785, %v2797
        %v2799 = vpop.f32.mrf.mxu0
        %2800 = vdwg.mxu0
        %2801 = vmatpush.bf16.msra.mxu0 %v2350
        %2802 = vmatpush.bf16.msra.mxu0 %v2349
        %2803 = vmatpush.bf16.msra.mxu0 %v2348
        %2804 = vmatpush.bf16.msra.mxu0 %v2347
        %2805 = vmatpush.bf16.msra.mxu0 %v2346
        %2806 = vmatpush.bf16.msra.mxu0 %v2345
        %2807 = vmatpush.bf16.msra.mxu0 %v2344
        %2808 = vmatpush.bf16.msra.mxu0 %v2343
        %2809 = vmatmul.bf16.gmra.mxu0 %v439
        %v2810 = vpop.f32.mrf.mxu0
        %v2811 = vadd.f32 %v2798, %v2810
        %v2812 = vpop.f32.mrf.mxu0
        %2813 = vdwg.mxu0
        %2814 = vmatpush.bf16.msra.mxu0 %v2358
        %2815 = vmatpush.bf16.msra.mxu0 %v2357
        %2816 = vmatpush.bf16.msra.mxu0 %v2356
        %2817 = vmatpush.bf16.msra.mxu0 %v2355
        %2818 = vmatpush.bf16.msra.mxu0 %v2354
        %2819 = vmatpush.bf16.msra.mxu0 %v2353
        %2820 = vmatpush.bf16.msra.mxu0 %v2352
        %2821 = vmatpush.bf16.msra.mxu0 %v2351
        %2822 = vmatmul.bf16.gmra.mxu0 %v440
        %v2823 = vpop.f32.mrf.mxu0
        %v2824 = vadd.f32 %v2811, %v2823
        %v2825 = vpop.f32.mrf.mxu0
        %2826 = vdwg.mxu0
        %2827 = vmatpush.bf16.msra.mxu0 %v2366
        %2828 = vmatpush.bf16.msra.mxu0 %v2365
        %2829 = vmatpush.bf16.msra.mxu0 %v2364
        %2830 = vmatpush.bf16.msra.mxu0 %v2363
        %2831 = vmatpush.bf16.msra.mxu0 %v2362
        %2832 = vmatpush.bf16.msra.mxu0 %v2361
        %2833 = vmatpush.bf16.msra.mxu0 %v2360
        %2834 = vmatpush.bf16.msra.mxu0 %v2359
        %2835 = vmatmul.bf16.gmra.mxu0 %v441
        %v2836 = vpop.f32.mrf.mxu0
        %v2837 = vadd.f32 %v2824, %v2836
        %v2838 = vpop.f32.mrf.mxu0
        %2839 = vdwg.mxu0
        %2840 = vmatpush.bf16.msra.mxu0 %v2374
        %2841 = vmatpush.bf16.msra.mxu0 %v2373
        %2842 = vmatpush.bf16.msra.mxu0 %v2372
        %2843 = vmatpush.bf16.msra.mxu0 %v2371
        %2844 = vmatpush.bf16.msra.mxu0 %v2370
        %2845 = vmatpush.bf16.msra.mxu0 %v2369
        %2846 = vmatpush.bf16.msra.mxu0 %v2368
        %2847 = vmatpush.bf16.msra.mxu0 %v2367
        %2848 = vmatmul.bf16.gmra.mxu0 %v442
        %v2849 = vpop.f32.mrf.mxu0
        %v2850 = vadd.f32 %v2837, %v2849
        %v2851 = vpop.f32.mrf.mxu0
        %2852 = vdwg.mxu0
        %2853 = vmatpush.bf16.msra.mxu0 %v2382
        %2854 = vmatpush.bf16.msra.mxu0 %v2381
        %2855 = vmatpush.bf16.msra.mxu0 %v2380
        %2856 = vmatpush.bf16.msra.mxu0 %v2379
        %2857 = vmatpush.bf16.msra.mxu0 %v2378
        %2858 = vmatpush.bf16.msra.mxu0 %v2377
        %2859 = vmatpush.bf16.msra.mxu0 %v2376
        %2860 = vmatpush.bf16.msra.mxu0 %v2375
        %2861 = vmatmul.bf16.gmra.mxu0 %v443
        %v2862 = vpop.f32.mrf.mxu0
        %v2863 = vadd.f32 %v2850, %v2862
        %v2864 = vpop.f32.mrf.mxu0
        %2865 = vdwg.mxu0
        %2866 = vmatpush.bf16.msra.mxu0 %v2390
        %2867 = vmatpush.bf16.msra.mxu0 %v2389
        %2868 = vmatpush.bf16.msra.mxu0 %v2388
        %2869 = vmatpush.bf16.msra.mxu0 %v2387
        %2870 = vmatpush.bf16.msra.mxu0 %v2386
        %2871 = vmatpush.bf16.msra.mxu0 %v2385
        %2872 = vmatpush.bf16.msra.mxu0 %v2384
        %2873 = vmatpush.bf16.msra.mxu0 %v2383
        %2874 = vmatmul.bf16.gmra.mxu0 %v444
        %v2875 = vpop.f32.mrf.mxu0
        %v2876 = vadd.f32 %v2863, %v2875
        %v2877 = vpop.f32.mrf.mxu0
        %2878 = vdwg.mxu0
        %2879 = vmatpush.bf16.msra.mxu0 %v2398
        %2880 = vmatpush.bf16.msra.mxu0 %v2397
        %2881 = vmatpush.bf16.msra.mxu0 %v2396
        %2882 = vmatpush.bf16.msra.mxu0 %v2395
        %2883 = vmatpush.bf16.msra.mxu0 %v2394
        %2884 = vmatpush.bf16.msra.mxu0 %v2393
        %2885 = vmatpush.bf16.msra.mxu0 %v2392
        %2886 = vmatpush.bf16.msra.mxu0 %v2391
        %2887 = vmatmul.bf16.gmra.mxu0 %v445
        %v2888 = vpop.f32.mrf.mxu0
        %v2889 = vadd.f32 %v2876, %v2888
        %v2890 = vpop.f32.mrf.mxu0
        %2891 = vdwg.mxu0
        %2892 = vmatpush.bf16.msra.mxu0 %v2406
        %2893 = vmatpush.bf16.msra.mxu0 %v2405
        %2894 = vmatpush.bf16.msra.mxu0 %v2404
        %2895 = vmatpush.bf16.msra.mxu0 %v2403
        %2896 = vmatpush.bf16.msra.mxu0 %v2402
        %2897 = vmatpush.bf16.msra.mxu0 %v2401
        %2898 = vmatpush.bf16.msra.mxu0 %v2400
        %2899 = vmatpush.bf16.msra.mxu0 %v2399
        %2900 = vmatmul.bf16.gmra.mxu0 %v446
        %v2901 = vpop.f32.mrf.mxu0
        %v2902 = vadd.f32 %v2889, %v2901
        %v2903 = vpop.f32.mrf.mxu0
        %2904 = vdwg.mxu0
        %2905 = vmatpush.bf16.msra.mxu0 %v2414
        %2906 = vmatpush.bf16.msra.mxu0 %v2413
        %2907 = vmatpush.bf16.msra.mxu0 %v2412
        %2908 = vmatpush.bf16.msra.mxu0 %v2411
        %2909 = vmatpush.bf16.msra.mxu0 %v2410
        %2910 = vmatpush.bf16.msra.mxu0 %v2409
        %2911 = vmatpush.bf16.msra.mxu0 %v2408
        %2912 = vmatpush.bf16.msra.mxu0 %v2407
        %2913 = vmatmul.bf16.gmra.mxu0 %v447
        %v2914 = vpop.f32.mrf.mxu0
        %v2915 = vadd.f32 %v2902, %v2914
        %v2916 = vpop.f32.mrf.mxu0
        %2917 = vdwg.mxu0
        %2918 = vmatpush.bf16.msra.mxu0 %v2422
        %2919 = vmatpush.bf16.msra.mxu0 %v2421
        %2920 = vmatpush.bf16.msra.mxu0 %v2420
        %2921 = vmatpush.bf16.msra.mxu0 %v2419
        %2922 = vmatpush.bf16.msra.mxu0 %v2418
        %2923 = vmatpush.bf16.msra.mxu0 %v2417
        %2924 = vmatpush.bf16.msra.mxu0 %v2416
        %2925 = vmatpush.bf16.msra.mxu0 %v2415
        %2926 = vmatmul.bf16.gmra.mxu0 %v448
        %v2927 = vpop.f32.mrf.mxu0
        %v2928 = vadd.f32 %v2915, %v2927
        %v2929 = vpop.f32.mrf.mxu0
        %2930 = vdwg.mxu0
        %2931 = vmatpush.bf16.msra.mxu0 %v2430
        %2932 = vmatpush.bf16.msra.mxu0 %v2429
        %2933 = vmatpush.bf16.msra.mxu0 %v2428
        %2934 = vmatpush.bf16.msra.mxu0 %v2427
        %2935 = vmatpush.bf16.msra.mxu0 %v2426
        %2936 = vmatpush.bf16.msra.mxu0 %v2425
        %2937 = vmatpush.bf16.msra.mxu0 %v2424
        %2938 = vmatpush.bf16.msra.mxu0 %v2423
        %2939 = vmatmul.bf16.gmra.mxu0 %v449
        %v2940 = vpop.f32.mrf.mxu0
        %v2941 = vadd.f32 %v2928, %v2940
        %v2942 = vpop.f32.mrf.mxu0
        %2943 = vdwg.mxu0
        %2944 = vmatpush.bf16.msra.mxu0 %v2438
        %2945 = vmatpush.bf16.msra.mxu0 %v2437
        %2946 = vmatpush.bf16.msra.mxu0 %v2436
        %2947 = vmatpush.bf16.msra.mxu0 %v2435
        %2948 = vmatpush.bf16.msra.mxu0 %v2434
        %2949 = vmatpush.bf16.msra.mxu0 %v2433
        %2950 = vmatpush.bf16.msra.mxu0 %v2432
        %2951 = vmatpush.bf16.msra.mxu0 %v2431
        %2952 = vmatmul.bf16.gmra.mxu0 %v450
        %v2953 = vpop.f32.mrf.mxu0
        %v2954 = vadd.f32 %v2941, %v2953
        %v2955 = vpop.f32.mrf.mxu0
        %2956 = vdwg.mxu0
        %2957 = vmatpush.bf16.msra.mxu0 %v2446
        %2958 = vmatpush.bf16.msra.mxu0 %v2445
        %2959 = vmatpush.bf16.msra.mxu0 %v2444
        %2960 = vmatpush.bf16.msra.mxu0 %v2443
        %2961 = vmatpush.bf16.msra.mxu0 %v2442
        %2962 = vmatpush.bf16.msra.mxu0 %v2441
        %2963 = vmatpush.bf16.msra.mxu0 %v2440
        %2964 = vmatpush.bf16.msra.mxu0 %v2439
        %2965 = vmatmul.bf16.gmra.mxu0 %v451
        %v2966 = vpop.f32.mrf.mxu0
        %v2967 = vadd.f32 %v2954, %v2966
        %v2968 = vpop.f32.mrf.mxu0
        %2969 = vdwg.mxu0
        %2970 = vmatpush.bf16.msra.mxu0 %v2454
        %2971 = vmatpush.bf16.msra.mxu0 %v2453
        %2972 = vmatpush.bf16.msra.mxu0 %v2452
        %2973 = vmatpush.bf16.msra.mxu0 %v2451
        %2974 = vmatpush.bf16.msra.mxu0 %v2450
        %2975 = vmatpush.bf16.msra.mxu0 %v2449
        %2976 = vmatpush.bf16.msra.mxu0 %v2448
        %2977 = vmatpush.bf16.msra.mxu0 %v2447
        %2978 = vmatmul.bf16.gmra.mxu0 %v452
        %v2979 = vpop.f32.mrf.mxu0
        %v2980 = vadd.f32 %v2967, %v2979
        %v2981 = vpop.f32.mrf.mxu0
        %2982 = vdwg.mxu0
        %2983 = vmatpush.bf16.msra.mxu0 %v2462
        %2984 = vmatpush.bf16.msra.mxu0 %v2461
        %2985 = vmatpush.bf16.msra.mxu0 %v2460
        %2986 = vmatpush.bf16.msra.mxu0 %v2459
        %2987 = vmatpush.bf16.msra.mxu0 %v2458
        %2988 = vmatpush.bf16.msra.mxu0 %v2457
        %2989 = vmatpush.bf16.msra.mxu0 %v2456
        %2990 = vmatpush.bf16.msra.mxu0 %v2455
        %2991 = vmatmul.bf16.gmra.mxu0 %v453
        %v2992 = vpop.f32.mrf.mxu0
        %v2993 = vadd.f32 %v2980, %v2992
        %v2994 = vpop.f32.mrf.mxu0
        %2995 = vdwg.mxu0
        %2996 = vmatpush.bf16.msra.mxu0 %v2470
        %2997 = vmatpush.bf16.msra.mxu0 %v2469
        %2998 = vmatpush.bf16.msra.mxu0 %v2468
        %2999 = vmatpush.bf16.msra.mxu0 %v2467
        %3000 = vmatpush.bf16.msra.mxu0 %v2466
        %3001 = vmatpush.bf16.msra.mxu0 %v2465
        %3002 = vmatpush.bf16.msra.mxu0 %v2464
        %3003 = vmatpush.bf16.msra.mxu0 %v2463
        %3004 = vmatmul.bf16.gmra.mxu0 %v454
        %v3005 = vpop.f32.mrf.mxu0
        %v3006 = vadd.f32 %v2993, %v3005
        %v3007 = vpop.f32.mrf.mxu0
        %3008 = vdwg.mxu0
        %3009 = vmatpush.bf16.msra.mxu0 %v2478
        %3010 = vmatpush.bf16.msra.mxu0 %v2477
        %3011 = vmatpush.bf16.msra.mxu0 %v2476
        %3012 = vmatpush.bf16.msra.mxu0 %v2475
        %3013 = vmatpush.bf16.msra.mxu0 %v2474
        %3014 = vmatpush.bf16.msra.mxu0 %v2473
        %3015 = vmatpush.bf16.msra.mxu0 %v2472
        %3016 = vmatpush.bf16.msra.mxu0 %v2471
        %3017 = vmatmul.bf16.gmra.mxu0 %v455
        %v3018 = vpop.f32.mrf.mxu0
        %v3019 = vadd.f32 %v3006, %v3018
        %v3020 = vpop.f32.mrf.mxu0
        %3021 = vdwg.mxu0
        %3022 = vmatpush.bf16.msra.mxu0 %v2486
        %3023 = vmatpush.bf16.msra.mxu0 %v2485
        %3024 = vmatpush.bf16.msra.mxu0 %v2484
        %3025 = vmatpush.bf16.msra.mxu0 %v2483
        %3026 = vmatpush.bf16.msra.mxu0 %v2482
        %3027 = vmatpush.bf16.msra.mxu0 %v2481
        %3028 = vmatpush.bf16.msra.mxu0 %v2480
        %3029 = vmatpush.bf16.msra.mxu0 %v2479
        %3030 = vmatmul.bf16.gmra.mxu0 %v456
        %v3031 = vpop.f32.mrf.mxu0
        %v3032 = vadd.f32 %v3019, %v3031
        %v3033 = vpop.f32.mrf.mxu0
        %3034 = vdwg.mxu0
        %3035 = vmatpush.bf16.msra.mxu0 %v2494
        %3036 = vmatpush.bf16.msra.mxu0 %v2493
        %3037 = vmatpush.bf16.msra.mxu0 %v2492
        %3038 = vmatpush.bf16.msra.mxu0 %v2491
        %3039 = vmatpush.bf16.msra.mxu0 %v2490
        %3040 = vmatpush.bf16.msra.mxu0 %v2489
        %3041 = vmatpush.bf16.msra.mxu0 %v2488
        %3042 = vmatpush.bf16.msra.mxu0 %v2487
        %3043 = vmatmul.bf16.gmra.mxu0 %v457
        %v3044 = vpop.f32.mrf.mxu0
        %v3045 = vadd.f32 %v3032, %v3044
        %v3046 = vpop.f32.mrf.mxu0
        %3047 = vdwg.mxu0
        %3048 = vmatpush.bf16.msra.mxu0 %v2502
        %3049 = vmatpush.bf16.msra.mxu0 %v2501
        %3050 = vmatpush.bf16.msra.mxu0 %v2500
        %3051 = vmatpush.bf16.msra.mxu0 %v2499
        %3052 = vmatpush.bf16.msra.mxu0 %v2498
        %3053 = vmatpush.bf16.msra.mxu0 %v2497
        %3054 = vmatpush.bf16.msra.mxu0 %v2496
        %3055 = vmatpush.bf16.msra.mxu0 %v2495
        %3056 = vmatmul.bf16.gmra.mxu0 %v458
        %v3057 = vpop.f32.mrf.mxu0
        %v3058 = vadd.f32 %v3045, %v3057
        %v3059 = vpop.f32.mrf.mxu0
        %3060 = vdwg.mxu0
        %3061 = vmatpush.bf16.msra.mxu0 %v2510
        %3062 = vmatpush.bf16.msra.mxu0 %v2509
        %3063 = vmatpush.bf16.msra.mxu0 %v2508
        %3064 = vmatpush.bf16.msra.mxu0 %v2507
        %3065 = vmatpush.bf16.msra.mxu0 %v2506
        %3066 = vmatpush.bf16.msra.mxu0 %v2505
        %3067 = vmatpush.bf16.msra.mxu0 %v2504
        %3068 = vmatpush.bf16.msra.mxu0 %v2503
        %3069 = vmatmul.bf16.gmra.mxu0 %v459
        %v3070 = vpop.f32.mrf.mxu0
        %v3071 = vadd.f32 %v3058, %v3070
        %v3072 = vpop.f32.mrf.mxu0
        %3073 = vdwg.mxu0
        %3074 = vmatpush.bf16.msra.mxu0 %v2518
        %3075 = vmatpush.bf16.msra.mxu0 %v2517
        %3076 = vmatpush.bf16.msra.mxu0 %v2516
        %3077 = vmatpush.bf16.msra.mxu0 %v2515
        %3078 = vmatpush.bf16.msra.mxu0 %v2514
        %3079 = vmatpush.bf16.msra.mxu0 %v2513
        %3080 = vmatpush.bf16.msra.mxu0 %v2512
        %3081 = vmatpush.bf16.msra.mxu0 %v2511
        %3082 = vmatmul.bf16.gmra.mxu0 %v460
        %v3083 = vpop.f32.mrf.mxu0
        %v3084 = vadd.f32 %v3071, %v3083
        %v3085 = vpop.f32.mrf.mxu0
        %3086 = vdwg.mxu0
        %3087 = vmatpush.bf16.msra.mxu0 %v2526
        %3088 = vmatpush.bf16.msra.mxu0 %v2525
        %3089 = vmatpush.bf16.msra.mxu0 %v2524
        %3090 = vmatpush.bf16.msra.mxu0 %v2523
        %3091 = vmatpush.bf16.msra.mxu0 %v2522
        %3092 = vmatpush.bf16.msra.mxu0 %v2521
        %3093 = vmatpush.bf16.msra.mxu0 %v2520
        %3094 = vmatpush.bf16.msra.mxu0 %v2519
        %3095 = vmatmul.bf16.gmra.mxu0 %v461
        %v3096 = vpop.f32.mrf.mxu0
        %v3097 = vadd.f32 %v3084, %v3096
        %v3098 = vpop.f32.mrf.mxu0
        %3099 = vdwg.mxu0
        %3100 = vmatpush.bf16.msra.mxu0 %v2534
        %3101 = vmatpush.bf16.msra.mxu0 %v2533
        %3102 = vmatpush.bf16.msra.mxu0 %v2532
        %3103 = vmatpush.bf16.msra.mxu0 %v2531
        %3104 = vmatpush.bf16.msra.mxu0 %v2530
        %3105 = vmatpush.bf16.msra.mxu0 %v2529
        %3106 = vmatpush.bf16.msra.mxu0 %v2528
        %3107 = vmatpush.bf16.msra.mxu0 %v2527
        %3108 = vmatmul.bf16.gmra.mxu0 %v462
        %v3109 = vpop.f32.mrf.mxu0
        %v3110 = vadd.f32 %v3097, %v3109
        %v3111 = vpop.f32.mrf.mxu0
        %3112 = vdwg.mxu0
        %3113 = vmatpush.bf16.msra.mxu0 %v2542
        %3114 = vmatpush.bf16.msra.mxu0 %v2541
        %3115 = vmatpush.bf16.msra.mxu0 %v2540
        %3116 = vmatpush.bf16.msra.mxu0 %v2539
        %3117 = vmatpush.bf16.msra.mxu0 %v2538
        %3118 = vmatpush.bf16.msra.mxu0 %v2537
        %3119 = vmatpush.bf16.msra.mxu0 %v2536
        %3120 = vmatpush.bf16.msra.mxu0 %v2535
        %3121 = vmatmul.bf16.gmra.mxu0 %v463
        %v3122 = vpop.f32.mrf.mxu0
        %v3123 = vadd.f32 %v3110, %v3122
        %v3124 = vpop.f32.mrf.mxu0
        %3125 = vdwg.mxu0
        %3126 = vmatpush.bf16.msra.mxu0 %v2550
        %3127 = vmatpush.bf16.msra.mxu0 %v2549
        %3128 = vmatpush.bf16.msra.mxu0 %v2548
        %3129 = vmatpush.bf16.msra.mxu0 %v2547
        %3130 = vmatpush.bf16.msra.mxu0 %v2546
        %3131 = vmatpush.bf16.msra.mxu0 %v2545
        %3132 = vmatpush.bf16.msra.mxu0 %v2544
        %3133 = vmatpush.bf16.msra.mxu0 %v2543
        %3134 = vmatmul.bf16.gmra.mxu0 %v464
        %v3135 = vpop.f32.mrf.mxu0
        %v3136 = vadd.f32 %v3123, %v3135
        %v3137 = vpop.f32.mrf.mxu0
        %3138 = vdwg.mxu0
        %3139 = vmatpush.bf16.msra.mxu0 %v2558
        %3140 = vmatpush.bf16.msra.mxu0 %v2557
        %3141 = vmatpush.bf16.msra.mxu0 %v2556
        %3142 = vmatpush.bf16.msra.mxu0 %v2555
        %3143 = vmatpush.bf16.msra.mxu0 %v2554
        %3144 = vmatpush.bf16.msra.mxu0 %v2553
        %3145 = vmatpush.bf16.msra.mxu0 %v2552
        %3146 = vmatpush.bf16.msra.mxu0 %v2551
        %3147 = vmatmul.bf16.gmra.mxu0 %v465
        %v3148 = vpop.f32.mrf.mxu0
        %v3149 = vadd.f32 %v3136, %v3148
        %v3150 = vpop.f32.mrf.mxu0
        %3151 = vdwg.mxu0
        %3152 = vmatpush.bf16.msra.mxu0 %v2566
        %3153 = vmatpush.bf16.msra.mxu0 %v2565
        %3154 = vmatpush.bf16.msra.mxu0 %v2564
        %3155 = vmatpush.bf16.msra.mxu0 %v2563
        %3156 = vmatpush.bf16.msra.mxu0 %v2562
        %3157 = vmatpush.bf16.msra.mxu0 %v2561
        %3158 = vmatpush.bf16.msra.mxu0 %v2560
        %3159 = vmatpush.bf16.msra.mxu0 %v2559
        %3160 = vmatmul.bf16.gmra.mxu0 %v466
        %v3161 = vpop.f32.mrf.mxu0
        %v3162 = vadd.f32 %v3149, %v3161
        %v3163 = vpop.f32.mrf.mxu0
        %3164 = vdwg.mxu0
        %3165 = vmatpush.bf16.msra.mxu0 %v2574
        %3166 = vmatpush.bf16.msra.mxu0 %v2573
        %3167 = vmatpush.bf16.msra.mxu0 %v2572
        %3168 = vmatpush.bf16.msra.mxu0 %v2571
        %3169 = vmatpush.bf16.msra.mxu0 %v2570
        %3170 = vmatpush.bf16.msra.mxu0 %v2569
        %3171 = vmatpush.bf16.msra.mxu0 %v2568
        %3172 = vmatpush.bf16.msra.mxu0 %v2567
        %3173 = vmatmul.bf16.gmra.mxu0 %v467
        %v3174 = vpop.f32.mrf.mxu0
        %v3175 = vadd.f32 %v3162, %v3174
        %v3176 = vpop.f32.mrf.mxu0
        %3177 = vdwg.mxu0
        %3178 = vmatpush.bf16.msra.mxu0 %v2582
        %3179 = vmatpush.bf16.msra.mxu0 %v2581
        %3180 = vmatpush.bf16.msra.mxu0 %v2580
        %3181 = vmatpush.bf16.msra.mxu0 %v2579
        %3182 = vmatpush.bf16.msra.mxu0 %v2578
        %3183 = vmatpush.bf16.msra.mxu0 %v2577
        %3184 = vmatpush.bf16.msra.mxu0 %v2576
        %3185 = vmatpush.bf16.msra.mxu0 %v2575
        %3186 = vmatmul.bf16.gmra.mxu0 %v468
        %v3187 = vpop.f32.mrf.mxu0
        %v3188 = vadd.f32 %v3175, %v3187
        %v3189 = vpop.f32.mrf.mxu0
        %3190 = vdwg.mxu0
        %3191 = vmatpush.bf16.msra.mxu0 %v2590
        %3192 = vmatpush.bf16.msra.mxu0 %v2589
        %3193 = vmatpush.bf16.msra.mxu0 %v2588
        %3194 = vmatpush.bf16.msra.mxu0 %v2587
        %3195 = vmatpush.bf16.msra.mxu0 %v2586
        %3196 = vmatpush.bf16.msra.mxu0 %v2585
        %3197 = vmatpush.bf16.msra.mxu0 %v2584
        %3198 = vmatpush.bf16.msra.mxu0 %v2583
        %3199 = vmatmul.bf16.gmra.mxu0 %v469
        %v3200 = vpop.f32.mrf.mxu0
        %v3201 = vadd.f32 %v3188, %v3200
        %v3202 = vpop.f32.mrf.mxu0
        %3203 = vdwg.mxu0
        %3204 = vmatpush.bf16.msra.mxu0 %v2598
        %3205 = vmatpush.bf16.msra.mxu0 %v2597
        %3206 = vmatpush.bf16.msra.mxu0 %v2596
        %3207 = vmatpush.bf16.msra.mxu0 %v2595
        %3208 = vmatpush.bf16.msra.mxu0 %v2594
        %3209 = vmatpush.bf16.msra.mxu0 %v2593
        %3210 = vmatpush.bf16.msra.mxu0 %v2592
        %3211 = vmatpush.bf16.msra.mxu0 %v2591
        %3212 = vmatmul.bf16.gmra.mxu0 %v470
        %v3213 = vpop.f32.mrf.mxu0
        %v3214 = vadd.f32 %v3201, %v3213
        %v3215 = vpop.f32.mrf.mxu0
        %3216 = vdwg.mxu0
        %3217 = vmatpush.bf16.msra.mxu0 %v2606
        %3218 = vmatpush.bf16.msra.mxu0 %v2605
        %3219 = vmatpush.bf16.msra.mxu0 %v2604
        %3220 = vmatpush.bf16.msra.mxu0 %v2603
        %3221 = vmatpush.bf16.msra.mxu0 %v2602
        %3222 = vmatpush.bf16.msra.mxu0 %v2601
        %3223 = vmatpush.bf16.msra.mxu0 %v2600
        %3224 = vmatpush.bf16.msra.mxu0 %v2599
        %3225 = vmatmul.bf16.gmra.mxu0 %v471
        %v3226 = vpop.f32.mrf.mxu0
        %v3227 = vadd.f32 %v3214, %v3226
        %v3228 = vpop.f32.mrf.mxu0
        %3229 = vdwg.mxu0
        %3230 = vmatpush.bf16.msra.mxu0 %v2614
        %3231 = vmatpush.bf16.msra.mxu0 %v2613
        %3232 = vmatpush.bf16.msra.mxu0 %v2612
        %3233 = vmatpush.bf16.msra.mxu0 %v2611
        %3234 = vmatpush.bf16.msra.mxu0 %v2610
        %3235 = vmatpush.bf16.msra.mxu0 %v2609
        %3236 = vmatpush.bf16.msra.mxu0 %v2608
        %3237 = vmatpush.bf16.msra.mxu0 %v2607
        %3238 = vmatmul.bf16.gmra.mxu0 %v472
        %v3239 = vpop.f32.mrf.mxu0
        %v3240 = vadd.f32 %v3227, %v3239
        %v3241 = vpop.f32.mrf.mxu0
        %3242 = vdwg.mxu0
        %3243 = vmatpush.bf16.msra.mxu0 %v2622
        %3244 = vmatpush.bf16.msra.mxu0 %v2621
        %3245 = vmatpush.bf16.msra.mxu0 %v2620
        %3246 = vmatpush.bf16.msra.mxu0 %v2619
        %3247 = vmatpush.bf16.msra.mxu0 %v2618
        %3248 = vmatpush.bf16.msra.mxu0 %v2617
        %3249 = vmatpush.bf16.msra.mxu0 %v2616
        %3250 = vmatpush.bf16.msra.mxu0 %v2615
        %3251 = vmatmul.bf16.gmra.mxu0 %v473
        %v3252 = vpop.f32.mrf.mxu0
        %v3253 = vadd.f32 %v3240, %v3252
        %v3254 = vpop.f32.mrf.mxu0
        %3255 = vdwg.mxu0
        %3256 = vmatpush.bf16.msra.mxu0 %v2630
        %3257 = vmatpush.bf16.msra.mxu0 %v2629
        %3258 = vmatpush.bf16.msra.mxu0 %v2628
        %3259 = vmatpush.bf16.msra.mxu0 %v2627
        %3260 = vmatpush.bf16.msra.mxu0 %v2626
        %3261 = vmatpush.bf16.msra.mxu0 %v2625
        %3262 = vmatpush.bf16.msra.mxu0 %v2624
        %3263 = vmatpush.bf16.msra.mxu0 %v2623
        %3264 = vmatmul.bf16.gmra.mxu0 %v474
        %v3265 = vpop.f32.mrf.mxu0
        %v3266 = vadd.f32 %v3253, %v3265
        %v3267 = vpop.f32.mrf.mxu0
        %3268 = vdwg.mxu0
        %v3269 = vadd.f32 %v2631, %v3266
        %3270 = vst [vmem:[#allocation2] sm:$0x3] %v3269
        %p3271 = scmp.eq.s32.totalorder %s22, 5
        // Predicated region
        $region53: #{recognition_forward.1} parent=35 // pred_check
          %p3272 = pneg %p3271
        $region54: #{recognition_forward.1} parent=35 // pred_check_branch
          %3274 = sbr.rel (%p3272) target = $region56
        $region55: #{recognition_forward.1} parent=35 // pred_region
          %v3275 = vld [vmem:[#allocation2] sm:$0x3]
          %v3276 = vld [vmem:[#allocation6] sm:$0x1]
          %v3278 = vperm.slane %v3276, 0
          %v3280 = vmul.f32 %v3275, %v3278
          %v3281 = vld [vmem:[#allocation8] sm:$0x1]
          %v3283 = vperm.slane %v3281, 0
          %v3285 = vadd.f32 %v3280, %v3283
          %v3286 = vmul.f32 %v3285, %v3285
          %vm3287 = vcmask 1041408
          %v3288 = vsel %vm3287, %v3286, 0.0
          %3289 = vadd.xlane.f32.xlu0 %v3288
          %v3290 = vpop.xlane.xlu0 %3289
          %v3291 = vrsqrt.pop %v3290
          %v3292 = vmul.f32 %v3291, %v3290
          %v3293 = vmul.f32 %v3292, %v3291
          %v3294 = vmul.f32 0.5, %v3293
          %v3295 = vsub.f32 1.5, %v3294
          %v3296 = vmul.f32 %v3291, %v3295
          %v3297 = vmul.f32 %v3290, %v3296
          %vm3298 = vcmp.eq.f32.partialorder %v3290, inf
          %v3299 = vsel %vm3298, %v3290, %v3297
          %vm3300 = vcmp.eq.f32.partialorder %v3290, 0.0
          %v3301 = vand.u32 %v3290, 2147483648
          %v3302 = vsel %vm3300, %v3301, %v3299
          %vm3303 = vcmask 1024
          %3304 = vst.msk [vmem:[%s5] sm:$0x3] %vm3303, %v3302
          %v3305 = vmax.f32 %v3302, 1e-12
          %v3306 = vrcp.pop %v3305
          %v3307 = vmul.f32 %v3305, %v3306
          %v3308 = vsub.f32 1.0, %v3307
          %v3309 = vmul.f32 %v3306, %v3308
          %v3310 = vadd.f32 %v3306, %v3309
          %vm3311 = vweird.f32 %v3305
          %vm3312 = vweird.f32 %v3306
          %vm3313 = vmor %vm3311, %vm3312
          %v3314 = vsel %vm3313, %v3306, %v3310
          %v3315 = vand.u32 2147483647, %v3305
          %vm3316 = vcmp.eq.f32.partialorder %v3315, 8.507059e+37
          %v3317 = vand.u32 %v3305, 2147483648
          %v3318 = vor.u32 1.1754944e-38, %v3317
          %v3319 = vsel %vm3316, %v3318, %v3314
          %v3320 = vmul.f32 %v3285, %v3319
          %3321 = vst [vmem:[#allocation9] sm:$0x3] %v3320
        $region56: #{recognition_forward.1} parent=35 // pred_fallthru
          _
        // Predicated region
        $region57: #{recognition_forward.1} parent=35 // pred_check
          %p3322 = pneg %p129
        $region58: #{recognition_forward.1} parent=35 // pred_check_branch
          %3324 = sbr.rel (%p3322) target = $region60
        $region59: #{recognition_forward.1} parent=35 // pred_region
          %3326 = vsyncadd [#allocation5], 0
          %s3328 = sshll.u32 [#allocation9], 4
          %s3329 = int_to_ptr.vmem [resolvable:$true] %s3328
          %s3330 = sshll.u32 %s4, 4
          %s3331 = int_to_ptr.hbm [resolvable:$true] %s3330
          %3333 = dma.vmem_to_hbm [thread:$0]  %s3329, 32, %s3331, [#allocation5]
        $region60: #{recognition_forward.1} parent=35 // pred_fallthru
          _
        // Predicated region
        $region61: #{recognition_forward.1} parent=35 // pred_check
          %p3334 = pneg %p150
        $region62: #{recognition_forward.1} parent=35 // pred_check_branch
          %3336 = sbr.rel (%p3334) target = $region64
        $region63: #{recognition_forward.1} parent=35 // pred_region
          _
        $region64: #{recognition_forward.1} parent=35 // pred_fallthru
          _
        // Predicated region
        $region65: #{recognition_forward.1} parent=35 // pred_check
          %p3337 = pneg %p129
        $region66: #{recognition_forward.1} parent=35 // pred_check_branch
          %3339 = sbr.rel (%p3337) target = $region68
        $region67: #{recognition_forward.1} parent=35 // pred_region
          %3341 = dma.done [#allocation5], 32
        $region68: #{recognition_forward.1} parent=35 // pred_fallthru
          _
        // Predicated region
        $region69: #{recognition_forward.1} parent=35 // pred_check
          %p3342 = pneg %p150
        $region70: #{recognition_forward.1} parent=35 // pred_check_branch
          %3344 = sbr.rel (%p3342) target = $region72
        $region71: #{recognition_forward.1} parent=35 // pred_region
          _
        $region72: #{recognition_forward.1} parent=35 // pred_fallthru
          _
      $region36: #{recognition_forward.1} parent=5 // pred_fallthru
        _
      %p3345 = scmp.le.s32.totalorder 2, %s17
      // Predicated region
      $region73: #{recognition_forward.1} parent=5 // pred_check
        %p3346 = pneg %p3345
      $region74: #{recognition_forward.1} parent=5 // pred_check_branch
        %3348 = sbr.rel (%p3346) target = $region76
      $region75: #{recognition_forward.1} parent=5 // pred_region
        %s3349 = ssub.s32 %s17, 2
      $region76: #{recognition_forward.1} parent=5 // pred_fallthru
        _
    $region6: #{recognition_forward.1} parent=1 // loop_footer
      %s21 = sadd.s32 1, %s17
    $region7: #{recognition_forward.1} parent=1 // loop_footer_branch
      %16 = sbr.rel target = $region3
    $region8: #{recognition_forward.1} parent=1 // loop_exit
      _
    %3350 = vsyncpa [#allocation4], 1
    %s3351 = scalar_lea.sflag [#allocation4], 1
    %3352 = vsyncpa %s3351, 1
    %3353 = vsyncpa [#allocation7], 1
    %3354 = vsyncpa [#allocation5], 1
    %s3355 = scalar_lea.sflag [#allocation5], 1
    %3356 = vsyncpa %s3355, 1

</llo_original>
